<compile_context>
chip_gen: v7x
topology: tpu7x:2x2x1
jax: 0.10.0
libtpu: 0.0.40
codegen_flags: <defaults>
</compile_context>

<pallas_src>
import functools

import jax
import jax.numpy as jnp
from jax.experimental import pallas as pl
from jax.experimental.pallas import tpu as pltpu

LANE = 128  # TPU vreg lane width; all channel dims are padded to this.


# -----------------------------------------------------------------------------
# In-kernel math helpers
# -----------------------------------------------------------------------------
def _gelu(x):
    # TODO(synk): tanh-approx GELU vs PyTorch's erf-based default (~1e-3 diff).
    c = jnp.float32(0.7978845608028654)  # sqrt(2/pi)
    return 0.5 * x * (1.0 + jnp.tanh(c * (x + 0.044715 * x * x * x)))


def _dyt(x, alpha, weight, bias):
    # DynamicTanh (channels_last): y = tanh(alpha * x) * weight + bias
    return jnp.tanh(alpha * x) * weight + bias


# -----------------------------------------------------------------------------
# Fused forward kernel
# -----------------------------------------------------------------------------
def se3_encoder_kernel(
        # scalars (SMEM)
        alphas_ref,                                   # (3,)  DyT alphas
        # node inputs (VMEM, lane-padded to 128)
        x_ref, coords_ref, aa_ref,                    # (N,128) each
        # BatchNorm affine
        bn_g_ref, bn_b_ref,                           # (1,128)
        # ffin MLP + DyT
        w1_ref, b1_ref, w2_ref, b2_ref, dyt0_w_ref, dyt0_b_ref,
        # simplified SE3 attention (per-head weights, batched over heads)
        wq_ref, wk_ref, wv_ref,                       # (H,128,Dh)
        wo_ref,                                       # (H,Dh,128)
        # lin MLP
        dyt1_w_ref, dyt1_b_ref,
        w3_ref, b3_ref, w4_ref, b4_ref,
        # out_dense (concat weight split: encoder part + AA part)
        w5a_ref, w5b_ref, b5_ref,
        dyt2_w_ref, dyt2_b_ref,
        # VQ codebook
        codebook_ref,                                 # (K,128)
        # outputs
        zq_ref, loss_ref,
        *, valid_radius, commitment_cost, out_channels):
    f32 = jnp.float32
    n = x_ref.shape[0]
    heads = wq_ref.shape[0]
    dim_head = wq_ref.shape[2]

    # ---- Stage 1: BatchNorm1d (batch stats) + Dropout(identity) + ffin ------
    x = x_ref[...]
    mu = jnp.mean(x, axis=0, keepdims=True)
    var = jnp.mean((x - mu) ** 2, axis=0, keepdims=True)
    x = (x - mu) * jax.lax.rsqrt(var + 1e-5)
    x = x * bn_g_ref[...] + bn_b_ref[...]
    # TODO(synk): Dropout(p=0.05) treated as identity (inference semantics).
    h = _gelu(jnp.dot(x, w1_ref[...], preferred_element_type=f32) + b1_ref[...])
    h = _gelu(jnp.dot(h, w2_ref[...], preferred_element_type=f32) + b2_ref[...])
    h = _dyt(h, alphas_ref[0], dyt0_w_ref[...], dyt0_b_ref[...])       # (N,128)

    # ---- Stage 2: simplified SE(3) graph attention ---------------------------
    # TODO(synk): full SE3Transformer (spherical-harmonic basis, type-1
    #             features, equivariant FF, depth>1) has no clean Pallas
    #             equivalent; only invariant degree-0 attention over backbone
    #             neighbours within valid_radius (+ self) is implemented.
    c = coords_ref[...]
    c2 = jnp.sum(c * c, axis=1, keepdims=True)                          # (N,1)
    d2 = c2 + c2.T - 2.0 * jnp.dot(c, c.T, preferred_element_type=f32)  # (N,N)
    row = jax.lax.broadcasted_iota(jnp.int32, (n, n), 0)
    col = jax.lax.broadcasted_iota(jnp.int32, (n, n), 1)
    diff = row - col
    eye = diff == 0
    nbr = (diff == 1) | (diff == -1)      # backbone chain i <-> i+1, in-kernel
    mask = eye | (nbr & (d2 <= f32(valid_radius * valid_radius)))

    hb = jnp.broadcast_to(h[None, :, :], (heads, n, h.shape[1]))        # (H,N,128)
    q = jnp.einsum('hnc,hcd->hnd', hb, wq_ref[...], preferred_element_type=f32)
    k = jnp.einsum('hnc,hcd->hnd', hb, wk_ref[...], preferred_element_type=f32)
    v = jnp.einsum('hnc,hcd->hnd', hb, wv_ref[...], preferred_element_type=f32)

    s = jnp.einsum('hqd,hkd->hqk', q, k, preferred_element_type=f32)
    s = s * f32(1.0 / (dim_head ** 0.5))
    s = jnp.where(mask[None, :, :], s, f32(-1e9))
    m = jnp.max(s, axis=-1, keepdims=True)
    p = jnp.exp(s - m)
    p = p * pl.reciprocal(jnp.sum(p, axis=-1, keepdims=True), approx=True)
    oh = jnp.einsum('hqk,hkd->hqd', p, v, preferred_element_type=f32)   # (H,N,Dh)
    attn = jnp.sum(
        jnp.einsum('hqd,hdo->hqo', oh, wo_ref[...], preferred_element_type=f32),
        axis=0)                                                         # (N,128)
    t = h + attn   # residual

    # ---- Stage 3: lin MLP + concat(AA) + out_dense + tanh --------------------
    y = _dyt(t, alphas_ref[1], dyt1_w_ref[...], dyt1_b_ref[...])
    y = _gelu(jnp.dot(y, w3_ref[...], preferred_element_type=f32) + b3_ref[...])
    y = _gelu(jnp.dot(y, w4_ref[...], preferred_element_type=f32) + b4_ref[...])
    y = (jnp.dot(y, w5a_ref[...], preferred_element_type=f32)
         + jnp.dot(aa_ref[...], w5b_ref[...], preferred_element_type=f32)
         + b5_ref[...])
    y = _gelu(y)
    y = _dyt(y, alphas_ref[2], dyt2_w_ref[...], dyt2_b_ref[...])
    z = jnp.tanh(y)                                                     # (N,128)

    # ---- Stage 4: VectorQuantizer (nearest codebook entry + VQ loss) ---------
    e = codebook_ref[...]                                               # (K,128)
    kk = e.shape[0]
    z2 = jnp.sum(z * z, axis=1, keepdims=True)                          # (N,1)
    e2 = jnp.sum(e * e, axis=1, keepdims=True)                          # (K,1)
    d = z2 + e2.T - 2.0 * jnp.dot(z, e.T, preferred_element_type=f32)   # (N,K)
    dmin = jnp.min(d, axis=1, keepdims=True)
    iota = jax.lax.broadcasted_iota(jnp.int32, (n, kk), 1)
    cand = jnp.where(d <= dmin, iota, jnp.int32(kk))
    idx = jnp.min(cand, axis=1, keepdims=True)        # argmin (first tie)
    one_hot = (iota == idx).astype(f32)
    zq = jnp.dot(one_hot, e, preferred_element_type=f32)                # (N,128)

    # TODO(synk): forward value only; straight-through / stop_gradient
    #             structure of the VQ loss is not represented (no grads here).
    sq = (zq - z) ** 2
    mse = jnp.sum(jnp.sum(sq, axis=1, keepdims=True), axis=0, keepdims=True)
    mse = mse * f32(1.0 / (n * out_channels))   # padded lanes contribute 0
    loss_ref[...] = (1.0 + f32(commitment_cost)) * mse
    zq_ref[...] = zq


# -----------------------------------------------------------------------------
# Host-side padding / parameter construction
# -----------------------------------------------------------------------------
def _pad2d(a, rows, cols):
    out = jnp.zeros((rows, cols), a.dtype)
    return out.at[:a.shape[0], :a.shape[1]].set(a)


def _pad3d(a, d1, d2):
    out = jnp.zeros((a.shape[0], d1, d2), a.dtype)
    return out.at[:, :a.shape[1], :a.shape[2]].set(a)


def _dense(key, fan_in, fan_out):
    kw, kb = jax.random.split(key)
    lim = 1.0 / (fan_in ** 0.5)
    w = jax.random.uniform(kw, (fan_in, fan_out), jnp.float32, -lim, lim)
    b = jax.random.uniform(kb, (1, fan_out), jnp.float32, -lim, lim)
    return w, b


def build_params(key, in_channels, hidden, encoder_hidden, out_channels,
                 num_embeddings, heads, dim_head):
    ks = jax.random.split(key, 10)
    inner = heads * dim_head
    p = {}
    # BatchNorm1d affine (padded lanes gamma/beta = 0 -> padded output stays 0)
    p["bn_g"] = _pad2d(jnp.ones((1, in_channels), jnp.float32), 1, LANE)
    p["bn_b"] = jnp.zeros((1, LANE), jnp.float32)
    # ffin
    w1, b1 = _dense(ks[0], in_channels, hidden * 2)
    w2, b2 = _dense(ks[1], hidden * 2, hidden)
    p["w1"], p["b1"] = _pad2d(w1, LANE, LANE), _pad2d(b1, 1, LANE)
    p["w2"], p["b2"] = _pad2d(w2, LANE, LANE), _pad2d(b2, 1, LANE)
    p["dyt0_w"] = _pad2d(jnp.ones((1, hidden), jnp.float32), 1, LANE)
    p["dyt0_b"] = jnp.zeros((1, LANE), jnp.float32)
    # simplified SE3 attention: per-head weights -> batched contraction in-kernel
    wq, _ = _dense(ks[2], hidden, inner)
    wk, _ = _dense(ks[3], hidden, inner)
    wv, _ = _dense(ks[4], hidden, inner)
    wo, _ = _dense(ks[5], inner, hidden)
    to_h = lambda w: w.reshape(hidden, heads, dim_head).transpose(1, 0, 2)
    p["wq"] = _pad3d(to_h(wq), LANE, dim_head)                      # (H,128,Dh)
    p["wk"] = _pad3d(to_h(wk), LANE, dim_head)
    p["wv"] = _pad3d(to_h(wv), LANE, dim_head)
    p["wo"] = _pad3d(wo.reshape(heads, dim_head, hidden), dim_head, LANE)  # (H,Dh,128)
    # lin
    p["dyt1_w"] = _pad2d(jnp.ones((1, hidden), jnp.float32), 1, LANE)
    p["dyt1_b"] = jnp.zeros((1, LANE), jnp.float32)
    w3, b3 = _dense(ks[6], hidden, encoder_hidden)
    w4, b4 = _dense(ks[7], encoder_hidden, encoder_hidden)
    p["w3"], p["b3"] = _pad2d(w3, LANE, LANE), _pad2d(b3, 1, LANE)
    p["w4"], p["b4"] = _pad2d(w4, LANE, LANE), _pad2d(b4, 1, LANE)
    # out_dense: split concat weight into encoder_hidden part + 20-dim AA part
    w5, b5 = _dense(ks[8], encoder_hidden + 20, out_channels)
    p["w5a"] = _pad2d(w5[:encoder_hidden, :], LANE, LANE)
    p["w5b"] = _pad2d(w5[encoder_hidden:, :], LANE, LANE)
    p["b5"] = _pad2d(b5, 1, LANE)
    p["dyt2_w"] = _pad2d(jnp.ones((1, out_channels), jnp.float32), 1, LANE)
    p["dyt2_b"] = jnp.zeros((1, LANE), jnp.float32)
    # DynamicTanh alphas (ffin / lin / out_dense), packed for one SMEM input
    p["alphas"] = jnp.full((3,), 0.5, jnp.float32)
    # VQ codebook
    cb = jax.random.uniform(ks[9], (num_embeddings, out_channels), jnp.float32,
                            -1.0 / num_embeddings, 1.0 / num_embeddings)
    p["codebook"] = _pad2d(cb, num_embeddings, LANE)
    return p


# -----------------------------------------------------------------------------
# Full forward: one fused pallas_call
# -----------------------------------------------------------------------------
def se3_encoder_forward(res, coords, aa, params, *,
                        valid_radius, commitment_cost, out_channels):
    n = res.shape[0]
    inputs = [
        params["alphas"],
        _pad2d(res, n, LANE), _pad2d(coords, n, LANE), _pad2d(aa, n, LANE),
        params["bn_g"], params["bn_b"],
        params["w1"], params["b1"], params["w2"], params["b2"],
        params["dyt0_w"], params["dyt0_b"],
        params["wq"], params["wk"], params["wv"], params["wo"],
        params["dyt1_w"], params["dyt1_b"],
        params["w3"], params["b3"], params["w4"], params["b4"],
        params["w5a"], params["w5b"], params["b5"],
        params["dyt2_w"], params["dyt2_b"],
        params["codebook"],
    ]
    smem = pl.BlockSpec(memory_space=pltpu.MemorySpace.SMEM)
    vmem = pl.BlockSpec(memory_space=pltpu.MemorySpace.VMEM)
    kernel = functools.partial(
        se3_encoder_kernel,
        valid_radius=valid_radius,
        commitment_cost=commitment_cost,
        out_channels=out_channels)
    zq_pad, loss = pl.pallas_call(
        kernel,
        out_shape=(jax.ShapeDtypeStruct((n, LANE), jnp.float32),
                   jax.ShapeDtypeStruct((1, 1), jnp.float32)),
        in_specs=[smem] + [vmem] * (len(inputs) - 1),
        out_specs=(vmem, vmem),
    )(*inputs)
    return zq_pad[:, :out_channels], loss[0, 0]


# -----------------------------------------------------------------------------
# Main
# -----------------------------------------------------------------------------
if __name__ == "__main__":
    # small, module-consistent sizes
    N = 16                    # residues (nodes), multiple of 8
    IN_CHANNELS = 16          # 'res' node features
    HIDDEN = 32               # hidden_channels = [32, 32] -> lin input = 32*1
    ENCODER_HIDDEN = 64
    OUT_CHANNELS = 16
    NUM_EMBEDDINGS = 32
    COMMITMENT_COST = 0.25
    HEADS = 3                 # nheads default
    DIM_HEAD = HIDDEN         # SE3Transformer(dim_head=hidden_channels[0])
    VALID_RADIUS = 10.0

    key = jax.random.PRNGKey(0)
    k_res, k_coord, k_aa, k_params = jax.random.split(key, 4)

    res = jax.random.normal(k_res, (N, IN_CHANNELS), jnp.float32)
    coords = jnp.cumsum(jax.random.normal(k_coord, (N, 3), jnp.float32) * 1.5, axis=0)
    aa = jax.nn.one_hot(
        jax.random.randint(k_aa, (N,), 0, 20), 20, dtype=jnp.float32)

    params = build_params(k_params, IN_CHANNELS, HIDDEN, ENCODER_HIDDEN,
                          OUT_CHANNELS, NUM_EMBEDDINGS, HEADS, DIM_HEAD)

    z_q, vq_loss = se3_encoder_forward(
        res, coords, aa, params,
        valid_radius=VALID_RADIUS, commitment_cost=COMMITMENT_COST,
        out_channels=OUT_CHANNELS)

    jax.block_until_ready((z_q, vq_loss))
    assert z_q.shape == (N, OUT_CHANNELS)
    assert jnp.isfinite(vq_loss)
    print("KERNEL_OK")
</pallas_src>

<mosaic_0001>
module attributes {stable_mosaic.version = 11 : i64} {
  func.func @se3_encoder_kernel(%arg0: memref<3xf32, #tpu.memory_space<smem>>, %arg1: memref<16x128xf32, #tpu.memory_space<vmem>>, %arg2: memref<16x128xf32, #tpu.memory_space<vmem>>, %arg3: memref<16x128xf32, #tpu.memory_space<vmem>>, %arg4: memref<1x128xf32, #tpu.memory_space<vmem>>, %arg5: memref<1x128xf32, #tpu.memory_space<vmem>>, %arg6: memref<128x128xf32, #tpu.memory_space<vmem>>, %arg7: memref<1x128xf32, #tpu.memory_space<vmem>>, %arg8: memref<128x128xf32, #tpu.memory_space<vmem>>, %arg9: memref<1x128xf32, #tpu.memory_space<vmem>>, %arg10: memref<1x128xf32, #tpu.memory_space<vmem>>, %arg11: memref<1x128xf32, #tpu.memory_space<vmem>>, %arg12: memref<3x128x32xf32, #tpu.memory_space<vmem>>, %arg13: memref<3x128x32xf32, #tpu.memory_space<vmem>>, %arg14: memref<3x128x32xf32, #tpu.memory_space<vmem>>, %arg15: memref<3x32x128xf32, #tpu.memory_space<vmem>>, %arg16: memref<1x128xf32, #tpu.memory_space<vmem>>, %arg17: memref<1x128xf32, #tpu.memory_space<vmem>>, %arg18: memref<128x128xf32, #tpu.memory_space<vmem>>, %arg19: memref<1x128xf32, #tpu.memory_space<vmem>>, %arg20: memref<128x128xf32, #tpu.memory_space<vmem>>, %arg21: memref<1x128xf32, #tpu.memory_space<vmem>>, %arg22: memref<128x128xf32, #tpu.memory_space<vmem>>, %arg23: memref<128x128xf32, #tpu.memory_space<vmem>>, %arg24: memref<1x128xf32, #tpu.memory_space<vmem>>, %arg25: memref<1x128xf32, #tpu.memory_space<vmem>>, %arg26: memref<1x128xf32, #tpu.memory_space<vmem>>, %arg27: memref<32x128xf32, #tpu.memory_space<vmem>>, %arg28: memref<16x128xf32, #tpu.memory_space<vmem>>, %arg29: memref<1x1xf32, #tpu.memory_space<vmem>>) attributes {dimension_semantics = [], scalar_prefetch = 0 : i64, scratch_operands = 0 : i64, tpu.core_type = #tpu.core_type<tc>} {
    %c0 = arith.constant 0 : index
    %c0_0 = arith.constant 0 : index
    %0 = vector.load %arg1[%c0, %c0_0] : memref<16x128xf32, #tpu.memory_space<vmem>>, vector<16x128xf32>
    %cst = arith.constant dense<0.000000e+00> : vector<128xf32>
    %1 = vector.multi_reduction <add>, %0, %cst [0] : vector<16x128xf32> to vector<128xf32>
    %2 = vector.shape_cast %1 : vector<128xf32> to vector<1x128xf32>
    %cst_1 = arith.constant 1.600000e+01 : f32
    %3 = vector.broadcast %cst_1 : f32 to vector<1x128xf32>
    %4 = arith.divf %2, %3 : vector<1x128xf32>
    %5 = vector.broadcast %4 : vector<1x128xf32> to vector<16x128xf32>
    %6 = arith.subf %0, %5 : vector<16x128xf32>
    %7 = arith.mulf %6, %6 : vector<16x128xf32>
    %cst_2 = arith.constant dense<0.000000e+00> : vector<128xf32>
    %8 = vector.multi_reduction <add>, %7, %cst_2 [0] : vector<16x128xf32> to vector<128xf32>
    %9 = vector.shape_cast %8 : vector<128xf32> to vector<1x128xf32>
    %cst_3 = arith.constant 1.600000e+01 : f32
    %10 = vector.broadcast %cst_3 : f32 to vector<1x128xf32>
    %11 = arith.divf %9, %10 : vector<1x128xf32>
    %12 = vector.broadcast %4 : vector<1x128xf32> to vector<16x128xf32>
    %13 = arith.subf %0, %12 : vector<16x128xf32>
    %cst_4 = arith.constant 9.99999974E-6 : f32
    %14 = vector.broadcast %cst_4 : f32 to vector<1x128xf32>
    %15 = arith.addf %11, %14 : vector<1x128xf32>
    %16 = math.rsqrt %15 : vector<1x128xf32>
    %17 = vector.broadcast %16 : vector<1x128xf32> to vector<16x128xf32>
    %18 = arith.mulf %13, %17 : vector<16x128xf32>
    %c0_5 = arith.constant 0 : index
    %c0_6 = arith.constant 0 : index
    %19 = vector.load %arg4[%c0_5, %c0_6] : memref<1x128xf32, #tpu.memory_space<vmem>>, vector<1x128xf32>
    %20 = vector.broadcast %19 : vector<1x128xf32> to vector<16x128xf32>
    %21 = arith.mulf %18, %20 : vector<16x128xf32>
    %c0_7 = arith.constant 0 : index
    %c0_8 = arith.constant 0 : index
    %22 = vector.load %arg5[%c0_7, %c0_8] : memref<1x128xf32, #tpu.memory_space<vmem>>, vector<1x128xf32>
    %23 = vector.broadcast %22 : vector<1x128xf32> to vector<16x128xf32>
    %24 = arith.addf %21, %23 : vector<16x128xf32>
    %c0_9 = arith.constant 0 : index
    %c0_10 = arith.constant 0 : index
    %25 = vector.load %arg6[%c0_9, %c0_10] : memref<128x128xf32, #tpu.memory_space<vmem>>, vector<128x128xf32>
    %cst_11 = arith.constant dense<0.000000e+00> : vector<16x128xf32>
    %26 = tpu.matmul %24, %25, %cst_11 {dimension_numbers = #tpu.dot_dimension_numbers<[1], [0], [0], [1], [0, 0, 1, 1], [], []>} : vector<16x128xf32>, vector<128x128xf32>, vector<16x128xf32> -> vector<16x128xf32>
    %c0_12 = arith.constant 0 : index
    %c0_13 = arith.constant 0 : index
    %27 = vector.load %arg7[%c0_12, %c0_13] : memref<1x128xf32, #tpu.memory_space<vmem>>, vector<1x128xf32>
    %28 = vector.broadcast %27 : vector<1x128xf32> to vector<16x128xf32>
    %29 = arith.addf %26, %28 : vector<16x128xf32>
    %cst_14 = arith.constant 5.000000e-01 : f32
    %30 = vector.broadcast %cst_14 : f32 to vector<16x128xf32>
    %31 = arith.mulf %30, %29 : vector<16x128xf32>
    %cst_15 = arith.constant 4.471500e-02 : f32
    %32 = vector.broadcast %cst_15 : f32 to vector<16x128xf32>
    %33 = arith.mulf %32, %29 : vector<16x128xf32>
    %34 = arith.mulf %33, %29 : vector<16x128xf32>
    %35 = arith.mulf %34, %29 : vector<16x128xf32>
    %36 = arith.addf %29, %35 : vector<16x128xf32>
    %cst_16 = arith.constant 0.797884583 : f32
    %37 = vector.broadcast %cst_16 : f32 to vector<16x128xf32>
    %38 = arith.mulf %37, %36 : vector<16x128xf32>
    %39 = math.tanh %38 : vector<16x128xf32>
    %cst_17 = arith.constant 1.000000e+00 : f32
    %40 = vector.broadcast %cst_17 : f32 to vector<16x128xf32>
    %41 = arith.addf %40, %39 : vector<16x128xf32>
    %42 = arith.mulf %31, %41 : vector<16x128xf32>
    %c0_18 = arith.constant 0 : index
    %c0_19 = arith.constant 0 : index
    %43 = vector.load %arg8[%c0_18, %c0_19] : memref<128x128xf32, #tpu.memory_space<vmem>>, vector<128x128xf32>
    %cst_20 = arith.constant dense<0.000000e+00> : vector<16x128xf32>
    %44 = tpu.matmul %42, %43, %cst_20 {dimension_numbers = #tpu.dot_dimension_numbers<[1], [0], [0], [1], [0, 0, 1, 1], [], []>} : vector<16x128xf32>, vector<128x128xf32>, vector<16x128xf32> -> vector<16x128xf32>
    %c0_21 = arith.constant 0 : index
    %c0_22 = arith.constant 0 : index
    %45 = vector.load %arg9[%c0_21, %c0_22] : memref<1x128xf32, #tpu.memory_space<vmem>>, vector<1x128xf32>
    %46 = vector.broadcast %45 : vector<1x128xf32> to vector<16x128xf32>
    %47 = arith.addf %44, %46 : vector<16x128xf32>
    %cst_23 = arith.constant 5.000000e-01 : f32
    %48 = vector.broadcast %cst_23 : f32 to vector<16x128xf32>
    %49 = arith.mulf %48, %47 : vector<16x128xf32>
    %cst_24 = arith.constant 4.471500e-02 : f32
    %50 = vector.broadcast %cst_24 : f32 to vector<16x128xf32>
    %51 = arith.mulf %50, %47 : vector<16x128xf32>
    %52 = arith.mulf %51, %47 : vector<16x128xf32>
    %53 = arith.mulf %52, %47 : vector<16x128xf32>
    %54 = arith.addf %47, %53 : vector<16x128xf32>
    %cst_25 = arith.constant 0.797884583 : f32
    %55 = vector.broadcast %cst_25 : f32 to vector<16x128xf32>
    %56 = arith.mulf %55, %54 : vector<16x128xf32>
    %57 = math.tanh %56 : vector<16x128xf32>
    %cst_26 = arith.constant 1.000000e+00 : f32
    %58 = vector.broadcast %cst_26 : f32 to vector<16x128xf32>
    %59 = arith.addf %58, %57 : vector<16x128xf32>
    %60 = arith.mulf %49, %59 : vector<16x128xf32>
    %c0_27 = arith.constant 0 : index
    %61 = memref.load %arg0[%c0_27] : memref<3xf32, #tpu.memory_space<smem>>
    %c0_28 = arith.constant 0 : index
    %c0_29 = arith.constant 0 : index
    %62 = vector.load %arg10[%c0_28, %c0_29] : memref<1x128xf32, #tpu.memory_space<vmem>>, vector<1x128xf32>
    %c0_30 = arith.constant 0 : index
    %c0_31 = arith.constant 0 : index
    %63 = vector.load %arg11[%c0_30, %c0_31] : memref<1x128xf32, #tpu.memory_space<vmem>>, vector<1x128xf32>
    %64 = vector.broadcast %61 : f32 to vector<16x128xf32>
    %65 = arith.mulf %64, %60 : vector<16x128xf32>
    %66 = math.tanh %65 : vector<16x128xf32>
    %67 = vector.broadcast %62 : vector<1x128xf32> to vector<16x128xf32>
    %68 = arith.mulf %66, %67 : vector<16x128xf32>
    %69 = vector.broadcast %63 : vector<1x128xf32> to vector<16x128xf32>
    %70 = arith.addf %68, %69 : vector<16x128xf32>
    %c0_32 = arith.constant 0 : index
    %c0_33 = arith.constant 0 : index
    %71 = vector.load %arg2[%c0_32, %c0_33] : memref<16x128xf32, #tpu.memory_space<vmem>>, vector<16x128xf32>
    %72 = arith.mulf %71, %71 : vector<16x128xf32>
    %cst_34 = arith.constant dense<0.000000e+00> : vector<16xf32>
    %73 = vector.multi_reduction <add>, %72, %cst_34 [1] : vector<16x128xf32> to vector<16xf32>
    %74 = vector.shape_cast %73 : vector<16xf32> to vector<16x1xf32>
    %75 = tpu.transpose %74, [1, 0] : vector<16x1xf32> -> vector<1x16xf32>
    %76 = vector.broadcast %74 : vector<16x1xf32> to vector<16x16xf32>
    %77 = vector.broadcast %75 : vector<1x16xf32> to vector<16x16xf32>
    %78 = arith.addf %76, %77 : vector<16x16xf32>
    %79 = tpu.transpose %71, [1, 0] : vector<16x128xf32> -> vector<128x16xf32>
    %cst_35 = arith.constant dense<0.000000e+00> : vector<16x16xf32>
    %80 = tpu.matmul %71, %79, %cst_35 {dimension_numbers = #tpu.dot_dimension_numbers<[1], [0], [0], [1], [0, 0, 1, 1], [], []>} : vector<16x128xf32>, vector<128x16xf32>, vector<16x16xf32> -> vector<16x16xf32>
    %cst_36 = arith.constant 2.000000e+00 : f32
    %81 = vector.broadcast %cst_36 : f32 to vector<16x16xf32>
    %82 = arith.mulf %81, %80 : vector<16x16xf32>
    %83 = arith.subf %78, %82 : vector<16x16xf32>
    %84 = tpu.iota {dimensions = array<i32: 0>} : vector<16x16xi32>
    %85 = tpu.iota {dimensions = array<i32: 1>} : vector<16x16xi32>
    %86 = arith.subi %84, %85 : vector<16x16xi32>
    %c0_i32 = arith.constant 0 : i32
    %87 = vector.broadcast %c0_i32 : i32 to vector<16x16xi32>
    %88 = arith.cmpi eq, %86, %87 : vector<16x16xi32>
    %c1_i32 = arith.constant 1 : i32
    %89 = vector.broadcast %c1_i32 : i32 to vector<16x16xi32>
    %90 = arith.cmpi eq, %86, %89 : vector<16x16xi32>
    %c-1_i32 = arith.constant -1 : i32
    %91 = vector.broadcast %c-1_i32 : i32 to vector<16x16xi32>
    %92 = arith.cmpi eq, %86, %91 : vector<16x16xi32>
    %93 = arith.ori %90, %92 : vector<16x16xi1>
    %cst_37 = arith.constant 1.000000e+02 : f32
    %94 = vector.broadcast %cst_37 : f32 to vector<16x16xf32>
    %95 = arith.cmpf ole, %83, %94 : vector<16x16xf32>
    %96 = arith.andi %93, %95 : vector<16x16xi1>
    %97 = arith.ori %88, %96 : vector<16x16xi1>
    %98 = vector.shape_cast %70 : vector<16x128xf32> to vector<1x16x128xf32>
    %99 = vector.shape_cast %98 : vector<1x16x128xf32> to vector<1x16x128xf32>
    %100 = vector.broadcast %99 : vector<1x16x128xf32> to vector<3x16x128xf32>
    %c0_38 = arith.constant 0 : index
    %c0_39 = arith.constant 0 : index
    %c0_40 = arith.constant 0 : index
    %101 = vector.load %arg12[%c0_38, %c0_39, %c0_40] : memref<3x128x32xf32, #tpu.memory_space<vmem>>, vector<3x128x32xf32>
    "tpu.trace_start"() <{level = 10 : i32, message = "hnc,hcd->hnd"}> : () -> ()
    %cst_41 = arith.constant dense<0.000000e+00> : vector<3x16x32xf32>
    %102 = tpu.matmul %100, %101, %cst_41 {dimension_numbers = #tpu.dot_dimension_numbers<[2], [1], [1], [2], [0, 0, 0, 1, 1, 2], [0], [0]>} : vector<3x16x128xf32>, vector<3x128x32xf32>, vector<3x16x32xf32> -> vector<3x16x32xf32>
    "tpu.trace_stop"() : () -> ()
    %c0_42 = arith.constant 0 : index
    %c0_43 = arith.constant 0 : index
    %c0_44 = arith.constant 0 : index
    %103 = vector.load %arg13[%c0_42, %c0_43, %c0_44] : memref<3x128x32xf32, #tpu.memory_space<vmem>>, vector<3x128x32xf32>
    "tpu.trace_start"() <{level = 10 : i32, message = "hnc,hcd->hnd"}> : () -> ()
    %cst_45 = arith.constant dense<0.000000e+00> : vector<3x16x32xf32>
    %104 = tpu.matmul %100, %103, %cst_45 {dimension_numbers = #tpu.dot_dimension_numbers<[2], [1], [1], [2], [0, 0, 0, 1, 1, 2], [0], [0]>} : vector<3x16x128xf32>, vector<3x128x32xf32>, vector<3x16x32xf32> -> vector<3x16x32xf32>
    "tpu.trace_stop"() : () -> ()
    %c0_46 = arith.constant 0 : index
    %c0_47 = arith.constant 0 : index
    %c0_48 = arith.constant 0 : index
    %105 = vector.load %arg14[%c0_46, %c0_47, %c0_48] : memref<3x128x32xf32, #tpu.memory_space<vmem>>, vector<3x128x32xf32>
    "tpu.trace_start"() <{level = 10 : i32, message = "hnc,hcd->hnd"}> : () -> ()
    %cst_49 = arith.constant dense<0.000000e+00> : vector<3x16x32xf32>
    %106 = tpu.matmul %100, %105, %cst_49 {dimension_numbers = #tpu.dot_dimension_numbers<[2], [1], [1], [2], [0, 0, 0, 1, 1, 2], [0], [0]>} : vector<3x16x128xf32>, vector<3x128x32xf32>, vector<3x16x32xf32> -> vector<3x16x32xf32>
    "tpu.trace_stop"() : () -> ()
    "tpu.trace_start"() <{level = 10 : i32, message = "hqd,hkd->hqk"}> : () -> ()
    %cst_50 = arith.constant dense<0.000000e+00> : vector<3x16x16xf32>
    %107 = tpu.matmul %102, %104, %cst_50 {dimension_numbers = #tpu.dot_dimension_numbers<[2], [2], [1], [1], [0, 0, 0, 1, 1, 1], [0], [0]>} : vector<3x16x32xf32>, vector<3x16x32xf32>, vector<3x16x16xf32> -> vector<3x16x16xf32>
    "tpu.trace_stop"() : () -> ()
    %cst_51 = arith.constant 0.176776692 : f32
    %108 = vector.broadcast %cst_51 : f32 to vector<3x16x16xf32>
    %109 = arith.mulf %107, %108 : vector<3x16x16xf32>
    %110 = vector.shape_cast %97 : vector<16x16xi1> to vector<1x16x16xi1>
    %cst_52 = arith.constant -1.000000e+09 : f32
    %111 = vector.shape_cast %110 : vector<1x16x16xi1> to vector<1x16x16xi1>
    %112 = vector.broadcast %111 : vector<1x16x16xi1> to vector<3x16x16xi1>
    %113 = vector.broadcast %cst_52 : f32 to vector<3x16x16xf32>
    %114 = arith.select %112, %109, %113 : vector<3x16x16xi1>, vector<3x16x16xf32>
    %cst_53 = arith.constant dense<0xFF800000> : vector<3x16xf32>
    %115 = vector.multi_reduction <maximumf>, %114, %cst_53 [2] : vector<3x16x16xf32> to vector<3x16xf32>
    %116 = vector.shape_cast %115 : vector<3x16xf32> to vector<3x16x1xf32>
    %117 = vector.broadcast %116 : vector<3x16x1xf32> to vector<3x16x16xf32>
    %118 = arith.subf %114, %117 : vector<3x16x16xf32>
    %119 = math.exp %118 : vector<3x16x16xf32>
    %cst_54 = arith.constant dense<0.000000e+00> : vector<3x16xf32>
    %120 = vector.multi_reduction <add>, %119, %cst_54 [2] : vector<3x16x16xf32> to vector<3x16xf32>
    %121 = vector.shape_cast %120 : vector<3x16xf32> to vector<3x16x1xf32>
    %122 = tpu.reciprocal %121 {approx = true} : vector<3x16x1xf32> -> vector<3x16x1xf32>
    %123 = vector.broadcast %122 : vector<3x16x1xf32> to vector<3x16x16xf32>
    %124 = arith.mulf %119, %123 : vector<3x16x16xf32>
    "tpu.trace_start"() <{level = 10 : i32, message = "hqk,hkd->hqd"}> : () -> ()
    %cst_55 = arith.constant dense<0.000000e+00> : vector<3x16x32xf32>
    %125 = tpu.matmul %124, %106, %cst_55 {dimension_numbers = #tpu.dot_dimension_numbers<[2], [1], [1], [2], [0, 0, 0, 1, 1, 2], [0], [0]>} : vector<3x16x16xf32>, vector<3x16x32xf32>, vector<3x16x32xf32> -> vector<3x16x32xf32>
    "tpu.trace_stop"() : () -> ()
    %c0_56 = arith.constant 0 : index
    %c0_57 = arith.constant 0 : index
    %c0_58 = arith.constant 0 : index
    %126 = vector.load %arg15[%c0_56, %c0_57, %c0_58] : memref<3x32x128xf32, #tpu.memory_space<vmem>>, vector<3x32x128xf32>
    "tpu.trace_start"() <{level = 10 : i32, message = "hqd,hdo->hqo"}> : () -> ()
    %cst_59 = arith.constant dense<0.000000e+00> : vector<3x16x128xf32>
    %127 = tpu.matmul %125, %126, %cst_59 {dimension_numbers = #tpu.dot_dimension_numbers<[2], [1], [1], [2], [0, 0, 0, 1, 1, 2], [0], [0]>} : vector<3x16x32xf32>, vector<3x32x128xf32>, vector<3x16x128xf32> -> vector<3x16x128xf32>
    "tpu.trace_stop"() : () -> ()
    %cst_60 = arith.constant dense<0.000000e+00> : vector<16x128xf32>
    %128 = vector.multi_reduction <add>, %127, %cst_60 [0] : vector<3x16x128xf32> to vector<16x128xf32>
    %129 = arith.addf %70, %128 : vector<16x128xf32>
    %c1 = arith.constant 1 : index
    %130 = memref.load %arg0[%c1] : memref<3xf32, #tpu.memory_space<smem>>
    %c0_61 = arith.constant 0 : index
    %c0_62 = arith.constant 0 : index
    %131 = vector.load %arg16[%c0_61, %c0_62] : memref<1x128xf32, #tpu.memory_space<vmem>>, vector<1x128xf32>
    %c0_63 = arith.constant 0 : index
    %c0_64 = arith.constant 0 : index
    %132 = vector.load %arg17[%c0_63, %c0_64] : memref<1x128xf32, #tpu.memory_space<vmem>>, vector<1x128xf32>
    %133 = vector.broadcast %130 : f32 to vector<16x128xf32>
    %134 = arith.mulf %133, %129 : vector<16x128xf32>
    %135 = math.tanh %134 : vector<16x128xf32>
    %136 = vector.broadcast %131 : vector<1x128xf32> to vector<16x128xf32>
    %137 = arith.mulf %135, %136 : vector<16x128xf32>
    %138 = vector.broadcast %132 : vector<1x128xf32> to vector<16x128xf32>
    %139 = arith.addf %137, %138 : vector<16x128xf32>
    %c0_65 = arith.constant 0 : index
    %c0_66 = arith.constant 0 : index
    %140 = vector.load %arg18[%c0_65, %c0_66] : memref<128x128xf32, #tpu.memory_space<vmem>>, vector<128x128xf32>
    %cst_67 = arith.constant dense<0.000000e+00> : vector<16x128xf32>
    %141 = tpu.matmul %139, %140, %cst_67 {dimension_numbers = #tpu.dot_dimension_numbers<[1], [0], [0], [1], [0, 0, 1, 1], [], []>} : vector<16x128xf32>, vector<128x128xf32>, vector<16x128xf32> -> vector<16x128xf32>
    %c0_68 = arith.constant 0 : index
    %c0_69 = arith.constant 0 : index
    %142 = vector.load %arg19[%c0_68, %c0_69] : memref<1x128xf32, #tpu.memory_space<vmem>>, vector<1x128xf32>
    %143 = vector.broadcast %142 : vector<1x128xf32> to vector<16x128xf32>
    %144 = arith.addf %141, %143 : vector<16x128xf32>
    %cst_70 = arith.constant 5.000000e-01 : f32
    %145 = vector.broadcast %cst_70 : f32 to vector<16x128xf32>
    %146 = arith.mulf %145, %144 : vector<16x128xf32>
    %cst_71 = arith.constant 4.471500e-02 : f32
    %147 = vector.broadcast %cst_71 : f32 to vector<16x128xf32>
    %148 = arith.mulf %147, %144 : vector<16x128xf32>
    %149 = arith.mulf %148, %144 : vector<16x128xf32>
    %150 = arith.mulf %149, %144 : vector<16x128xf32>
    %151 = arith.addf %144, %150 : vector<16x128xf32>
    %cst_72 = arith.constant 0.797884583 : f32
    %152 = vector.broadcast %cst_72 : f32 to vector<16x128xf32>
    %153 = arith.mulf %152, %151 : vector<16x128xf32>
    %154 = math.tanh %153 : vector<16x128xf32>
    %cst_73 = arith.constant 1.000000e+00 : f32
    %155 = vector.broadcast %cst_73 : f32 to vector<16x128xf32>
    %156 = arith.addf %155, %154 : vector<16x128xf32>
    %157 = arith.mulf %146, %156 : vector<16x128xf32>
    %c0_74 = arith.constant 0 : index
    %c0_75 = arith.constant 0 : index
    %158 = vector.load %arg20[%c0_74, %c0_75] : memref<128x128xf32, #tpu.memory_space<vmem>>, vector<128x128xf32>
    %cst_76 = arith.constant dense<0.000000e+00> : vector<16x128xf32>
    %159 = tpu.matmul %157, %158, %cst_76 {dimension_numbers = #tpu.dot_dimension_numbers<[1], [0], [0], [1], [0, 0, 1, 1], [], []>} : vector<16x128xf32>, vector<128x128xf32>, vector<16x128xf32> -> vector<16x128xf32>
    %c0_77 = arith.constant 0 : index
    %c0_78 = arith.constant 0 : index
    %160 = vector.load %arg21[%c0_77, %c0_78] : memref<1x128xf32, #tpu.memory_space<vmem>>, vector<1x128xf32>
    %161 = vector.broadcast %160 : vector<1x128xf32> to vector<16x128xf32>
    %162 = arith.addf %159, %161 : vector<16x128xf32>
    %cst_79 = arith.constant 5.000000e-01 : f32
    %163 = vector.broadcast %cst_79 : f32 to vector<16x128xf32>
    %164 = arith.mulf %163, %162 : vector<16x128xf32>
    %cst_80 = arith.constant 4.471500e-02 : f32
    %165 = vector.broadcast %cst_80 : f32 to vector<16x128xf32>
    %166 = arith.mulf %165, %162 : vector<16x128xf32>
    %167 = arith.mulf %166, %162 : vector<16x128xf32>
    %168 = arith.mulf %167, %162 : vector<16x128xf32>
    %169 = arith.addf %162, %168 : vector<16x128xf32>
    %cst_81 = arith.constant 0.797884583 : f32
    %170 = vector.broadcast %cst_81 : f32 to vector<16x128xf32>
    %171 = arith.mulf %170, %169 : vector<16x128xf32>
    %172 = math.tanh %171 : vector<16x128xf32>
    %cst_82 = arith.constant 1.000000e+00 : f32
    %173 = vector.broadcast %cst_82 : f32 to vector<16x128xf32>
    %174 = arith.addf %173, %172 : vector<16x128xf32>
    %175 = arith.mulf %164, %174 : vector<16x128xf32>
    %c0_83 = arith.constant 0 : index
    %c0_84 = arith.constant 0 : index
    %176 = vector.load %arg22[%c0_83, %c0_84] : memref<128x128xf32, #tpu.memory_space<vmem>>, vector<128x128xf32>
    %cst_85 = arith.constant dense<0.000000e+00> : vector<16x128xf32>
    %177 = tpu.matmul %175, %176, %cst_85 {dimension_numbers = #tpu.dot_dimension_numbers<[1], [0], [0], [1], [0, 0, 1, 1], [], []>} : vector<16x128xf32>, vector<128x128xf32>, vector<16x128xf32> -> vector<16x128xf32>
    %c0_86 = arith.constant 0 : index
    %c0_87 = arith.constant 0 : index
    %178 = vector.load %arg3[%c0_86, %c0_87] : memref<16x128xf32, #tpu.memory_space<vmem>>, vector<16x128xf32>
    %c0_88 = arith.constant 0 : index
    %c0_89 = arith.constant 0 : index
    %179 = vector.load %arg23[%c0_88, %c0_89] : memref<128x128xf32, #tpu.memory_space<vmem>>, vector<128x128xf32>
    %cst_90 = arith.constant dense<0.000000e+00> : vector<16x128xf32>
    %180 = tpu.matmul %178, %179, %cst_90 {dimension_numbers = #tpu.dot_dimension_numbers<[1], [0], [0], [1], [0, 0, 1, 1], [], []>} : vector<16x128xf32>, vector<128x128xf32>, vector<16x128xf32> -> vector<16x128xf32>
    %181 = arith.addf %177, %180 : vector<16x128xf32>
    %c0_91 = arith.constant 0 : index
    %c0_92 = arith.constant 0 : index
    %182 = vector.load %arg24[%c0_91, %c0_92] : memref<1x128xf32, #tpu.memory_space<vmem>>, vector<1x128xf32>
    %183 = vector.broadcast %182 : vector<1x128xf32> to vector<16x128xf32>
    %184 = arith.addf %181, %183 : vector<16x128xf32>
    %cst_93 = arith.constant 5.000000e-01 : f32
    %185 = vector.broadcast %cst_93 : f32 to vector<16x128xf32>
    %186 = arith.mulf %185, %184 : vector<16x128xf32>
    %cst_94 = arith.constant 4.471500e-02 : f32
    %187 = vector.broadcast %cst_94 : f32 to vector<16x128xf32>
    %188 = arith.mulf %187, %184 : vector<16x128xf32>
    %189 = arith.mulf %188, %184 : vector<16x128xf32>
    %190 = arith.mulf %189, %184 : vector<16x128xf32>
    %191 = arith.addf %184, %190 : vector<16x128xf32>
    %cst_95 = arith.constant 0.797884583 : f32
    %192 = vector.broadcast %cst_95 : f32 to vector<16x128xf32>
    %193 = arith.mulf %192, %191 : vector<16x128xf32>
    %194 = math.tanh %193 : vector<16x128xf32>
    %cst_96 = arith.constant 1.000000e+00 : f32
    %195 = vector.broadcast %cst_96 : f32 to vector<16x128xf32>
    %196 = arith.addf %195, %194 : vector<16x128xf32>
    %197 = arith.mulf %186, %196 : vector<16x128xf32>
    %c2 = arith.constant 2 : index
    %198 = memref.load %arg0[%c2] : memref<3xf32, #tpu.memory_space<smem>>
    %c0_97 = arith.constant 0 : index
    %c0_98 = arith.constant 0 : index
    %199 = vector.load %arg25[%c0_97, %c0_98] : memref<1x128xf32, #tpu.memory_space<vmem>>, vector<1x128xf32>
    %c0_99 = arith.constant 0 : index
    %c0_100 = arith.constant 0 : index
    %200 = vector.load %arg26[%c0_99, %c0_100] : memref<1x128xf32, #tpu.memory_space<vmem>>, vector<1x128xf32>
    %201 = vector.broadcast %198 : f32 to vector<16x128xf32>
    %202 = arith.mulf %201, %197 : vector<16x128xf32>
    %203 = math.tanh %202 : vector<16x128xf32>
    %204 = vector.broadcast %199 : vector<1x128xf32> to vector<16x128xf32>
    %205 = arith.mulf %203, %204 : vector<16x128xf32>
    %206 = vector.broadcast %200 : vector<1x128xf32> to vector<16x128xf32>
    %207 = arith.addf %205, %206 : vector<16x128xf32>
    %208 = math.tanh %207 : vector<16x128xf32>
    %c0_101 = arith.constant 0 : index
    %c0_102 = arith.constant 0 : index
    %209 = vector.load %arg27[%c0_101, %c0_102] : memref<32x128xf32, #tpu.memory_space<vmem>>, vector<32x128xf32>
    %210 = arith.mulf %208, %208 : vector<16x128xf32>
    %cst_103 = arith.constant dense<0.000000e+00> : vector<16xf32>
    %211 = vector.multi_reduction <add>, %210, %cst_103 [1] : vector<16x128xf32> to vector<16xf32>
    %212 = vector.shape_cast %211 : vector<16xf32> to vector<16x1xf32>
    %213 = arith.mulf %209, %209 : vector<32x128xf32>
    %cst_104 = arith.constant dense<0.000000e+00> : vector<32xf32>
    %214 = vector.multi_reduction <add>, %213, %cst_104 [1] : vector<32x128xf32> to vector<32xf32>
    %215 = vector.shape_cast %214 : vector<32xf32> to vector<32x1xf32>
    %216 = tpu.transpose %215, [1, 0] : vector<32x1xf32> -> vector<1x32xf32>
    %217 = vector.broadcast %212 : vector<16x1xf32> to vector<16x32xf32>
    %218 = vector.broadcast %216 : vector<1x32xf32> to vector<16x32xf32>
    %219 = arith.addf %217, %218 : vector<16x32xf32>
    %220 = tpu.transpose %209, [1, 0] : vector<32x128xf32> -> vector<128x32xf32>
    %cst_105 = arith.constant dense<0.000000e+00> : vector<16x32xf32>
    %221 = tpu.matmul %208, %220, %cst_105 {dimension_numbers = #tpu.dot_dimension_numbers<[1], [0], [0], [1], [0, 0, 1, 1], [], []>} : vector<16x128xf32>, vector<128x32xf32>, vector<16x32xf32> -> vector<16x32xf32>
    %cst_106 = arith.constant 2.000000e+00 : f32
    %222 = vector.broadcast %cst_106 : f32 to vector<16x32xf32>
    %223 = arith.mulf %222, %221 : vector<16x32xf32>
    %224 = arith.subf %219, %223 : vector<16x32xf32>
    %cst_107 = arith.constant dense<0x7F800000> : vector<16xf32>
    %225 = vector.multi_reduction <minimumf>, %224, %cst_107 [1] : vector<16x32xf32> to vector<16xf32>
    %226 = vector.shape_cast %225 : vector<16xf32> to vector<16x1xf32>
    %227 = tpu.iota {dimensions = array<i32: 1>} : vector<16x32xi32>
    %228 = vector.broadcast %226 : vector<16x1xf32> to vector<16x32xf32>
    %229 = arith.cmpf ole, %224, %228 : vector<16x32xf32>
    %c32_i32 = arith.constant 32 : i32
    %230 = vector.broadcast %c32_i32 : i32 to vector<16x32xi32>
    %231 = arith.select %229, %227, %230 : vector<16x32xi1>, vector<16x32xi32>
    %cst_108 = arith.constant dense<2147483647> : vector<16xi32>
    %232 = vector.multi_reduction <minsi>, %231, %cst_108 [1] : vector<16x32xi32> to vector<16xi32>
    %233 = vector.shape_cast %232 : vector<16xi32> to vector<16x1xi32>
    %234 = vector.broadcast %233 : vector<16x1xi32> to vector<16x32xi32>
    %235 = arith.cmpi eq, %227, %234 : vector<16x32xi32>
    %236 = arith.extui %235 : vector<16x32xi1> to vector<16x32xi32>
    %237 = arith.sitofp %236 : vector<16x32xi32> to vector<16x32xf32>
    %cst_109 = arith.constant dense<0.000000e+00> : vector<16x128xf32>
    %238 = tpu.matmul %237, %209, %cst_109 {dimension_numbers = #tpu.dot_dimension_numbers<[1], [0], [0], [1], [0, 0, 1, 1], [], []>} : vector<16x32xf32>, vector<32x128xf32>, vector<16x128xf32> -> vector<16x128xf32>
    %239 = arith.subf %238, %208 : vector<16x128xf32>
    %240 = arith.mulf %239, %239 : vector<16x128xf32>
    %cst_110 = arith.constant dense<0.000000e+00> : vector<16xf32>
    %241 = vector.multi_reduction <add>, %240, %cst_110 [1] : vector<16x128xf32> to vector<16xf32>
    %242 = vector.shape_cast %241 : vector<16xf32> to vector<16x1xf32>
    %cst_111 = arith.constant dense<0.000000e+00> : vector<1xf32>
    %243 = vector.multi_reduction <add>, %242, %cst_111 [0] : vector<16x1xf32> to vector<1xf32>
    %244 = vector.shape_cast %243 : vector<1xf32> to vector<1x1xf32>
    %cst_112 = arith.constant 3.906250e-03 : f32
    %245 = vector.broadcast %cst_112 : f32 to vector<1x1xf32>
    %246 = arith.mulf %244, %245 : vector<1x1xf32>
    %cst_113 = arith.constant 1.000000e+00 : f32
    %cst_114 = arith.constant 2.500000e-01 : f32
    %247 = arith.addf %cst_113, %cst_114 : f32
    %248 = vector.broadcast %247 : f32 to vector<1x1xf32>
    %249 = arith.mulf %248, %246 : vector<1x1xf32>
    %c0_115 = arith.constant 0 : index
    %c0_116 = arith.constant 0 : index
    %250 = vector.load %arg29[%c0_115, %c0_116] : memref<1x1xf32, #tpu.memory_space<vmem>>, vector<1x1xf32>
    tpu.vector_store %arg29[%c0_115, %c0_116], %249 {strides = array<i32>} : memref<1x1xf32, #tpu.memory_space<vmem>>, vector<1x1xf32>,
    %c0_117 = arith.constant 0 : index
    %c0_118 = arith.constant 0 : index
    %251 = vector.load %arg28[%c0_117, %c0_118] : memref<16x128xf32, #tpu.memory_space<vmem>>, vector<16x128xf32>
    tpu.vector_store %arg28[%c0_117, %c0_118], %238 {strides = array<i32>} : memref<16x128xf32, #tpu.memory_space<vmem>>, vector<16x128xf32>,
    return
  }
}

</mosaic_0001>

<llo_original>
// kernel: tpu_custom_call.1
$region0: #{tpu_custom_call.1}
  #allocation0 [shape = 'u32[]', space=smem, size = 0x4, offset = 0x4, fixed_abs, tag = 'smem constant byte address 0x4 - core index']
  #allocation1 [shape = 'u32[144,128]{1,0:T(1,128)}', space=vmem, size = 0x12000, scoped, tag = 'internal scratch']
  %s0 = inlined_call_operand.smem [shape: u32[30], index: -1, kind: input, shape index: {}]
  %s1 = sld [smem:[%s0]]
  %s2 = scalar_lea.smem %s0, 1
  %s3 = sld [smem:[%s2]]
  %s4 = scalar_lea.smem %s0, 2
  %s5 = sld [smem:[%s4]]
  %s6 = scalar_lea.smem %s0, 3
  %s7 = sld [smem:[%s6]]
  %s8 = scalar_lea.smem %s0, 4
  %s9 = sld [smem:[%s8]]
  %s10 = scalar_lea.smem %s0, 5
  %s11 = sld [smem:[%s10]]
  %s12 = scalar_lea.smem %s0, 6
  %s13 = sld [smem:[%s12]]
  %s14 = scalar_lea.smem %s0, 7
  %s15 = sld [smem:[%s14]]
  %s16 = scalar_lea.smem %s0, 8
  %s17 = sld [smem:[%s16]]
  %s18 = scalar_lea.smem %s0, 9
  %s19 = sld [smem:[%s18]]
  %s20 = scalar_lea.smem %s0, 10
  %s21 = sld [smem:[%s20]]
  %s22 = scalar_lea.smem %s0, 11
  %s23 = sld [smem:[%s22]]
  %s24 = scalar_lea.smem %s0, 12
  %s25 = sld [smem:[%s24]]
  %s26 = scalar_lea.smem %s0, 13
  %s27 = sld [smem:[%s26]]
  %s28 = scalar_lea.smem %s0, 14
  %s29 = sld [smem:[%s28]]
  %s30 = scalar_lea.smem %s0, 15
  %s31 = sld [smem:[%s30]]
  %s32 = scalar_lea.smem %s0, 16
  %s33 = sld [smem:[%s32]]
  %s34 = scalar_lea.smem %s0, 17
  %s35 = sld [smem:[%s34]]
  %s36 = scalar_lea.smem %s0, 18
  %s37 = sld [smem:[%s36]]
  %s38 = scalar_lea.smem %s0, 19
  %s39 = sld [smem:[%s38]]
  %s40 = scalar_lea.smem %s0, 20
  %s41 = sld [smem:[%s40]]
  %s42 = scalar_lea.smem %s0, 21
  %s43 = sld [smem:[%s42]]
  %s44 = scalar_lea.smem %s0, 22
  %s45 = sld [smem:[%s44]]
  %s46 = scalar_lea.smem %s0, 23
  %s47 = sld [smem:[%s46]]
  %s48 = scalar_lea.smem %s0, 24
  %s49 = sld [smem:[%s48]]
  %s50 = scalar_lea.smem %s0, 25
  %s51 = sld [smem:[%s50]]
  %s52 = scalar_lea.smem %s0, 26
  %s53 = sld [smem:[%s52]]
  %s54 = scalar_lea.smem %s0, 27
  %s55 = sld [smem:[%s54]]
  %s56 = scalar_lea.smem %s0, 28
  %s57 = sld [smem:[%s56]]
  %s58 = scalar_lea.smem %s0, 29
  %s59 = sld [smem:[%s58]]
  %60 = xla_tuple %s57, %s59
  %s61 = sld [smem:[#allocation0]]
  $region134: #{tpu_custom_call.1} parent=0
    _
  %s63 = ssub.s32 1, %s61
  %s64 = scalar_select 0, %s63, %s61
  $region1: #{tpu_custom_call.1} parent=0
    #allocation2 [shape = 'u8[512]{0}', space=smem, size = 0x200, scoped, tag = 'input window, operand 0, single buffered']
    #allocation3 [shape = 's32[1]{0}', space=sflag, size = 0x4, scoped, tag = 'scoped memory for tpu_custom_call.1']
    #allocation4 [shape = 's32[1]{0}', space=sflag, size = 0x4, scoped, tag = 'scoped memory for tpu_custom_call.1']
    #allocation5 [shape = 'u8[8192]{0}', space=vmem, size = 0x2000, scoped, tag = 'output window, operand 0, single buffered']
    #allocation6 [shape = 'u8[512]{0}', space=vmem, size = 0x400, scoped, tag = 'output window, operand 1, single buffered']
    #allocation7 [shape = 's32[1]{0}', space=sflag, size = 0x4, scoped, tag = 'scoped memory for tpu_custom_call.1']
    %65 = vsyncpa [#allocation4], 0
    %66 = vsyncpa [#allocation3], 0
    %67 = vsyncpa [#allocation7], 0
    // Predicated region
    $region2: #{tpu_custom_call.1} parent=1 // pred_check
      _
    $region3: #{tpu_custom_call.1} parent=1 // pred_check_branch
      %69 = sbr.rel (0) target = $region5
    $region4: #{tpu_custom_call.1} parent=1 // pred_region
      %s71 = ssub.s32 16, 16
      %72 = vsyncadd [#allocation4], %s71
      %s74 = sshll.u32 %s1, 4
      %s75 = int_to_ptr.vmem [resolvable:$true] %s74
      %77 = dma.vmem_to_smem %s75, 16, [#allocation2], [#allocation4]
    $region5: #{tpu_custom_call.1} parent=1 // pred_fallthru
      _
    // Predicated region
    $region6: #{tpu_custom_call.1} parent=1 // pred_check
      _
    $region7: #{tpu_custom_call.1} parent=1 // pred_check_branch
      %79 = sbr.rel (0) target = $region9
    $region8: #{tpu_custom_call.1} parent=1 // pred_region
      _
    $region9: #{tpu_custom_call.1} parent=1 // pred_fallthru
      _
    // Predicated region
    $region10: #{tpu_custom_call.1} parent=1 // pred_check
      _
    $region11: #{tpu_custom_call.1} parent=1 // pred_check_branch
      %81 = sbr.rel (0) target = $region13
    $region12: #{tpu_custom_call.1} parent=1 // pred_region
      _
    $region13: #{tpu_custom_call.1} parent=1 // pred_fallthru
      _
    // Predicated region
    $region14: #{tpu_custom_call.1} parent=1 // pred_check
      _
    $region15: #{tpu_custom_call.1} parent=1 // pred_check_branch
      %83 = sbr.rel (0) target = $region17
    $region16: #{tpu_custom_call.1} parent=1 // pred_region
      _
    $region17: #{tpu_custom_call.1} parent=1 // pred_fallthru
      _
    // Predicated region
    $region18: #{tpu_custom_call.1} parent=1 // pred_check
      _
    $region19: #{tpu_custom_call.1} parent=1 // pred_check_branch
      %85 = sbr.rel (0) target = $region21
    $region20: #{tpu_custom_call.1} parent=1 // pred_region
      _
    $region21: #{tpu_custom_call.1} parent=1 // pred_fallthru
      _
    // Predicated region
    $region22: #{tpu_custom_call.1} parent=1 // pred_check
      _
    $region23: #{tpu_custom_call.1} parent=1 // pred_check_branch
      %87 = sbr.rel (0) target = $region25
    $region24: #{tpu_custom_call.1} parent=1 // pred_region
      _
    $region25: #{tpu_custom_call.1} parent=1 // pred_fallthru
      _
    // Predicated region
    $region26: #{tpu_custom_call.1} parent=1 // pred_check
      _
    $region27: #{tpu_custom_call.1} parent=1 // pred_check_branch
      %89 = sbr.rel (0) target = $region29
    $region28: #{tpu_custom_call.1} parent=1 // pred_region
      _
    $region29: #{tpu_custom_call.1} parent=1 // pred_fallthru
      _
    // Predicated region
    $region30: #{tpu_custom_call.1} parent=1 // pred_check
      _
    $region31: #{tpu_custom_call.1} parent=1 // pred_check_branch
      %91 = sbr.rel (0) target = $region33
    $region32: #{tpu_custom_call.1} parent=1 // pred_region
      _
    $region33: #{tpu_custom_call.1} parent=1 // pred_fallthru
      _
    // Predicated region
    $region34: #{tpu_custom_call.1} parent=1 // pred_check
      _
    $region35: #{tpu_custom_call.1} parent=1 // pred_check_branch
      %93 = sbr.rel (0) target = $region37
    $region36: #{tpu_custom_call.1} parent=1 // pred_region
      _
    $region37: #{tpu_custom_call.1} parent=1 // pred_fallthru
      _
    // Predicated region
    $region38: #{tpu_custom_call.1} parent=1 // pred_check
      _
    $region39: #{tpu_custom_call.1} parent=1 // pred_check_branch
      %95 = sbr.rel (0) target = $region41
    $region40: #{tpu_custom_call.1} parent=1 // pred_region
      _
    $region41: #{tpu_custom_call.1} parent=1 // pred_fallthru
      _
    // Predicated region
    $region42: #{tpu_custom_call.1} parent=1 // pred_check
      _
    $region43: #{tpu_custom_call.1} parent=1 // pred_check_branch
      %97 = sbr.rel (0) target = $region45
    $region44: #{tpu_custom_call.1} parent=1 // pred_region
      _
    $region45: #{tpu_custom_call.1} parent=1 // pred_fallthru
      _
    // Predicated region
    $region46: #{tpu_custom_call.1} parent=1 // pred_check
      _
    $region47: #{tpu_custom_call.1} parent=1 // pred_check_branch
      %99 = sbr.rel (0) target = $region49
    $region48: #{tpu_custom_call.1} parent=1 // pred_region
      _
    $region49: #{tpu_custom_call.1} parent=1 // pred_fallthru
      _
    // Predicated region
    $region50: #{tpu_custom_call.1} parent=1 // pred_check
      _
    $region51: #{tpu_custom_call.1} parent=1 // pred_check_branch
      %101 = sbr.rel (0) target = $region53
    $region52: #{tpu_custom_call.1} parent=1 // pred_region
      _
    $region53: #{tpu_custom_call.1} parent=1 // pred_fallthru
      _
    // Predicated region
    $region54: #{tpu_custom_call.1} parent=1 // pred_check
      _
    $region55: #{tpu_custom_call.1} parent=1 // pred_check_branch
      %103 = sbr.rel (0) target = $region57
    $region56: #{tpu_custom_call.1} parent=1 // pred_region
      _
    $region57: #{tpu_custom_call.1} parent=1 // pred_fallthru
      _
    // Predicated region
    $region58: #{tpu_custom_call.1} parent=1 // pred_check
      _
    $region59: #{tpu_custom_call.1} parent=1 // pred_check_branch
      %105 = sbr.rel (0) target = $region61
    $region60: #{tpu_custom_call.1} parent=1 // pred_region
      _
    $region61: #{tpu_custom_call.1} parent=1 // pred_fallthru
      _
    // Predicated region
    $region62: #{tpu_custom_call.1} parent=1 // pred_check
      _
    $region63: #{tpu_custom_call.1} parent=1 // pred_check_branch
      %107 = sbr.rel (0) target = $region65
    $region64: #{tpu_custom_call.1} parent=1 // pred_region
      _
    $region65: #{tpu_custom_call.1} parent=1 // pred_fallthru
      _
    // Predicated region
    $region66: #{tpu_custom_call.1} parent=1 // pred_check
      _
    $region67: #{tpu_custom_call.1} parent=1 // pred_check_branch
      %109 = sbr.rel (0) target = $region69
    $region68: #{tpu_custom_call.1} parent=1 // pred_region
      _
    $region69: #{tpu_custom_call.1} parent=1 // pred_fallthru
      _
    // Predicated region
    $region70: #{tpu_custom_call.1} parent=1 // pred_check
      _
    $region71: #{tpu_custom_call.1} parent=1 // pred_check_branch
      %111 = sbr.rel (0) target = $region73
    $region72: #{tpu_custom_call.1} parent=1 // pred_region
      _
    $region73: #{tpu_custom_call.1} parent=1 // pred_fallthru
      _
    // Predicated region
    $region74: #{tpu_custom_call.1} parent=1 // pred_check
      _
    $region75: #{tpu_custom_call.1} parent=1 // pred_check_branch
      %113 = sbr.rel (0) target = $region77
    $region76: #{tpu_custom_call.1} parent=1 // pred_region
      _
    $region77: #{tpu_custom_call.1} parent=1 // pred_fallthru
      _
    // Predicated region
    $region78: #{tpu_custom_call.1} parent=1 // pred_check
      _
    $region79: #{tpu_custom_call.1} parent=1 // pred_check_branch
      %115 = sbr.rel (0) target = $region81
    $region80: #{tpu_custom_call.1} parent=1 // pred_region
      _
    $region81: #{tpu_custom_call.1} parent=1 // pred_fallthru
      _
    // Predicated region
    $region82: #{tpu_custom_call.1} parent=1 // pred_check
      _
    $region83: #{tpu_custom_call.1} parent=1 // pred_check_branch
      %117 = sbr.rel (0) target = $region85
    $region84: #{tpu_custom_call.1} parent=1 // pred_region
      _
    $region85: #{tpu_custom_call.1} parent=1 // pred_fallthru
      _
    // Predicated region
    $region86: #{tpu_custom_call.1} parent=1 // pred_check
      _
    $region87: #{tpu_custom_call.1} parent=1 // pred_check_branch
      %119 = sbr.rel (0) target = $region89
    $region88: #{tpu_custom_call.1} parent=1 // pred_region
      _
    $region89: #{tpu_custom_call.1} parent=1 // pred_fallthru
      _
    // Predicated region
    $region90: #{tpu_custom_call.1} parent=1 // pred_check
      _
    $region91: #{tpu_custom_call.1} parent=1 // pred_check_branch
      %121 = sbr.rel (0) target = $region93
    $region92: #{tpu_custom_call.1} parent=1 // pred_region
      _
    $region93: #{tpu_custom_call.1} parent=1 // pred_fallthru
      _
    // Predicated region
    $region94: #{tpu_custom_call.1} parent=1 // pred_check
      _
    $region95: #{tpu_custom_call.1} parent=1 // pred_check_branch
      %123 = sbr.rel (0) target = $region97
    $region96: #{tpu_custom_call.1} parent=1 // pred_region
      _
    $region97: #{tpu_custom_call.1} parent=1 // pred_fallthru
      _
    // Predicated region
    $region98: #{tpu_custom_call.1} parent=1 // pred_check
      _
    $region99: #{tpu_custom_call.1} parent=1 // pred_check_branch
      %125 = sbr.rel (0) target = $region101
    $region100: #{tpu_custom_call.1} parent=1 // pred_region
      _
    $region101: #{tpu_custom_call.1} parent=1 // pred_fallthru
      _
    // Predicated region
    $region102: #{tpu_custom_call.1} parent=1 // pred_check
      _
    $region103: #{tpu_custom_call.1} parent=1 // pred_check_branch
      %127 = sbr.rel (0) target = $region105
    $region104: #{tpu_custom_call.1} parent=1 // pred_region
      _
    $region105: #{tpu_custom_call.1} parent=1 // pred_fallthru
      _
    // Predicated region
    $region106: #{tpu_custom_call.1} parent=1 // pred_check
      _
    $region107: #{tpu_custom_call.1} parent=1 // pred_check_branch
      %129 = sbr.rel (0) target = $region109
    $region108: #{tpu_custom_call.1} parent=1 // pred_region
      _
    $region109: #{tpu_custom_call.1} parent=1 // pred_fallthru
      _
    // Predicated region
    $region110: #{tpu_custom_call.1} parent=1 // pred_check
      _
    $region111: #{tpu_custom_call.1} parent=1 // pred_check_branch
      %131 = sbr.rel (0) target = $region113
    $region112: #{tpu_custom_call.1} parent=1 // pred_region
      _
    $region113: #{tpu_custom_call.1} parent=1 // pred_fallthru
      _
    // Predicated region
    $region114: #{tpu_custom_call.1} parent=1 // pred_check
      _
    $region115: #{tpu_custom_call.1} parent=1 // pred_check_branch
      %133 = sbr.rel (0) target = $region117
    $region116: #{tpu_custom_call.1} parent=1 // pred_region
      %134 = dma.done [#allocation4], 16
    $region117: #{tpu_custom_call.1} parent=1 // pred_fallthru
      _
    %135 = sfence
    %v136 = vld [vmem:[%s3] sm:$0xff]
    %v137 = vld [vmem:[%s3 + $0x8] sm:$0xff]
    %v138 = vadd.f32 %v136, %v137
    %v139 = vrot.slane %v138, 4
    %v140 = vadd.f32 %v138, %v139
    %v141 = vrot.slane %v140, 2
    %v142 = vadd.f32 %v140, %v141
    %v143 = vrot.slane %v142, 1
    %v144 = vadd.f32 %v142, %v143
    %v145 = vrcp.pop 16.0
    %v146 = vmul.f32 %v144, %v145
    %v147 = vsub.f32 %v136, %v146
    %v148 = vsub.f32 %v137, %v146
    %v149 = vmul.f32 %v147, %v147
    %v150 = vmul.f32 %v148, %v148
    %v151 = vadd.f32 %v149, %v150
    %v152 = vrot.slane %v151, 4
    %v153 = vadd.f32 %v151, %v152
    %v154 = vrot.slane %v153, 2
    %v155 = vadd.f32 %v153, %v154
    %v156 = vrot.slane %v155, 1
    %v157 = vadd.f32 %v155, %v156
    %v158 = vmul.f32 %v157, %v145
    %v159 = vadd.f32 %v158, 1e-05
    %v160 = vrsqrt.pop %v159
    %v161 = vmul.f32 %v147, %v160
    %v162 = vmul.f32 %v148, %v160
    %v163 = vld [vmem:[%s9] sm:$0x1]
    %v165 = vlaneseq
    %v166 = vshrl.u32 %v165, 7
    %v167 = vsub.s32 0, %v166
    %v168 = vrot.slane %v163, %v167
    %v170 = vmul.f32 %v161, %v168
    %v171 = vmul.f32 %v162, %v168
    %v172 = vld [vmem:[%s11] sm:$0x1]
    %v174 = vlaneseq
    %v175 = vshrl.u32 %v174, 7
    %v176 = vsub.s32 0, %v175
    %v177 = vrot.slane %v172, %v176
    %v179 = vadd.f32 %v170, %v177
    %v180 = vadd.f32 %v171, %v177
    %v181 = vld [vmem:[%s13] sm:$0xff]
    %v182 = vld [vmem:[%s13 + $0x8] sm:$0xff]
    %v183 = vld [vmem:[%s13 + $0x10] sm:$0xff]
    %v184 = vld [vmem:[%s13 + $0x18] sm:$0xff]
    %v185 = vld [vmem:[%s13 + $0x20] sm:$0xff]
    %v186 = vld [vmem:[%s13 + $0x28] sm:$0xff]
    %v187 = vld [vmem:[%s13 + $0x30] sm:$0xff]
    %v188 = vld [vmem:[%s13 + $0x38] sm:$0xff]
    %v189 = vld [vmem:[%s13 + $0x40] sm:$0xff]
    %v190 = vld [vmem:[%s13 + $0x48] sm:$0xff]
    %v191 = vld [vmem:[%s13 + $0x50] sm:$0xff]
    %v192 = vld [vmem:[%s13 + $0x58] sm:$0xff]
    %v193 = vld [vmem:[%s13 + $0x60] sm:$0xff]
    %v194 = vld [vmem:[%s13 + $0x68] sm:$0xff]
    %v195 = vld [vmem:[%s13 + $0x70] sm:$0xff]
    %v196 = vld [vmem:[%s13 + $0x78] sm:$0xff]
    %v197 = vld [vmem:[%s15] sm:$0x1]
    %v199 = vlaneseq
    %v200 = vshrl.u32 %v199, 7
    %v201 = vsub.s32 0, %v200
    %v202 = vrot.slane %v197, %v201
    %204 = vmatprep.subr.mxu0 0.0
    %205 = vmatpush1.msra.mxu0 %v181
    %206 = vmatprep.subr.mxu0 0.0
    %207 = vmatpush1.msra.mxu0 %v182
    %208 = vmatprep.subr.mxu0 0.0
    %209 = vmatpush1.msra.mxu0 %v183
    %210 = vmatprep.subr.mxu0 0.0
    %211 = vmatpush1.msra.mxu0 %v184
    %212 = vmatprep.subr.mxu0 0.0
    %213 = vmatpush1.msra.mxu0 %v185
    %214 = vmatprep.subr.mxu0 0.0
    %215 = vmatpush1.msra.mxu0 %v186
    %216 = vmatprep.subr.mxu0 0.0
    %217 = vmatpush1.msra.mxu0 %v187
    %218 = vmatprep.subr.mxu0 0.0
    %219 = vmatpush1.msra.mxu0 %v188
    %220 = vmatprep.subr.mxu0 0.0
    %221 = vmatpush1.msra.mxu0 %v189
    %222 = vmatprep.subr.mxu0 0.0
    %223 = vmatpush1.msra.mxu0 %v190
    %224 = vmatprep.subr.mxu0 0.0
    %225 = vmatpush1.msra.mxu0 %v191
    %226 = vmatprep.subr.mxu0 0.0
    %227 = vmatpush1.msra.mxu0 %v192
    %228 = vmatprep.subr.mxu0 0.0
    %229 = vmatpush1.msra.mxu0 %v193
    %230 = vmatprep.subr.mxu0 0.0
    %231 = vmatpush1.msra.mxu0 %v194
    %232 = vmatprep.subr.mxu0 0.0
    %233 = vmatpush1.msra.mxu0 %v195
    %234 = vmatprep.subr.mxu0 0.0
    %235 = vmatpush1.msra.mxu0 %v196
    %236 = vmatprep.subr.mxu0 0.0
    %237 = vmatpush1.msra.mxu0 0.0
    %238 = vmatprep.subr.mxu0 0.0
    %239 = vmatpush1.msra.mxu0 0.0
    %240 = vmatprep.subr.mxu0 0.0
    %241 = vmatpush1.msra.mxu0 0.0
    %242 = vmatprep.subr.mxu0 0.0
    %243 = vmatpush1.msra.mxu0 0.0
    %244 = vmatprep.subr.mxu0 0.0
    %245 = vmatpush1.msra.mxu0 0.0
    %246 = vmatprep.subr.mxu0 0.0
    %247 = vmatpush1.msra.mxu0 0.0
    %248 = vmatprep.subr.mxu0 0.0
    %249 = vmatpush1.msra.mxu0 0.0
    %250 = vmatprep.subr.mxu0 0.0
    %251 = vmatpush1.msra.mxu0 0.0
    %252 = vmatprep.subr.mxu0 0.0
    %253 = vmatpush1.msra.mxu0 0.0
    %254 = vmatprep.subr.mxu0 0.0
    %255 = vmatpush1.msra.mxu0 0.0
    %256 = vmatprep.subr.mxu0 0.0
    %257 = vmatpush1.msra.mxu0 0.0
    %258 = vmatprep.subr.mxu0 0.0
    %259 = vmatpush1.msra.mxu0 0.0
    %260 = vmatprep.subr.mxu0 0.0
    %261 = vmatpush1.msra.mxu0 0.0
    %262 = vmatprep.subr.mxu0 0.0
    %263 = vmatpush1.msra.mxu0 0.0
    %264 = vmatprep.subr.mxu0 0.0
    %265 = vmatpush1.msra.mxu0 0.0
    %266 = vmatprep.subr.mxu0 0.0
    %267 = vmatpush1.msra.mxu0 0.0
    %268 = vmatprep.mubr.f32.mxu0 0.0
    %269 = vmatmul.mubr.f32.gmra.mrb[0].mxu0 %v179
    %v270 = vpop.f32.mrb[0].mxu0
    %v271 = vadd.f32 %v202, %v270
    %v272 = vpop.f32.mrb[0].mxu0
    %273 = vmatprep.mubr.f32.mxu0 0.0
    %274 = vmatmul.mubr.f32.gmra.mrb[0].mxu0 %v180
    %v275 = vpop.f32.mrb[0].mxu0
    %v276 = vadd.f32 %v202, %v275
    %v277 = vpop.f32.mrb[0].mxu0
    %278 = vdwg.mxu0
    %v279 = vmul.f32 %v271, 0.5
    %v280 = vmul.f32 %v276, 0.5
    %v281 = vmul.f32 %v271, 0.044715
    %v282 = vmul.f32 %v276, 0.044715
    %v283 = vmul.f32 %v281, %v271
    %v284 = vmul.f32 %v282, %v276
    %v285 = vmul.f32 %v283, %v271
    %v286 = vmul.f32 %v284, %v276
    %v287 = vadd.f32 %v271, %v285
    %v288 = vadd.f32 %v276, %v286
    %v289 = vmul.f32 %v287, 0.7978846
    %v290 = vmul.f32 %v288, 0.7978846
    %v291 = vtanh.pop %v289
    %v292 = vtanh.pop %v290
    %v293 = vadd.f32 %v291, 1.0
    %v294 = vadd.f32 %v292, 1.0
    %v295 = vmul.f32 %v279, %v293
    %v296 = vmul.f32 %v280, %v294
    %v297 = vld [vmem:[%s17] sm:$0xff]
    %v298 = vld [vmem:[%s17 + $0x8] sm:$0xff]
    %v299 = vld [vmem:[%s17 + $0x10] sm:$0xff]
    %v300 = vld [vmem:[%s17 + $0x18] sm:$0xff]
    %v301 = vld [vmem:[%s17 + $0x20] sm:$0xff]
    %v302 = vld [vmem:[%s17 + $0x28] sm:$0xff]
    %v303 = vld [vmem:[%s17 + $0x30] sm:$0xff]
    %v304 = vld [vmem:[%s17 + $0x38] sm:$0xff]
    %v305 = vld [vmem:[%s17 + $0x40] sm:$0xff]
    %v306 = vld [vmem:[%s17 + $0x48] sm:$0xff]
    %v307 = vld [vmem:[%s17 + $0x50] sm:$0xff]
    %v308 = vld [vmem:[%s17 + $0x58] sm:$0xff]
    %v309 = vld [vmem:[%s17 + $0x60] sm:$0xff]
    %v310 = vld [vmem:[%s17 + $0x68] sm:$0xff]
    %v311 = vld [vmem:[%s17 + $0x70] sm:$0xff]
    %v312 = vld [vmem:[%s17 + $0x78] sm:$0xff]
    %v313 = vld [vmem:[%s19] sm:$0x1]
    %v315 = vlaneseq
    %v316 = vshrl.u32 %v315, 7
    %v317 = vsub.s32 0, %v316
    %v318 = vrot.slane %v313, %v317
    %320 = vmatprep.subr.mxu0 0.0
    %321 = vmatpush1.msra.mxu0 %v297
    %322 = vmatprep.subr.mxu0 0.0
    %323 = vmatpush1.msra.mxu0 %v298
    %324 = vmatprep.subr.mxu0 0.0
    %325 = vmatpush1.msra.mxu0 %v299
    %326 = vmatprep.subr.mxu0 0.0
    %327 = vmatpush1.msra.mxu0 %v300
    %328 = vmatprep.subr.mxu0 0.0
    %329 = vmatpush1.msra.mxu0 %v301
    %330 = vmatprep.subr.mxu0 0.0
    %331 = vmatpush1.msra.mxu0 %v302
    %332 = vmatprep.subr.mxu0 0.0
    %333 = vmatpush1.msra.mxu0 %v303
    %334 = vmatprep.subr.mxu0 0.0
    %335 = vmatpush1.msra.mxu0 %v304
    %336 = vmatprep.subr.mxu0 0.0
    %337 = vmatpush1.msra.mxu0 %v305
    %338 = vmatprep.subr.mxu0 0.0
    %339 = vmatpush1.msra.mxu0 %v306
    %340 = vmatprep.subr.mxu0 0.0
    %341 = vmatpush1.msra.mxu0 %v307
    %342 = vmatprep.subr.mxu0 0.0
    %343 = vmatpush1.msra.mxu0 %v308
    %344 = vmatprep.subr.mxu0 0.0
    %345 = vmatpush1.msra.mxu0 %v309
    %346 = vmatprep.subr.mxu0 0.0
    %347 = vmatpush1.msra.mxu0 %v310
    %348 = vmatprep.subr.mxu0 0.0
    %349 = vmatpush1.msra.mxu0 %v311
    %350 = vmatprep.subr.mxu0 0.0
    %351 = vmatpush1.msra.mxu0 %v312
    %352 = vmatprep.subr.mxu0 0.0
    %353 = vmatpush1.msra.mxu0 0.0
    %354 = vmatprep.subr.mxu0 0.0
    %355 = vmatpush1.msra.mxu0 0.0
    %356 = vmatprep.subr.mxu0 0.0
    %357 = vmatpush1.msra.mxu0 0.0
    %358 = vmatprep.subr.mxu0 0.0
    %359 = vmatpush1.msra.mxu0 0.0
    %360 = vmatprep.subr.mxu0 0.0
    %361 = vmatpush1.msra.mxu0 0.0
    %362 = vmatprep.subr.mxu0 0.0
    %363 = vmatpush1.msra.mxu0 0.0
    %364 = vmatprep.subr.mxu0 0.0
    %365 = vmatpush1.msra.mxu0 0.0
    %366 = vmatprep.subr.mxu0 0.0
    %367 = vmatpush1.msra.mxu0 0.0
    %368 = vmatprep.subr.mxu0 0.0
    %369 = vmatpush1.msra.mxu0 0.0
    %370 = vmatprep.subr.mxu0 0.0
    %371 = vmatpush1.msra.mxu0 0.0
    %372 = vmatprep.subr.mxu0 0.0
    %373 = vmatpush1.msra.mxu0 0.0
    %374 = vmatprep.subr.mxu0 0.0
    %375 = vmatpush1.msra.mxu0 0.0
    %376 = vmatprep.subr.mxu0 0.0
    %377 = vmatpush1.msra.mxu0 0.0
    %378 = vmatprep.subr.mxu0 0.0
    %379 = vmatpush1.msra.mxu0 0.0
    %380 = vmatprep.subr.mxu0 0.0
    %381 = vmatpush1.msra.mxu0 0.0
    %382 = vmatprep.subr.mxu0 0.0
    %383 = vmatpush1.msra.mxu0 0.0
    %384 = vmatprep.mubr.f32.mxu0 0.0
    %385 = vmatmul.mubr.f32.gmra.mrb[0].mxu0 %v295
    %v386 = vpop.f32.mrb[0].mxu0
    %v387 = vadd.f32 %v318, %v386
    %v388 = vpop.f32.mrb[0].mxu0
    %389 = vmatprep.mubr.f32.mxu0 0.0
    %390 = vmatmul.mubr.f32.gmra.mrb[0].mxu0 %v296
    %v391 = vpop.f32.mrb[0].mxu0
    %v392 = vadd.f32 %v318, %v391
    %v393 = vpop.f32.mrb[0].mxu0
    %394 = vdwg.mxu0
    %v395 = vmul.f32 %v387, 0.5
    %v396 = vmul.f32 %v392, 0.5
    %v397 = vmul.f32 %v387, 0.044715
    %v398 = vmul.f32 %v392, 0.044715
    %v399 = vmul.f32 %v397, %v387
    %v400 = vmul.f32 %v398, %v392
    %v401 = vmul.f32 %v399, %v387
    %v402 = vmul.f32 %v400, %v392
    %v403 = vadd.f32 %v387, %v401
    %v404 = vadd.f32 %v392, %v402
    %v405 = vmul.f32 %v403, 0.7978846
    %v406 = vmul.f32 %v404, 0.7978846
    %v407 = vtanh.pop %v405
    %v408 = vtanh.pop %v406
    %v409 = vadd.f32 %v407, 1.0
    %v410 = vadd.f32 %v408, 1.0
    %v411 = vmul.f32 %v395, %v409
    %v412 = vmul.f32 %v396, %v410
    %s413 = sld [smem:[#allocation2]]
    %v414 = vld [vmem:[%s21] sm:$0x1]
    %v415 = vld [vmem:[%s23] sm:$0x1]
    %v416 = vstv %s413
    %v417 = vmul.f32 %v416, %v411
    %v418 = vmul.f32 %v416, %v412
    %v419 = vtanh.pop %v417
    %v420 = vtanh.pop %v418
    %v422 = vlaneseq
    %v423 = vshrl.u32 %v422, 7
    %v424 = vsub.s32 0, %v423
    %v425 = vrot.slane %v414, %v424
    %v427 = vmul.f32 %v419, %v425
    %v428 = vmul.f32 %v420, %v425
    %v430 = vlaneseq
    %v431 = vshrl.u32 %v430, 7
    %v432 = vsub.s32 0, %v431
    %v433 = vrot.slane %v415, %v432
    %v435 = vadd.f32 %v427, %v433
    %v436 = vadd.f32 %v428, %v433
    %v437 = vld [vmem:[%s5] sm:$0xff]
    %v438 = vld [vmem:[%s5 + $0x8] sm:$0xff]
    %v439 = vmul.f32 %v437, %v437
    %v440 = vmul.f32 %v438, %v438
    %441 = vadd.xlane.f32.xlu0 %v439
    %v442 = vpop.xlane.xlu0 %441
    %443 = vadd.xlane.f32.xlu0 %v440
    %v444 = vpop.xlane.xlu0 %443
    %445 = vxpose.xlu0.b32.start [1/16] %v442, 128
    %446 = vxpose.xlu0.b32.cont [2/16] %v444, 128
    %447 = vxpose.xlu0.b32.cont [3/16] 0.0, 128
    %448 = vxpose.xlu0.b32.cont [4/16] 0.0, 128
    %449 = vxpose.xlu0.b32.cont [5/16] 0.0, 128
    %450 = vxpose.xlu0.b32.cont [6/16] 0.0, 128
    %451 = vxpose.xlu0.b32.cont [7/16] 0.0, 128
    %452 = vxpose.xlu0.b32.cont [8/16] 0.0, 128
    %453 = vxpose.xlu0.b32.cont [9/16] 0.0, 128
    %454 = vxpose.xlu0.b32.cont [10/16] 0.0, 128
    %455 = vxpose.xlu0.b32.cont [11/16] 0.0, 128
    %456 = vxpose.xlu0.b32.cont [12/16] 0.0, 128
    %457 = vxpose.xlu0.b32.cont [13/16] 0.0, 128
    %458 = vxpose.xlu0.b32.cont [14/16] 0.0, 128
    %459 = vxpose.xlu0.b32.cont [15/16] 0.0, 128
    %460 = vxpose.xlu0.b32.end [16/16] 0.0, 128
    %v461 = vpop.trf.xlu0
    %v462 = vpop.trf.xlu0
    %v463 = vpop.trf.xlu0
    %v464 = vpop.trf.xlu0
    %v465 = vpop.trf.xlu0
    %v466 = vpop.trf.xlu0
    %v467 = vpop.trf.xlu0
    %v468 = vpop.trf.xlu0
    %v469 = vpop.trf.xlu0
    %v470 = vpop.trf.xlu0
    %v471 = vpop.trf.xlu0
    %v472 = vpop.trf.xlu0
    %v473 = vpop.trf.xlu0
    %v474 = vpop.trf.xlu0
    %v475 = vpop.trf.xlu0
    %v476 = vpop.trf.xlu0
    %v477 = vlaneseq
    %v478 = vshrl.u32 %v477, 7
    %v479 = vsub.s32 0, %v478
    %v480 = vrot.slane %v461, %v479
    %v481 = vadd.f32 %v442, %v480
    %v482 = vadd.f32 %v444, %v480
    %483 = vmatprep.subr.mxu0 0.0
    %484 = vmatpush1.xpose.msra.mxu0 %v437
    %485 = vmatprep.subr.mxu0 0.0
    %486 = vmatpush1.xpose.msra.mxu0 %v438
    %487 = vmatprep.subr.mxu0 0.0
    %488 = vmatpush1.xpose.msra.mxu0 0.0
    %489 = vmatprep.subr.mxu0 0.0
    %490 = vmatpush1.xpose.msra.mxu0 0.0
    %491 = vmatprep.subr.mxu0 0.0
    %492 = vmatpush1.xpose.msra.mxu0 0.0
    %493 = vmatprep.subr.mxu0 0.0
    %494 = vmatpush1.xpose.msra.mxu0 0.0
    %495 = vmatprep.subr.mxu0 0.0
    %496 = vmatpush1.xpose.msra.mxu0 0.0
    %497 = vmatprep.subr.mxu0 0.0
    %498 = vmatpush1.xpose.msra.mxu0 0.0
    %499 = vmatprep.subr.mxu0 0.0
    %500 = vmatpush1.xpose.msra.mxu0 0.0
    %501 = vmatprep.subr.mxu0 0.0
    %502 = vmatpush1.xpose.msra.mxu0 0.0
    %503 = vmatprep.subr.mxu0 0.0
    %504 = vmatpush1.xpose.msra.mxu0 0.0
    %505 = vmatprep.subr.mxu0 0.0
    %506 = vmatpush1.xpose.msra.mxu0 0.0
    %507 = vmatprep.subr.mxu0 0.0
    %508 = vmatpush1.xpose.msra.mxu0 0.0
    %509 = vmatprep.subr.mxu0 0.0
    %510 = vmatpush1.xpose.msra.mxu0 0.0
    %511 = vmatprep.subr.mxu0 0.0
    %512 = vmatpush1.xpose.msra.mxu0 0.0
    %513 = vmatprep.subr.mxu0 0.0
    %514 = vmatpush1.xpose.msra.mxu0 0.0
    %515 = vmatprep.subr.mxu0 0.0
    %516 = vmatpush1.xpose.msra.mxu0 0.0
    %517 = vmatprep.subr.mxu0 0.0
    %518 = vmatpush1.xpose.msra.mxu0 0.0
    %519 = vmatprep.subr.mxu0 0.0
    %520 = vmatpush1.xpose.msra.mxu0 0.0
    %521 = vmatprep.subr.mxu0 0.0
    %522 = vmatpush1.xpose.msra.mxu0 0.0
    %523 = vmatprep.subr.mxu0 0.0
    %524 = vmatpush1.xpose.msra.mxu0 0.0
    %525 = vmatprep.subr.mxu0 0.0
    %526 = vmatpush1.xpose.msra.mxu0 0.0
    %527 = vmatprep.subr.mxu0 0.0
    %528 = vmatpush1.xpose.msra.mxu0 0.0
    %529 = vmatprep.subr.mxu0 0.0
    %530 = vmatpush1.xpose.msra.mxu0 0.0
    %531 = vmatprep.subr.mxu0 0.0
    %532 = vmatpush1.xpose.msra.mxu0 0.0
    %533 = vmatprep.subr.mxu0 0.0
    %534 = vmatpush1.xpose.msra.mxu0 0.0
    %535 = vmatprep.subr.mxu0 0.0
    %536 = vmatpush1.xpose.msra.mxu0 0.0
    %537 = vmatprep.subr.mxu0 0.0
    %538 = vmatpush1.xpose.msra.mxu0 0.0
    %539 = vmatprep.subr.mxu0 0.0
    %540 = vmatpush1.xpose.msra.mxu0 0.0
    %541 = vmatprep.subr.mxu0 0.0
    %542 = vmatpush1.xpose.msra.mxu0 0.0
    %543 = vmatprep.subr.mxu0 0.0
    %544 = vmatpush1.xpose.msra.mxu0 0.0
    %545 = vmatprep.subr.mxu0 0.0
    %546 = vmatpush1.xpose.msra.mxu0 0.0
    %547 = vmatprep.mubr.f32.mxu0 0.0
    %548 = vmatmul.mubr.f32.gmra.mrb[0].mxu0 %v437
    %v549 = vpop.f32.mrb[0].mxu0
    %v550 = vadd.f32 0.0, %v549
    %v551 = vpop.f32.mrb[0].mxu0
    %552 = vmatprep.mubr.f32.mxu0 0.0
    %553 = vmatmul.mubr.f32.gmra.mrb[0].mxu0 %v438
    %v554 = vpop.f32.mrb[0].mxu0
    %v555 = vadd.f32 0.0, %v554
    %v556 = vpop.f32.mrb[0].mxu0
    %557 = vdwg.mxu0
    %v558 = vmul.f32 %v550, 2.0
    %v559 = vmul.f32 %v555, 2.0
    %v560 = vsub.f32 %v481, %v558
    %v561 = vsub.f32 %v482, %v559
    %v562 = vlaneseq
    %v563 = vshrl.u32 %v562, 7
    %v564 = vadd.s32 %v563, 8
    %v565 = vlaneseq
    %v566 = vand.u32 %v565, 127
    %v567 = vsub.s32 %v563, %v566
    %v568 = vsub.s32 %v564, %v566
    %vm569 = vcmp.eq.s32.totalorder %v567, 0
    %vm570 = vcmp.eq.s32.totalorder %v568, 0
    %vm571 = vcmp.eq.s32.totalorder %v567, 1
    %vm572 = vcmp.eq.s32.totalorder %v568, 1
    %vm573 = vcmp.eq.s32.totalorder %v567, 4294967295
    %vm574 = vcmp.eq.s32.totalorder %v568, 4294967295
    %vm575 = vmor %vm571, %vm573
    %vm576 = vmor %vm572, %vm574
    %vm577 = vcmp.le.f32.partialorder %v560, 100.0
    %vm578 = vcmp.le.f32.partialorder %v561, 100.0
    %vm579 = vmand %vm575, %vm577
    %vm580 = vmand %vm576, %vm578
    %vm581 = vmor %vm569, %vm579
    %vm582 = vmor %vm570, %vm580
    %v583 = vld [vmem:[%s25] sm:$0xff]
    %v584 = vld [vmem:[%s25 + $0x8] sm:$0xff]
    %v585 = vld [vmem:[%s25 + $0x10] sm:$0xff]
    %v586 = vld [vmem:[%s25 + $0x18] sm:$0xff]
    %v587 = vld [vmem:[%s25 + $0x20] sm:$0xff]
    %v588 = vld [vmem:[%s25 + $0x28] sm:$0xff]
    %v589 = vld [vmem:[%s25 + $0x30] sm:$0xff]
    %v590 = vld [vmem:[%s25 + $0x38] sm:$0xff]
    %v591 = vld [vmem:[%s25 + $0x40] sm:$0xff]
    %v592 = vld [vmem:[%s25 + $0x48] sm:$0xff]
    %v593 = vld [vmem:[%s25 + $0x50] sm:$0xff]
    %v594 = vld [vmem:[%s25 + $0x58] sm:$0xff]
    %v595 = vld [vmem:[%s25 + $0x60] sm:$0xff]
    %v596 = vld [vmem:[%s25 + $0x68] sm:$0xff]
    %v597 = vld [vmem:[%s25 + $0x70] sm:$0xff]
    %v598 = vld [vmem:[%s25 + $0x78] sm:$0xff]
    %v599 = vld [vmem:[%s25 + $0x80] sm:$0xff]
    %v600 = vld [vmem:[%s25 + $0x88] sm:$0xff]
    %v601 = vld [vmem:[%s25 + $0x90] sm:$0xff]
    %v602 = vld [vmem:[%s25 + $0x98] sm:$0xff]
    %v603 = vld [vmem:[%s25 + $0xa0] sm:$0xff]
    %v604 = vld [vmem:[%s25 + $0xa8] sm:$0xff]
    %v605 = vld [vmem:[%s25 + $0xb0] sm:$0xff]
    %v606 = vld [vmem:[%s25 + $0xb8] sm:$0xff]
    %v607 = vld [vmem:[%s25 + $0xc0] sm:$0xff]
    %v608 = vld [vmem:[%s25 + $0xc8] sm:$0xff]
    %v609 = vld [vmem:[%s25 + $0xd0] sm:$0xff]
    %v610 = vld [vmem:[%s25 + $0xd8] sm:$0xff]
    %v611 = vld [vmem:[%s25 + $0xe0] sm:$0xff]
    %v612 = vld [vmem:[%s25 + $0xe8] sm:$0xff]
    %v613 = vld [vmem:[%s25 + $0xf0] sm:$0xff]
    %v614 = vld [vmem:[%s25 + $0xf8] sm:$0xff]
    %v615 = vld [vmem:[%s25 + $0x100] sm:$0xff]
    %v616 = vld [vmem:[%s25 + $0x108] sm:$0xff]
    %v617 = vld [vmem:[%s25 + $0x110] sm:$0xff]
    %v618 = vld [vmem:[%s25 + $0x118] sm:$0xff]
    %v619 = vld [vmem:[%s25 + $0x120] sm:$0xff]
    %v620 = vld [vmem:[%s25 + $0x128] sm:$0xff]
    %v621 = vld [vmem:[%s25 + $0x130] sm:$0xff]
    %v622 = vld [vmem:[%s25 + $0x138] sm:$0xff]
    %v623 = vld [vmem:[%s25 + $0x140] sm:$0xff]
    %v624 = vld [vmem:[%s25 + $0x148] sm:$0xff]
    %v625 = vld [vmem:[%s25 + $0x150] sm:$0xff]
    %v626 = vld [vmem:[%s25 + $0x158] sm:$0xff]
    %v627 = vld [vmem:[%s25 + $0x160] sm:$0xff]
    %v628 = vld [vmem:[%s25 + $0x168] sm:$0xff]
    %v629 = vld [vmem:[%s25 + $0x170] sm:$0xff]
    %v630 = vld [vmem:[%s25 + $0x178] sm:$0xff]
    %631 = vmatprep.subr.mxu0 0.0
    %632 = vmatpush1.msra.mxu0 %v583
    %633 = vmatprep.subr.mxu0 0.0
    %634 = vmatpush1.msra.mxu0 %v584
    %635 = vmatprep.subr.mxu0 0.0
    %636 = vmatpush1.msra.mxu0 %v585
    %637 = vmatprep.subr.mxu0 0.0
    %638 = vmatpush1.msra.mxu0 %v586
    %639 = vmatprep.subr.mxu0 0.0
    %640 = vmatpush1.msra.mxu0 %v587
    %641 = vmatprep.subr.mxu0 0.0
    %642 = vmatpush1.msra.mxu0 %v588
    %643 = vmatprep.subr.mxu0 0.0
    %644 = vmatpush1.msra.mxu0 %v589
    %645 = vmatprep.subr.mxu0 0.0
    %646 = vmatpush1.msra.mxu0 %v590
    %647 = vmatprep.subr.mxu0 0.0
    %648 = vmatpush1.msra.mxu0 %v591
    %649 = vmatprep.subr.mxu0 0.0
    %650 = vmatpush1.msra.mxu0 %v592
    %651 = vmatprep.subr.mxu0 0.0
    %652 = vmatpush1.msra.mxu0 %v593
    %653 = vmatprep.subr.mxu0 0.0
    %654 = vmatpush1.msra.mxu0 %v594
    %655 = vmatprep.subr.mxu0 0.0
    %656 = vmatpush1.msra.mxu0 %v595
    %657 = vmatprep.subr.mxu0 0.0
    %658 = vmatpush1.msra.mxu0 %v596
    %659 = vmatprep.subr.mxu0 0.0
    %660 = vmatpush1.msra.mxu0 %v597
    %661 = vmatprep.subr.mxu0 0.0
    %662 = vmatpush1.msra.mxu0 %v598
    %663 = vmatprep.subr.mxu0 0.0
    %664 = vmatpush1.msra.mxu0 0.0
    %665 = vmatprep.subr.mxu0 0.0
    %666 = vmatpush1.msra.mxu0 0.0
    %667 = vmatprep.subr.mxu0 0.0
    %668 = vmatpush1.msra.mxu0 0.0
    %669 = vmatprep.subr.mxu0 0.0
    %670 = vmatpush1.msra.mxu0 0.0
    %671 = vmatprep.subr.mxu0 0.0
    %672 = vmatpush1.msra.mxu0 0.0
    %673 = vmatprep.subr.mxu0 0.0
    %674 = vmatpush1.msra.mxu0 0.0
    %675 = vmatprep.subr.mxu0 0.0
    %676 = vmatpush1.msra.mxu0 0.0
    %677 = vmatprep.subr.mxu0 0.0
    %678 = vmatpush1.msra.mxu0 0.0
    %679 = vmatprep.subr.mxu0 0.0
    %680 = vmatpush1.msra.mxu0 0.0
    %681 = vmatprep.subr.mxu0 0.0
    %682 = vmatpush1.msra.mxu0 0.0
    %683 = vmatprep.subr.mxu0 0.0
    %684 = vmatpush1.msra.mxu0 0.0
    %685 = vmatprep.subr.mxu0 0.0
    %686 = vmatpush1.msra.mxu0 0.0
    %687 = vmatprep.subr.mxu0 0.0
    %688 = vmatpush1.msra.mxu0 0.0
    %689 = vmatprep.subr.mxu0 0.0
    %690 = vmatpush1.msra.mxu0 0.0
    %691 = vmatprep.subr.mxu0 0.0
    %692 = vmatpush1.msra.mxu0 0.0
    %693 = vmatprep.subr.mxu0 0.0
    %694 = vmatpush1.msra.mxu0 0.0
    %695 = vmatprep.mubr.f32.mxu0 0.0
    %696 = vmatmul.mubr.f32.gmra.mrb[0].mxu0 %v435
    %v697 = vpop.f32.mrb[0].mxu0
    %v698 = vadd.f32 0.0, %v697
    %v699 = vpop.f32.mrb[0].mxu0
    %700 = vmatprep.mubr.f32.mxu0 0.0
    %701 = vmatmul.mubr.f32.gmra.mrb[0].mxu0 %v436
    %v702 = vpop.f32.mrb[0].mxu0
    %v703 = vadd.f32 0.0, %v702
    %v704 = vpop.f32.mrb[0].mxu0
    %705 = vdwg.mxu0
    %706 = vmatprep.subr.mxu0 0.0
    %707 = vmatpush1.msra.mxu0 %v599
    %708 = vmatprep.subr.mxu0 0.0
    %709 = vmatpush1.msra.mxu0 %v600
    %710 = vmatprep.subr.mxu0 0.0
    %711 = vmatpush1.msra.mxu0 %v601
    %712 = vmatprep.subr.mxu0 0.0
    %713 = vmatpush1.msra.mxu0 %v602
    %714 = vmatprep.subr.mxu0 0.0
    %715 = vmatpush1.msra.mxu0 %v603
    %716 = vmatprep.subr.mxu0 0.0
    %717 = vmatpush1.msra.mxu0 %v604
    %718 = vmatprep.subr.mxu0 0.0
    %719 = vmatpush1.msra.mxu0 %v605
    %720 = vmatprep.subr.mxu0 0.0
    %721 = vmatpush1.msra.mxu0 %v606
    %722 = vmatprep.subr.mxu0 0.0
    %723 = vmatpush1.msra.mxu0 %v607
    %724 = vmatprep.subr.mxu0 0.0
    %725 = vmatpush1.msra.mxu0 %v608
    %726 = vmatprep.subr.mxu0 0.0
    %727 = vmatpush1.msra.mxu0 %v609
    %728 = vmatprep.subr.mxu0 0.0
    %729 = vmatpush1.msra.mxu0 %v610
    %730 = vmatprep.subr.mxu0 0.0
    %731 = vmatpush1.msra.mxu0 %v611
    %732 = vmatprep.subr.mxu0 0.0
    %733 = vmatpush1.msra.mxu0 %v612
    %734 = vmatprep.subr.mxu0 0.0
    %735 = vmatpush1.msra.mxu0 %v613
    %736 = vmatprep.subr.mxu0 0.0
    %737 = vmatpush1.msra.mxu0 %v614
    %738 = vmatprep.subr.mxu0 0.0
    %739 = vmatpush1.msra.mxu0 0.0
    %740 = vmatprep.subr.mxu0 0.0
    %741 = vmatpush1.msra.mxu0 0.0
    %742 = vmatprep.subr.mxu0 0.0
    %743 = vmatpush1.msra.mxu0 0.0
    %744 = vmatprep.subr.mxu0 0.0
    %745 = vmatpush1.msra.mxu0 0.0
    %746 = vmatprep.subr.mxu0 0.0
    %747 = vmatpush1.msra.mxu0 0.0
    %748 = vmatprep.subr.mxu0 0.0
    %749 = vmatpush1.msra.mxu0 0.0
    %750 = vmatprep.subr.mxu0 0.0
    %751 = vmatpush1.msra.mxu0 0.0
    %752 = vmatprep.subr.mxu0 0.0
    %753 = vmatpush1.msra.mxu0 0.0
    %754 = vmatprep.subr.mxu0 0.0
    %755 = vmatpush1.msra.mxu0 0.0
    %756 = vmatprep.subr.mxu0 0.0
    %757 = vmatpush1.msra.mxu0 0.0
    %758 = vmatprep.subr.mxu0 0.0
    %759 = vmatpush1.msra.mxu0 0.0
    %760 = vmatprep.subr.mxu0 0.0
    %761 = vmatpush1.msra.mxu0 0.0
    %762 = vmatprep.subr.mxu0 0.0
    %763 = vmatpush1.msra.mxu0 0.0
    %764 = vmatprep.subr.mxu0 0.0
    %765 = vmatpush1.msra.mxu0 0.0
    %766 = vmatprep.subr.mxu0 0.0
    %767 = vmatpush1.msra.mxu0 0.0
    %768 = vmatprep.subr.mxu0 0.0
    %769 = vmatpush1.msra.mxu0 0.0
    %770 = vmatprep.mubr.f32.mxu0 0.0
    %771 = vmatmul.mubr.f32.gmra.mrb[0].mxu0 %v435
    %v772 = vpop.f32.mrb[0].mxu0
    %v773 = vadd.f32 0.0, %v772
    %v774 = vpop.f32.mrb[0].mxu0
    %775 = vmatprep.mubr.f32.mxu0 0.0
    %776 = vmatmul.mubr.f32.gmra.mrb[0].mxu0 %v436
    %v777 = vpop.f32.mrb[0].mxu0
    %v778 = vadd.f32 0.0, %v777
    %v779 = vpop.f32.mrb[0].mxu0
    %780 = vdwg.mxu0
    %781 = vmatprep.subr.mxu0 0.0
    %782 = vmatpush1.msra.mxu0 %v615
    %783 = vmatprep.subr.mxu0 0.0
    %784 = vmatpush1.msra.mxu0 %v616
    %785 = vmatprep.subr.mxu0 0.0
    %786 = vmatpush1.msra.mxu0 %v617
    %787 = vmatprep.subr.mxu0 0.0
    %788 = vmatpush1.msra.mxu0 %v618
    %789 = vmatprep.subr.mxu0 0.0
    %790 = vmatpush1.msra.mxu0 %v619
    %791 = vmatprep.subr.mxu0 0.0
    %792 = vmatpush1.msra.mxu0 %v620
    %793 = vmatprep.subr.mxu0 0.0
    %794 = vmatpush1.msra.mxu0 %v621
    %795 = vmatprep.subr.mxu0 0.0
    %796 = vmatpush1.msra.mxu0 %v622
    %797 = vmatprep.subr.mxu0 0.0
    %798 = vmatpush1.msra.mxu0 %v623
    %799 = vmatprep.subr.mxu0 0.0
    %800 = vmatpush1.msra.mxu0 %v624
    %801 = vmatprep.subr.mxu0 0.0
    %802 = vmatpush1.msra.mxu0 %v625
    %803 = vmatprep.subr.mxu0 0.0
    %804 = vmatpush1.msra.mxu0 %v626
    %805 = vmatprep.subr.mxu0 0.0
    %806 = vmatpush1.msra.mxu0 %v627
    %807 = vmatprep.subr.mxu0 0.0
    %808 = vmatpush1.msra.mxu0 %v628
    %809 = vmatprep.subr.mxu0 0.0
    %810 = vmatpush1.msra.mxu0 %v629
    %811 = vmatprep.subr.mxu0 0.0
    %812 = vmatpush1.msra.mxu0 %v630
    %813 = vmatprep.subr.mxu0 0.0
    %814 = vmatpush1.msra.mxu0 0.0
    %815 = vmatprep.subr.mxu0 0.0
    %816 = vmatpush1.msra.mxu0 0.0
    %817 = vmatprep.subr.mxu0 0.0
    %818 = vmatpush1.msra.mxu0 0.0
    %819 = vmatprep.subr.mxu0 0.0
    %820 = vmatpush1.msra.mxu0 0.0
    %821 = vmatprep.subr.mxu0 0.0
    %822 = vmatpush1.msra.mxu0 0.0
    %823 = vmatprep.subr.mxu0 0.0
    %824 = vmatpush1.msra.mxu0 0.0
    %825 = vmatprep.subr.mxu0 0.0
    %826 = vmatpush1.msra.mxu0 0.0
    %827 = vmatprep.subr.mxu0 0.0
    %828 = vmatpush1.msra.mxu0 0.0
    %829 = vmatprep.subr.mxu0 0.0
    %830 = vmatpush1.msra.mxu0 0.0
    %831 = vmatprep.subr.mxu0 0.0
    %832 = vmatpush1.msra.mxu0 0.0
    %833 = vmatprep.subr.mxu0 0.0
    %834 = vmatpush1.msra.mxu0 0.0
    %835 = vmatprep.subr.mxu0 0.0
    %836 = vmatpush1.msra.mxu0 0.0
    %837 = vmatprep.subr.mxu0 0.0
    %838 = vmatpush1.msra.mxu0 0.0
    %839 = vmatprep.subr.mxu0 0.0
    %840 = vmatpush1.msra.mxu0 0.0
    %841 = vmatprep.subr.mxu0 0.0
    %842 = vmatpush1.msra.mxu0 0.0
    %843 = vmatprep.subr.mxu0 0.0
    %844 = vmatpush1.msra.mxu0 0.0
    %845 = vmatprep.mubr.f32.mxu0 0.0
    %846 = vmatmul.mubr.f32.gmra.mrb[0].mxu0 %v435
    %v847 = vpop.f32.mrb[0].mxu0
    %v848 = vadd.f32 0.0, %v847
    %v849 = vpop.f32.mrb[0].mxu0
    %850 = vmatprep.mubr.f32.mxu0 0.0
    %851 = vmatmul.mubr.f32.gmra.mrb[0].mxu0 %v436
    %v852 = vpop.f32.mrb[0].mxu0
    %v853 = vadd.f32 0.0, %v852
    %v854 = vpop.f32.mrb[0].mxu0
    %855 = vdwg.mxu0
    %v856 = vld [vmem:[%s27] sm:$0xff]
    %v857 = vld [vmem:[%s27 + $0x8] sm:$0xff]
    %v858 = vld [vmem:[%s27 + $0x10] sm:$0xff]
    %v859 = vld [vmem:[%s27 + $0x18] sm:$0xff]
    %v860 = vld [vmem:[%s27 + $0x20] sm:$0xff]
    %v861 = vld [vmem:[%s27 + $0x28] sm:$0xff]
    %v862 = vld [vmem:[%s27 + $0x30] sm:$0xff]
    %v863 = vld [vmem:[%s27 + $0x38] sm:$0xff]
    %v864 = vld [vmem:[%s27 + $0x40] sm:$0xff]
    %v865 = vld [vmem:[%s27 + $0x48] sm:$0xff]
    %v866 = vld [vmem:[%s27 + $0x50] sm:$0xff]
    %v867 = vld [vmem:[%s27 + $0x58] sm:$0xff]
    %v868 = vld [vmem:[%s27 + $0x60] sm:$0xff]
    %v869 = vld [vmem:[%s27 + $0x68] sm:$0xff]
    %v870 = vld [vmem:[%s27 + $0x70] sm:$0xff]
    %v871 = vld [vmem:[%s27 + $0x78] sm:$0xff]
    %v872 = vld [vmem:[%s27 + $0x80] sm:$0xff]
    %v873 = vld [vmem:[%s27 + $0x88] sm:$0xff]
    %v874 = vld [vmem:[%s27 + $0x90] sm:$0xff]
    %v875 = vld [vmem:[%s27 + $0x98] sm:$0xff]
    %v876 = vld [vmem:[%s27 + $0xa0] sm:$0xff]
    %v877 = vld [vmem:[%s27 + $0xa8] sm:$0xff]
    %v878 = vld [vmem:[%s27 + $0xb0] sm:$0xff]
    %v879 = vld [vmem:[%s27 + $0xb8] sm:$0xff]
    %v880 = vld [vmem:[%s27 + $0xc0] sm:$0xff]
    %v881 = vld [vmem:[%s27 + $0xc8] sm:$0xff]
    %v882 = vld [vmem:[%s27 + $0xd0] sm:$0xff]
    %v883 = vld [vmem:[%s27 + $0xd8] sm:$0xff]
    %v884 = vld [vmem:[%s27 + $0xe0] sm:$0xff]
    %v885 = vld [vmem:[%s27 + $0xe8] sm:$0xff]
    %v886 = vld [vmem:[%s27 + $0xf0] sm:$0xff]
    %v887 = vld [vmem:[%s27 + $0xf8] sm:$0xff]
    %v888 = vld [vmem:[%s27 + $0x100] sm:$0xff]
    %v889 = vld [vmem:[%s27 + $0x108] sm:$0xff]
    %v890 = vld [vmem:[%s27 + $0x110] sm:$0xff]
    %v891 = vld [vmem:[%s27 + $0x118] sm:$0xff]
    %v892 = vld [vmem:[%s27 + $0x120] sm:$0xff]
    %v893 = vld [vmem:[%s27 + $0x128] sm:$0xff]
    %v894 = vld [vmem:[%s27 + $0x130] sm:$0xff]
    %v895 = vld [vmem:[%s27 + $0x138] sm:$0xff]
    %v896 = vld [vmem:[%s27 + $0x140] sm:$0xff]
    %v897 = vld [vmem:[%s27 + $0x148] sm:$0xff]
    %v898 = vld [vmem:[%s27 + $0x150] sm:$0xff]
    %v899 = vld [vmem:[%s27 + $0x158] sm:$0xff]
    %v900 = vld [vmem:[%s27 + $0x160] sm:$0xff]
    %v901 = vld [vmem:[%s27 + $0x168] sm:$0xff]
    %v902 = vld [vmem:[%s27 + $0x170] sm:$0xff]
    %v903 = vld [vmem:[%s27 + $0x178] sm:$0xff]
    %904 = vmatprep.subr.mxu0 0.0
    %905 = vmatpush1.msra.mxu0 %v856
    %906 = vmatprep.subr.mxu0 0.0
    %907 = vmatpush1.msra.mxu0 %v857
    %908 = vmatprep.subr.mxu0 0.0
    %909 = vmatpush1.msra.mxu0 %v858
    %910 = vmatprep.subr.mxu0 0.0
    %911 = vmatpush1.msra.mxu0 %v859
    %912 = vmatprep.subr.mxu0 0.0
    %913 = vmatpush1.msra.mxu0 %v860
    %914 = vmatprep.subr.mxu0 0.0
    %915 = vmatpush1.msra.mxu0 %v861
    %916 = vmatprep.subr.mxu0 0.0
    %917 = vmatpush1.msra.mxu0 %v862
    %918 = vmatprep.subr.mxu0 0.0
    %919 = vmatpush1.msra.mxu0 %v863
    %920 = vmatprep.subr.mxu0 0.0
    %921 = vmatpush1.msra.mxu0 %v864
    %922 = vmatprep.subr.mxu0 0.0
    %923 = vmatpush1.msra.mxu0 %v865
    %924 = vmatprep.subr.mxu0 0.0
    %925 = vmatpush1.msra.mxu0 %v866
    %926 = vmatprep.subr.mxu0 0.0
    %927 = vmatpush1.msra.mxu0 %v867
    %928 = vmatprep.subr.mxu0 0.0
    %929 = vmatpush1.msra.mxu0 %v868
    %930 = vmatprep.subr.mxu0 0.0
    %931 = vmatpush1.msra.mxu0 %v869
    %932 = vmatprep.subr.mxu0 0.0
    %933 = vmatpush1.msra.mxu0 %v870
    %934 = vmatprep.subr.mxu0 0.0
    %935 = vmatpush1.msra.mxu0 %v871
    %936 = vmatprep.subr.mxu0 0.0
    %937 = vmatpush1.msra.mxu0 0.0
    %938 = vmatprep.subr.mxu0 0.0
    %939 = vmatpush1.msra.mxu0 0.0
    %940 = vmatprep.subr.mxu0 0.0
    %941 = vmatpush1.msra.mxu0 0.0
    %942 = vmatprep.subr.mxu0 0.0
    %943 = vmatpush1.msra.mxu0 0.0
    %944 = vmatprep.subr.mxu0 0.0
    %945 = vmatpush1.msra.mxu0 0.0
    %946 = vmatprep.subr.mxu0 0.0
    %947 = vmatpush1.msra.mxu0 0.0
    %948 = vmatprep.subr.mxu0 0.0
    %949 = vmatpush1.msra.mxu0 0.0
    %950 = vmatprep.subr.mxu0 0.0
    %951 = vmatpush1.msra.mxu0 0.0
    %952 = vmatprep.subr.mxu0 0.0
    %953 = vmatpush1.msra.mxu0 0.0
    %954 = vmatprep.subr.mxu0 0.0
    %955 = vmatpush1.msra.mxu0 0.0
    %956 = vmatprep.subr.mxu0 0.0
    %957 = vmatpush1.msra.mxu0 0.0
    %958 = vmatprep.subr.mxu0 0.0
    %959 = vmatpush1.msra.mxu0 0.0
    %960 = vmatprep.subr.mxu0 0.0
    %961 = vmatpush1.msra.mxu0 0.0
    %962 = vmatprep.subr.mxu0 0.0
    %963 = vmatpush1.msra.mxu0 0.0
    %964 = vmatprep.subr.mxu0 0.0
    %965 = vmatpush1.msra.mxu0 0.0
    %966 = vmatprep.subr.mxu0 0.0
    %967 = vmatpush1.msra.mxu0 0.0
    %968 = vmatprep.mubr.f32.mxu0 0.0
    %969 = vmatmul.mubr.f32.gmra.mrb[0].mxu0 %v435
    %v970 = vpop.f32.mrb[0].mxu0
    %v971 = vadd.f32 0.0, %v970
    %v972 = vpop.f32.mrb[0].mxu0
    %973 = vmatprep.mubr.f32.mxu0 0.0
    %974 = vmatmul.mubr.f32.gmra.mrb[0].mxu0 %v436
    %v975 = vpop.f32.mrb[0].mxu0
    %v976 = vadd.f32 0.0, %v975
    %v977 = vpop.f32.mrb[0].mxu0
    %978 = vdwg.mxu0
    %979 = vmatprep.subr.mxu0 0.0
    %980 = vmatpush1.msra.mxu0 %v872
    %981 = vmatprep.subr.mxu0 0.0
    %982 = vmatpush1.msra.mxu0 %v873
    %983 = vmatprep.subr.mxu0 0.0
    %984 = vmatpush1.msra.mxu0 %v874
    %985 = vmatprep.subr.mxu0 0.0
    %986 = vmatpush1.msra.mxu0 %v875
    %987 = vmatprep.subr.mxu0 0.0
    %988 = vmatpush1.msra.mxu0 %v876
    %989 = vmatprep.subr.mxu0 0.0
    %990 = vmatpush1.msra.mxu0 %v877
    %991 = vmatprep.subr.mxu0 0.0
    %992 = vmatpush1.msra.mxu0 %v878
    %993 = vmatprep.subr.mxu0 0.0
    %994 = vmatpush1.msra.mxu0 %v879
    %995 = vmatprep.subr.mxu0 0.0
    %996 = vmatpush1.msra.mxu0 %v880
    %997 = vmatprep.subr.mxu0 0.0
    %998 = vmatpush1.msra.mxu0 %v881
    %999 = vmatprep.subr.mxu0 0.0
    %1000 = vmatpush1.msra.mxu0 %v882
    %1001 = vmatprep.subr.mxu0 0.0
    %1002 = vmatpush1.msra.mxu0 %v883
    %1003 = vmatprep.subr.mxu0 0.0
    %1004 = vmatpush1.msra.mxu0 %v884
    %1005 = vmatprep.subr.mxu0 0.0
    %1006 = vmatpush1.msra.mxu0 %v885
    %1007 = vmatprep.subr.mxu0 0.0
    %1008 = vmatpush1.msra.mxu0 %v886
    %1009 = vmatprep.subr.mxu0 0.0
    %1010 = vmatpush1.msra.mxu0 %v887
    %1011 = vmatprep.subr.mxu0 0.0
    %1012 = vmatpush1.msra.mxu0 0.0
    %1013 = vmatprep.subr.mxu0 0.0
    %1014 = vmatpush1.msra.mxu0 0.0
    %1015 = vmatprep.subr.mxu0 0.0
    %1016 = vmatpush1.msra.mxu0 0.0
    %1017 = vmatprep.subr.mxu0 0.0
    %1018 = vmatpush1.msra.mxu0 0.0
    %1019 = vmatprep.subr.mxu0 0.0
    %1020 = vmatpush1.msra.mxu0 0.0
    %1021 = vmatprep.subr.mxu0 0.0
    %1022 = vmatpush1.msra.mxu0 0.0
    %1023 = vmatprep.subr.mxu0 0.0
    %1024 = vmatpush1.msra.mxu0 0.0
    %1025 = vmatprep.subr.mxu0 0.0
    %1026 = vmatpush1.msra.mxu0 0.0
    %1027 = vmatprep.subr.mxu0 0.0
    %1028 = vmatpush1.msra.mxu0 0.0
    %1029 = vmatprep.subr.mxu0 0.0
    %1030 = vmatpush1.msra.mxu0 0.0
    %1031 = vmatprep.subr.mxu0 0.0
    %1032 = vmatpush1.msra.mxu0 0.0
    %1033 = vmatprep.subr.mxu0 0.0
    %1034 = vmatpush1.msra.mxu0 0.0
    %1035 = vmatprep.subr.mxu0 0.0
    %1036 = vmatpush1.msra.mxu0 0.0
    %1037 = vmatprep.subr.mxu0 0.0
    %1038 = vmatpush1.msra.mxu0 0.0
    %1039 = vmatprep.subr.mxu0 0.0
    %1040 = vmatpush1.msra.mxu0 0.0
    %1041 = vmatprep.subr.mxu0 0.0
    %1042 = vmatpush1.msra.mxu0 0.0
    %1043 = vmatprep.mubr.f32.mxu0 0.0
    %1044 = vmatmul.mubr.f32.gmra.mrb[0].mxu0 %v435
    %v1045 = vpop.f32.mrb[0].mxu0
    %v1046 = vadd.f32 0.0, %v1045
    %v1047 = vpop.f32.mrb[0].mxu0
    %1048 = vmatprep.mubr.f32.mxu0 0.0
    %1049 = vmatmul.mubr.f32.gmra.mrb[0].mxu0 %v436
    %v1050 = vpop.f32.mrb[0].mxu0
    %v1051 = vadd.f32 0.0, %v1050
    %v1052 = vpop.f32.mrb[0].mxu0
    %1053 = vdwg.mxu0
    %1054 = vmatprep.subr.mxu0 0.0
    %1055 = vmatpush1.msra.mxu0 %v888
    %1056 = vmatprep.subr.mxu0 0.0
    %1057 = vmatpush1.msra.mxu0 %v889
    %1058 = vmatprep.subr.mxu0 0.0
    %1059 = vmatpush1.msra.mxu0 %v890
    %1060 = vmatprep.subr.mxu0 0.0
    %1061 = vmatpush1.msra.mxu0 %v891
    %1062 = vmatprep.subr.mxu0 0.0
    %1063 = vmatpush1.msra.mxu0 %v892
    %1064 = vmatprep.subr.mxu0 0.0
    %1065 = vmatpush1.msra.mxu0 %v893
    %1066 = vmatprep.subr.mxu0 0.0
    %1067 = vmatpush1.msra.mxu0 %v894
    %1068 = vmatprep.subr.mxu0 0.0
    %1069 = vmatpush1.msra.mxu0 %v895
    %1070 = vmatprep.subr.mxu0 0.0
    %1071 = vmatpush1.msra.mxu0 %v896
    %1072 = vmatprep.subr.mxu0 0.0
    %1073 = vmatpush1.msra.mxu0 %v897
    %1074 = vmatprep.subr.mxu0 0.0
    %1075 = vmatpush1.msra.mxu0 %v898
    %1076 = vmatprep.subr.mxu0 0.0
    %1077 = vmatpush1.msra.mxu0 %v899
    %1078 = vmatprep.subr.mxu0 0.0
    %1079 = vmatpush1.msra.mxu0 %v900
    %1080 = vmatprep.subr.mxu0 0.0
    %1081 = vmatpush1.msra.mxu0 %v901
    %1082 = vmatprep.subr.mxu0 0.0
    %1083 = vmatpush1.msra.mxu0 %v902
    %1084 = vmatprep.subr.mxu0 0.0
    %1085 = vmatpush1.msra.mxu0 %v903
    %1086 = vmatprep.subr.mxu0 0.0
    %1087 = vmatpush1.msra.mxu0 0.0
    %1088 = vmatprep.subr.mxu0 0.0
    %1089 = vmatpush1.msra.mxu0 0.0
    %1090 = vmatprep.subr.mxu0 0.0
    %1091 = vmatpush1.msra.mxu0 0.0
    %1092 = vmatprep.subr.mxu0 0.0
    %1093 = vmatpush1.msra.mxu0 0.0
    %1094 = vmatprep.subr.mxu0 0.0
    %1095 = vmatpush1.msra.mxu0 0.0
    %1096 = vmatprep.subr.mxu0 0.0
    %1097 = vmatpush1.msra.mxu0 0.0
    %1098 = vmatprep.subr.mxu0 0.0
    %1099 = vmatpush1.msra.mxu0 0.0
    %1100 = vmatprep.subr.mxu0 0.0
    %1101 = vmatpush1.msra.mxu0 0.0
    %1102 = vmatprep.subr.mxu0 0.0
    %1103 = vmatpush1.msra.mxu0 0.0
    %1104 = vmatprep.subr.mxu0 0.0
    %1105 = vmatpush1.msra.mxu0 0.0
    %1106 = vmatprep.subr.mxu0 0.0
    %1107 = vmatpush1.msra.mxu0 0.0
    %1108 = vmatprep.subr.mxu0 0.0
    %1109 = vmatpush1.msra.mxu0 0.0
    %1110 = vmatprep.subr.mxu0 0.0
    %1111 = vmatpush1.msra.mxu0 0.0
    %1112 = vmatprep.subr.mxu0 0.0
    %1113 = vmatpush1.msra.mxu0 0.0
    %1114 = vmatprep.subr.mxu0 0.0
    %1115 = vmatpush1.msra.mxu0 0.0
    %1116 = vmatprep.subr.mxu0 0.0
    %1117 = vmatpush1.msra.mxu0 0.0
    %1118 = vmatprep.mubr.f32.mxu0 0.0
    %1119 = vmatmul.mubr.f32.gmra.mrb[0].mxu0 %v435
    %v1120 = vpop.f32.mrb[0].mxu0
    %v1121 = vadd.f32 0.0, %v1120
    %v1122 = vpop.f32.mrb[0].mxu0
    %1123 = vmatprep.mubr.f32.mxu0 0.0
    %1124 = vmatmul.mubr.f32.gmra.mrb[0].mxu0 %v436
    %v1125 = vpop.f32.mrb[0].mxu0
    %v1126 = vadd.f32 0.0, %v1125
    %v1127 = vpop.f32.mrb[0].mxu0
    %1128 = vdwg.mxu0
    %v1129 = vld [vmem:[%s29] sm:$0xff]
    %v1130 = vld [vmem:[%s29 + $0x8] sm:$0xff]
    %v1131 = vld [vmem:[%s29 + $0x10] sm:$0xff]
    %v1132 = vld [vmem:[%s29 + $0x18] sm:$0xff]
    %v1133 = vld [vmem:[%s29 + $0x20] sm:$0xff]
    %v1134 = vld [vmem:[%s29 + $0x28] sm:$0xff]
    %v1135 = vld [vmem:[%s29 + $0x30] sm:$0xff]
    %v1136 = vld [vmem:[%s29 + $0x38] sm:$0xff]
    %v1137 = vld [vmem:[%s29 + $0x40] sm:$0xff]
    %v1138 = vld [vmem:[%s29 + $0x48] sm:$0xff]
    %v1139 = vld [vmem:[%s29 + $0x50] sm:$0xff]
    %v1140 = vld [vmem:[%s29 + $0x58] sm:$0xff]
    %v1141 = vld [vmem:[%s29 + $0x60] sm:$0xff]
    %v1142 = vld [vmem:[%s29 + $0x68] sm:$0xff]
    %v1143 = vld [vmem:[%s29 + $0x70] sm:$0xff]
    %v1144 = vld [vmem:[%s29 + $0x78] sm:$0xff]
    %v1145 = vld [vmem:[%s29 + $0x80] sm:$0xff]
    %v1146 = vld [vmem:[%s29 + $0x88] sm:$0xff]
    %v1147 = vld [vmem:[%s29 + $0x90] sm:$0xff]
    %v1148 = vld [vmem:[%s29 + $0x98] sm:$0xff]
    %v1149 = vld [vmem:[%s29 + $0xa0] sm:$0xff]
    %v1150 = vld [vmem:[%s29 + $0xa8] sm:$0xff]
    %v1151 = vld [vmem:[%s29 + $0xb0] sm:$0xff]
    %v1152 = vld [vmem:[%s29 + $0xb8] sm:$0xff]
    %v1153 = vld [vmem:[%s29 + $0xc0] sm:$0xff]
    %v1154 = vld [vmem:[%s29 + $0xc8] sm:$0xff]
    %v1155 = vld [vmem:[%s29 + $0xd0] sm:$0xff]
    %v1156 = vld [vmem:[%s29 + $0xd8] sm:$0xff]
    %v1157 = vld [vmem:[%s29 + $0xe0] sm:$0xff]
    %v1158 = vld [vmem:[%s29 + $0xe8] sm:$0xff]
    %v1159 = vld [vmem:[%s29 + $0xf0] sm:$0xff]
    %v1160 = vld [vmem:[%s29 + $0xf8] sm:$0xff]
    %v1161 = vld [vmem:[%s29 + $0x100] sm:$0xff]
    %v1162 = vld [vmem:[%s29 + $0x108] sm:$0xff]
    %v1163 = vld [vmem:[%s29 + $0x110] sm:$0xff]
    %v1164 = vld [vmem:[%s29 + $0x118] sm:$0xff]
    %v1165 = vld [vmem:[%s29 + $0x120] sm:$0xff]
    %v1166 = vld [vmem:[%s29 + $0x128] sm:$0xff]
    %v1167 = vld [vmem:[%s29 + $0x130] sm:$0xff]
    %v1168 = vld [vmem:[%s29 + $0x138] sm:$0xff]
    %v1169 = vld [vmem:[%s29 + $0x140] sm:$0xff]
    %v1170 = vld [vmem:[%s29 + $0x148] sm:$0xff]
    %v1171 = vld [vmem:[%s29 + $0x150] sm:$0xff]
    %v1172 = vld [vmem:[%s29 + $0x158] sm:$0xff]
    %v1173 = vld [vmem:[%s29 + $0x160] sm:$0xff]
    %v1174 = vld [vmem:[%s29 + $0x168] sm:$0xff]
    %v1175 = vld [vmem:[%s29 + $0x170] sm:$0xff]
    %v1176 = vld [vmem:[%s29 + $0x178] sm:$0xff]
    %1177 = vmatprep.subr.mxu0 0.0
    %1178 = vmatpush1.msra.mxu0 %v1129
    %1179 = vmatprep.subr.mxu0 0.0
    %1180 = vmatpush1.msra.mxu0 %v1130
    %1181 = vmatprep.subr.mxu0 0.0
    %1182 = vmatpush1.msra.mxu0 %v1131
    %1183 = vmatprep.subr.mxu0 0.0
    %1184 = vmatpush1.msra.mxu0 %v1132
    %1185 = vmatprep.subr.mxu0 0.0
    %1186 = vmatpush1.msra.mxu0 %v1133
    %1187 = vmatprep.subr.mxu0 0.0
    %1188 = vmatpush1.msra.mxu0 %v1134
    %1189 = vmatprep.subr.mxu0 0.0
    %1190 = vmatpush1.msra.mxu0 %v1135
    %1191 = vmatprep.subr.mxu0 0.0
    %1192 = vmatpush1.msra.mxu0 %v1136
    %1193 = vmatprep.subr.mxu0 0.0
    %1194 = vmatpush1.msra.mxu0 %v1137
    %1195 = vmatprep.subr.mxu0 0.0
    %1196 = vmatpush1.msra.mxu0 %v1138
    %1197 = vmatprep.subr.mxu0 0.0
    %1198 = vmatpush1.msra.mxu0 %v1139
    %1199 = vmatprep.subr.mxu0 0.0
    %1200 = vmatpush1.msra.mxu0 %v1140
    %1201 = vmatprep.subr.mxu0 0.0
    %1202 = vmatpush1.msra.mxu0 %v1141
    %1203 = vmatprep.subr.mxu0 0.0
    %1204 = vmatpush1.msra.mxu0 %v1142
    %1205 = vmatprep.subr.mxu0 0.0
    %1206 = vmatpush1.msra.mxu0 %v1143
    %1207 = vmatprep.subr.mxu0 0.0
    %1208 = vmatpush1.msra.mxu0 %v1144
    %1209 = vmatprep.subr.mxu0 0.0
    %1210 = vmatpush1.msra.mxu0 0.0
    %1211 = vmatprep.subr.mxu0 0.0
    %1212 = vmatpush1.msra.mxu0 0.0
    %1213 = vmatprep.subr.mxu0 0.0
    %1214 = vmatpush1.msra.mxu0 0.0
    %1215 = vmatprep.subr.mxu0 0.0
    %1216 = vmatpush1.msra.mxu0 0.0
    %1217 = vmatprep.subr.mxu0 0.0
    %1218 = vmatpush1.msra.mxu0 0.0
    %1219 = vmatprep.subr.mxu0 0.0
    %1220 = vmatpush1.msra.mxu0 0.0
    %1221 = vmatprep.subr.mxu0 0.0
    %1222 = vmatpush1.msra.mxu0 0.0
    %1223 = vmatprep.subr.mxu0 0.0
    %1224 = vmatpush1.msra.mxu0 0.0
    %1225 = vmatprep.subr.mxu0 0.0
    %1226 = vmatpush1.msra.mxu0 0.0
    %1227 = vmatprep.subr.mxu0 0.0
    %1228 = vmatpush1.msra.mxu0 0.0
    %1229 = vmatprep.subr.mxu0 0.0
    %1230 = vmatpush1.msra.mxu0 0.0
    %1231 = vmatprep.subr.mxu0 0.0
    %1232 = vmatpush1.msra.mxu0 0.0
    %1233 = vmatprep.subr.mxu0 0.0
    %1234 = vmatpush1.msra.mxu0 0.0
    %1235 = vmatprep.subr.mxu0 0.0
    %1236 = vmatpush1.msra.mxu0 0.0
    %1237 = vmatprep.subr.mxu0 0.0
    %1238 = vmatpush1.msra.mxu0 0.0
    %1239 = vmatprep.subr.mxu0 0.0
    %1240 = vmatpush1.msra.mxu0 0.0
    %1241 = vmatprep.mubr.f32.mxu0 0.0
    %1242 = vmatmul.mubr.f32.gmra.mrb[0].mxu0 %v435
    %v1243 = vpop.f32.mrb[0].mxu0
    %v1244 = vadd.f32 0.0, %v1243
    %v1245 = vpop.f32.mrb[0].mxu0
    %1246 = vmatprep.mubr.f32.mxu0 0.0
    %1247 = vmatmul.mubr.f32.gmra.mrb[0].mxu0 %v436
    %v1248 = vpop.f32.mrb[0].mxu0
    %v1249 = vadd.f32 0.0, %v1248
    %v1250 = vpop.f32.mrb[0].mxu0
    %1251 = vdwg.mxu0
    %1252 = vmatprep.subr.mxu0 0.0
    %1253 = vmatpush1.msra.mxu0 %v1145
    %1254 = vmatprep.subr.mxu0 0.0
    %1255 = vmatpush1.msra.mxu0 %v1146
    %1256 = vmatprep.subr.mxu0 0.0
    %1257 = vmatpush1.msra.mxu0 %v1147
    %1258 = vmatprep.subr.mxu0 0.0
    %1259 = vmatpush1.msra.mxu0 %v1148
    %1260 = vmatprep.subr.mxu0 0.0
    %1261 = vmatpush1.msra.mxu0 %v1149
    %1262 = vmatprep.subr.mxu0 0.0
    %1263 = vmatpush1.msra.mxu0 %v1150
    %1264 = vmatprep.subr.mxu0 0.0
    %1265 = vmatpush1.msra.mxu0 %v1151
    %1266 = vmatprep.subr.mxu0 0.0
    %1267 = vmatpush1.msra.mxu0 %v1152
    %1268 = vmatprep.subr.mxu0 0.0
    %1269 = vmatpush1.msra.mxu0 %v1153
    %1270 = vmatprep.subr.mxu0 0.0
    %1271 = vmatpush1.msra.mxu0 %v1154
    %1272 = vmatprep.subr.mxu0 0.0
    %1273 = vmatpush1.msra.mxu0 %v1155
    %1274 = vmatprep.subr.mxu0 0.0
    %1275 = vmatpush1.msra.mxu0 %v1156
    %1276 = vmatprep.subr.mxu0 0.0
    %1277 = vmatpush1.msra.mxu0 %v1157
    %1278 = vmatprep.subr.mxu0 0.0
    %1279 = vmatpush1.msra.mxu0 %v1158
    %1280 = vmatprep.subr.mxu0 0.0
    %1281 = vmatpush1.msra.mxu0 %v1159
    %1282 = vmatprep.subr.mxu0 0.0
    %1283 = vmatpush1.msra.mxu0 %v1160
    %1284 = vmatprep.subr.mxu0 0.0
    %1285 = vmatpush1.msra.mxu0 0.0
    %1286 = vmatprep.subr.mxu0 0.0
    %1287 = vmatpush1.msra.mxu0 0.0
    %1288 = vmatprep.subr.mxu0 0.0
    %1289 = vmatpush1.msra.mxu0 0.0
    %1290 = vmatprep.subr.mxu0 0.0
    %1291 = vmatpush1.msra.mxu0 0.0
    %1292 = vmatprep.subr.mxu0 0.0
    %1293 = vmatpush1.msra.mxu0 0.0
    %1294 = vmatprep.subr.mxu0 0.0
    %1295 = vmatpush1.msra.mxu0 0.0
    %1296 = vmatprep.subr.mxu0 0.0
    %1297 = vmatpush1.msra.mxu0 0.0
    %1298 = vmatprep.subr.mxu0 0.0
    %1299 = vmatpush1.msra.mxu0 0.0
    %1300 = vmatprep.subr.mxu0 0.0
    %1301 = vmatpush1.msra.mxu0 0.0
    %1302 = vmatprep.subr.mxu0 0.0
    %1303 = vmatpush1.msra.mxu0 0.0
    %1304 = vmatprep.subr.mxu0 0.0
    %1305 = vmatpush1.msra.mxu0 0.0
    %1306 = vmatprep.subr.mxu0 0.0
    %1307 = vmatpush1.msra.mxu0 0.0
    %1308 = vmatprep.subr.mxu0 0.0
    %1309 = vmatpush1.msra.mxu0 0.0
    %1310 = vmatprep.subr.mxu0 0.0
    %1311 = vmatpush1.msra.mxu0 0.0
    %1312 = vmatprep.subr.mxu0 0.0
    %1313 = vmatpush1.msra.mxu0 0.0
    %1314 = vmatprep.subr.mxu0 0.0
    %1315 = vmatpush1.msra.mxu0 0.0
    %1316 = vmatprep.mubr.f32.mxu0 0.0
    %1317 = vmatmul.mubr.f32.gmra.mrb[0].mxu0 %v435
    %v1318 = vpop.f32.mrb[0].mxu0
    %v1319 = vadd.f32 0.0, %v1318
    %v1320 = vpop.f32.mrb[0].mxu0
    %1321 = vmatprep.mubr.f32.mxu0 0.0
    %1322 = vmatmul.mubr.f32.gmra.mrb[0].mxu0 %v436
    %v1323 = vpop.f32.mrb[0].mxu0
    %v1324 = vadd.f32 0.0, %v1323
    %v1325 = vpop.f32.mrb[0].mxu0
    %1326 = vdwg.mxu0
    %1327 = vmatprep.subr.mxu0 0.0
    %1328 = vmatpush1.msra.mxu0 %v1161
    %1329 = vmatprep.subr.mxu0 0.0
    %1330 = vmatpush1.msra.mxu0 %v1162
    %1331 = vmatprep.subr.mxu0 0.0
    %1332 = vmatpush1.msra.mxu0 %v1163
    %1333 = vmatprep.subr.mxu0 0.0
    %1334 = vmatpush1.msra.mxu0 %v1164
    %1335 = vmatprep.subr.mxu0 0.0
    %1336 = vmatpush1.msra.mxu0 %v1165
    %1337 = vmatprep.subr.mxu0 0.0
    %1338 = vmatpush1.msra.mxu0 %v1166
    %1339 = vmatprep.subr.mxu0 0.0
    %1340 = vmatpush1.msra.mxu0 %v1167
    %1341 = vmatprep.subr.mxu0 0.0
    %1342 = vmatpush1.msra.mxu0 %v1168
    %1343 = vmatprep.subr.mxu0 0.0
    %1344 = vmatpush1.msra.mxu0 %v1169
    %1345 = vmatprep.subr.mxu0 0.0
    %1346 = vmatpush1.msra.mxu0 %v1170
    %1347 = vmatprep.subr.mxu0 0.0
    %1348 = vmatpush1.msra.mxu0 %v1171
    %1349 = vmatprep.subr.mxu0 0.0
    %1350 = vmatpush1.msra.mxu0 %v1172
    %1351 = vmatprep.subr.mxu0 0.0
    %1352 = vmatpush1.msra.mxu0 %v1173
    %1353 = vmatprep.subr.mxu0 0.0
    %1354 = vmatpush1.msra.mxu0 %v1174
    %1355 = vmatprep.subr.mxu0 0.0
    %1356 = vmatpush1.msra.mxu0 %v1175
    %1357 = vmatprep.subr.mxu0 0.0
    %1358 = vmatpush1.msra.mxu0 %v1176
    %1359 = vmatprep.subr.mxu0 0.0
    %1360 = vmatpush1.msra.mxu0 0.0
    %1361 = vmatprep.subr.mxu0 0.0
    %1362 = vmatpush1.msra.mxu0 0.0
    %1363 = vmatprep.subr.mxu0 0.0
    %1364 = vmatpush1.msra.mxu0 0.0
    %1365 = vmatprep.subr.mxu0 0.0
    %1366 = vmatpush1.msra.mxu0 0.0
    %1367 = vmatprep.subr.mxu0 0.0
    %1368 = vmatpush1.msra.mxu0 0.0
    %1369 = vmatprep.subr.mxu0 0.0
    %1370 = vmatpush1.msra.mxu0 0.0
    %1371 = vmatprep.subr.mxu0 0.0
    %1372 = vmatpush1.msra.mxu0 0.0
    %1373 = vmatprep.subr.mxu0 0.0
    %1374 = vmatpush1.msra.mxu0 0.0
    %1375 = vmatprep.subr.mxu0 0.0
    %1376 = vmatpush1.msra.mxu0 0.0
    %1377 = vmatprep.subr.mxu0 0.0
    %1378 = vmatpush1.msra.mxu0 0.0
    %1379 = vmatprep.subr.mxu0 0.0
    %1380 = vmatpush1.msra.mxu0 0.0
    %1381 = vmatprep.subr.mxu0 0.0
    %1382 = vmatpush1.msra.mxu0 0.0
    %1383 = vmatprep.subr.mxu0 0.0
    %1384 = vmatpush1.msra.mxu0 0.0
    %1385 = vmatprep.subr.mxu0 0.0
    %1386 = vmatpush1.msra.mxu0 0.0
    %1387 = vmatprep.subr.mxu0 0.0
    %1388 = vmatpush1.msra.mxu0 0.0
    %1389 = vmatprep.subr.mxu0 0.0
    %1390 = vmatpush1.msra.mxu0 0.0
    %1391 = vmatprep.mubr.f32.mxu0 0.0
    %1392 = vmatmul.mubr.f32.gmra.mrb[0].mxu0 %v435
    %v1393 = vpop.f32.mrb[0].mxu0
    %v1394 = vadd.f32 0.0, %v1393
    %v1395 = vpop.f32.mrb[0].mxu0
    %1396 = vmatprep.mubr.f32.mxu0 0.0
    %1397 = vmatmul.mubr.f32.gmra.mrb[0].mxu0 %v436
    %v1398 = vpop.f32.mrb[0].mxu0
    %v1399 = vadd.f32 0.0, %v1398
    %v1400 = vpop.f32.mrb[0].mxu0
    %1401 = vdwg.mxu0
    %vm1402 = vcmask 261120
    %v1404 = vsel %vm1402, %v698, 0
    %v1407 = vsel %vm1402, %v703, 0
    %v1410 = vsel %vm1402, %v971, 0
    %v1413 = vsel %vm1402, %v976, 0
    %1415 = vmatprep.subr.mxu0 0.0
    %1416 = vmatpush1.xpose.msra.mxu0 %v1410
    %1417 = vmatprep.subr.mxu0 0.0
    %1418 = vmatpush1.xpose.msra.mxu0 %v1413
    %1419 = vmatprep.subr.mxu0 0.0
    %1420 = vmatpush1.xpose.msra.mxu0 0.0
    %1421 = vmatprep.subr.mxu0 0.0
    %1422 = vmatpush1.xpose.msra.mxu0 0.0
    %1423 = vmatprep.subr.mxu0 0.0
    %1424 = vmatpush1.xpose.msra.mxu0 0.0
    %1425 = vmatprep.subr.mxu0 0.0
    %1426 = vmatpush1.xpose.msra.mxu0 0.0
    %1427 = vmatprep.subr.mxu0 0.0
    %1428 = vmatpush1.xpose.msra.mxu0 0.0
    %1429 = vmatprep.subr.mxu0 0.0
    %1430 = vmatpush1.xpose.msra.mxu0 0.0
    %1431 = vmatprep.subr.mxu0 0.0
    %1432 = vmatpush1.xpose.msra.mxu0 0.0
    %1433 = vmatprep.subr.mxu0 0.0
    %1434 = vmatpush1.xpose.msra.mxu0 0.0
    %1435 = vmatprep.subr.mxu0 0.0
    %1436 = vmatpush1.xpose.msra.mxu0 0.0
    %1437 = vmatprep.subr.mxu0 0.0
    %1438 = vmatpush1.xpose.msra.mxu0 0.0
    %1439 = vmatprep.subr.mxu0 0.0
    %1440 = vmatpush1.xpose.msra.mxu0 0.0
    %1441 = vmatprep.subr.mxu0 0.0
    %1442 = vmatpush1.xpose.msra.mxu0 0.0
    %1443 = vmatprep.subr.mxu0 0.0
    %1444 = vmatpush1.xpose.msra.mxu0 0.0
    %1445 = vmatprep.subr.mxu0 0.0
    %1446 = vmatpush1.xpose.msra.mxu0 0.0
    %1447 = vmatprep.subr.mxu0 0.0
    %1448 = vmatpush1.xpose.msra.mxu0 0.0
    %1449 = vmatprep.subr.mxu0 0.0
    %1450 = vmatpush1.xpose.msra.mxu0 0.0
    %1451 = vmatprep.subr.mxu0 0.0
    %1452 = vmatpush1.xpose.msra.mxu0 0.0
    %1453 = vmatprep.subr.mxu0 0.0
    %1454 = vmatpush1.xpose.msra.mxu0 0.0
    %1455 = vmatprep.subr.mxu0 0.0
    %1456 = vmatpush1.xpose.msra.mxu0 0.0
    %1457 = vmatprep.subr.mxu0 0.0
    %1458 = vmatpush1.xpose.msra.mxu0 0.0
    %1459 = vmatprep.subr.mxu0 0.0
    %1460 = vmatpush1.xpose.msra.mxu0 0.0
    %1461 = vmatprep.subr.mxu0 0.0
    %1462 = vmatpush1.xpose.msra.mxu0 0.0
    %1463 = vmatprep.subr.mxu0 0.0
    %1464 = vmatpush1.xpose.msra.mxu0 0.0
    %1465 = vmatprep.subr.mxu0 0.0
    %1466 = vmatpush1.xpose.msra.mxu0 0.0
    %1467 = vmatprep.subr.mxu0 0.0
    %1468 = vmatpush1.xpose.msra.mxu0 0.0
    %1469 = vmatprep.subr.mxu0 0.0
    %1470 = vmatpush1.xpose.msra.mxu0 0.0
    %1471 = vmatprep.subr.mxu0 0.0
    %1472 = vmatpush1.xpose.msra.mxu0 0.0
    %1473 = vmatprep.subr.mxu0 0.0
    %1474 = vmatpush1.xpose.msra.mxu0 0.0
    %1475 = vmatprep.subr.mxu0 0.0
    %1476 = vmatpush1.xpose.msra.mxu0 0.0
    %1477 = vmatprep.subr.mxu0 0.0
    %1478 = vmatpush1.xpose.msra.mxu0 0.0
    %1479 = vmatprep.mubr.f32.mxu0 0.0
    %1480 = vmatmul.mubr.f32.gmra.mrb[0].mxu0 %v1404
    %v1481 = vpop.f32.mrb[0].mxu0
    %v1482 = vadd.f32 0.0, %v1481
    %v1483 = vpop.f32.mrb[0].mxu0
    %1484 = vmatprep.mubr.f32.mxu0 0.0
    %1485 = vmatmul.mubr.f32.gmra.mrb[0].mxu0 %v1407
    %v1486 = vpop.f32.mrb[0].mxu0
    %v1487 = vadd.f32 0.0, %v1486
    %v1488 = vpop.f32.mrb[0].mxu0
    %1489 = vdwg.mxu0
    %v1491 = vsel %vm1402, %v773, 0
    %v1494 = vsel %vm1402, %v778, 0
    %v1497 = vsel %vm1402, %v1046, 0
    %v1500 = vsel %vm1402, %v1051, 0
    %1502 = vmatprep.subr.mxu0 0.0
    %1503 = vmatpush1.xpose.msra.mxu0 %v1497
    %1504 = vmatprep.subr.mxu0 0.0
    %1505 = vmatpush1.xpose.msra.mxu0 %v1500
    %1506 = vmatprep.subr.mxu0 0.0
    %1507 = vmatpush1.xpose.msra.mxu0 0.0
    %1508 = vmatprep.subr.mxu0 0.0
    %1509 = vmatpush1.xpose.msra.mxu0 0.0
    %1510 = vmatprep.subr.mxu0 0.0
    %1511 = vmatpush1.xpose.msra.mxu0 0.0
    %1512 = vmatprep.subr.mxu0 0.0
    %1513 = vmatpush1.xpose.msra.mxu0 0.0
    %1514 = vmatprep.subr.mxu0 0.0
    %1515 = vmatpush1.xpose.msra.mxu0 0.0
    %1516 = vmatprep.subr.mxu0 0.0
    %1517 = vmatpush1.xpose.msra.mxu0 0.0
    %1518 = vmatprep.subr.mxu0 0.0
    %1519 = vmatpush1.xpose.msra.mxu0 0.0
    %1520 = vmatprep.subr.mxu0 0.0
    %1521 = vmatpush1.xpose.msra.mxu0 0.0
    %1522 = vmatprep.subr.mxu0 0.0
    %1523 = vmatpush1.xpose.msra.mxu0 0.0
    %1524 = vmatprep.subr.mxu0 0.0
    %1525 = vmatpush1.xpose.msra.mxu0 0.0
    %1526 = vmatprep.subr.mxu0 0.0
    %1527 = vmatpush1.xpose.msra.mxu0 0.0
    %1528 = vmatprep.subr.mxu0 0.0
    %1529 = vmatpush1.xpose.msra.mxu0 0.0
    %1530 = vmatprep.subr.mxu0 0.0
    %1531 = vmatpush1.xpose.msra.mxu0 0.0
    %1532 = vmatprep.subr.mxu0 0.0
    %1533 = vmatpush1.xpose.msra.mxu0 0.0
    %1534 = vmatprep.subr.mxu0 0.0
    %1535 = vmatpush1.xpose.msra.mxu0 0.0
    %1536 = vmatprep.subr.mxu0 0.0
    %1537 = vmatpush1.xpose.msra.mxu0 0.0
    %1538 = vmatprep.subr.mxu0 0.0
    %1539 = vmatpush1.xpose.msra.mxu0 0.0
    %1540 = vmatprep.subr.mxu0 0.0
    %1541 = vmatpush1.xpose.msra.mxu0 0.0
    %1542 = vmatprep.subr.mxu0 0.0
    %1543 = vmatpush1.xpose.msra.mxu0 0.0
    %1544 = vmatprep.subr.mxu0 0.0
    %1545 = vmatpush1.xpose.msra.mxu0 0.0
    %1546 = vmatprep.subr.mxu0 0.0
    %1547 = vmatpush1.xpose.msra.mxu0 0.0
    %1548 = vmatprep.subr.mxu0 0.0
    %1549 = vmatpush1.xpose.msra.mxu0 0.0
    %1550 = vmatprep.subr.mxu0 0.0
    %1551 = vmatpush1.xpose.msra.mxu0 0.0
    %1552 = vmatprep.subr.mxu0 0.0
    %1553 = vmatpush1.xpose.msra.mxu0 0.0
    %1554 = vmatprep.subr.mxu0 0.0
    %1555 = vmatpush1.xpose.msra.mxu0 0.0
    %1556 = vmatprep.subr.mxu0 0.0
    %1557 = vmatpush1.xpose.msra.mxu0 0.0
    %1558 = vmatprep.subr.mxu0 0.0
    %1559 = vmatpush1.xpose.msra.mxu0 0.0
    %1560 = vmatprep.subr.mxu0 0.0
    %1561 = vmatpush1.xpose.msra.mxu0 0.0
    %1562 = vmatprep.subr.mxu0 0.0
    %1563 = vmatpush1.xpose.msra.mxu0 0.0
    %1564 = vmatprep.subr.mxu0 0.0
    %1565 = vmatpush1.xpose.msra.mxu0 0.0
    %1566 = vmatprep.mubr.f32.mxu0 0.0
    %1567 = vmatmul.mubr.f32.gmra.mrb[0].mxu0 %v1491
    %v1568 = vpop.f32.mrb[0].mxu0
    %v1569 = vadd.f32 0.0, %v1568
    %v1570 = vpop.f32.mrb[0].mxu0
    %1571 = vmatprep.mubr.f32.mxu0 0.0
    %1572 = vmatmul.mubr.f32.gmra.mrb[0].mxu0 %v1494
    %v1573 = vpop.f32.mrb[0].mxu0
    %v1574 = vadd.f32 0.0, %v1573
    %v1575 = vpop.f32.mrb[0].mxu0
    %1576 = vdwg.mxu0
    %v1578 = vsel %vm1402, %v848, 0
    %v1581 = vsel %vm1402, %v853, 0
    %v1584 = vsel %vm1402, %v1121, 0
    %v1587 = vsel %vm1402, %v1126, 0
    %1589 = vmatprep.subr.mxu0 0.0
    %1590 = vmatpush1.xpose.msra.mxu0 %v1584
    %1591 = vmatprep.subr.mxu0 0.0
    %1592 = vmatpush1.xpose.msra.mxu0 %v1587
    %1593 = vmatprep.subr.mxu0 0.0
    %1594 = vmatpush1.xpose.msra.mxu0 0.0
    %1595 = vmatprep.subr.mxu0 0.0
    %1596 = vmatpush1.xpose.msra.mxu0 0.0
    %1597 = vmatprep.subr.mxu0 0.0
    %1598 = vmatpush1.xpose.msra.mxu0 0.0
    %1599 = vmatprep.subr.mxu0 0.0
    %1600 = vmatpush1.xpose.msra.mxu0 0.0
    %1601 = vmatprep.subr.mxu0 0.0
    %1602 = vmatpush1.xpose.msra.mxu0 0.0
    %1603 = vmatprep.subr.mxu0 0.0
    %1604 = vmatpush1.xpose.msra.mxu0 0.0
    %1605 = vmatprep.subr.mxu0 0.0
    %1606 = vmatpush1.xpose.msra.mxu0 0.0
    %1607 = vmatprep.subr.mxu0 0.0
    %1608 = vmatpush1.xpose.msra.mxu0 0.0
    %1609 = vmatprep.subr.mxu0 0.0
    %1610 = vmatpush1.xpose.msra.mxu0 0.0
    %1611 = vmatprep.subr.mxu0 0.0
    %1612 = vmatpush1.xpose.msra.mxu0 0.0
    %1613 = vmatprep.subr.mxu0 0.0
    %1614 = vmatpush1.xpose.msra.mxu0 0.0
    %1615 = vmatprep.subr.mxu0 0.0
    %1616 = vmatpush1.xpose.msra.mxu0 0.0
    %1617 = vmatprep.subr.mxu0 0.0
    %1618 = vmatpush1.xpose.msra.mxu0 0.0
    %1619 = vmatprep.subr.mxu0 0.0
    %1620 = vmatpush1.xpose.msra.mxu0 0.0
    %1621 = vmatprep.subr.mxu0 0.0
    %1622 = vmatpush1.xpose.msra.mxu0 0.0
    %1623 = vmatprep.subr.mxu0 0.0
    %1624 = vmatpush1.xpose.msra.mxu0 0.0
    %1625 = vmatprep.subr.mxu0 0.0
    %1626 = vmatpush1.xpose.msra.mxu0 0.0
    %1627 = vmatprep.subr.mxu0 0.0
    %1628 = vmatpush1.xpose.msra.mxu0 0.0
    %1629 = vmatprep.subr.mxu0 0.0
    %1630 = vmatpush1.xpose.msra.mxu0 0.0
    %1631 = vmatprep.subr.mxu0 0.0
    %1632 = vmatpush1.xpose.msra.mxu0 0.0
    %1633 = vmatprep.subr.mxu0 0.0
    %1634 = vmatpush1.xpose.msra.mxu0 0.0
    %1635 = vmatprep.subr.mxu0 0.0
    %1636 = vmatpush1.xpose.msra.mxu0 0.0
    %1637 = vmatprep.subr.mxu0 0.0
    %1638 = vmatpush1.xpose.msra.mxu0 0.0
    %1639 = vmatprep.subr.mxu0 0.0
    %1640 = vmatpush1.xpose.msra.mxu0 0.0
    %1641 = vmatprep.subr.mxu0 0.0
    %1642 = vmatpush1.xpose.msra.mxu0 0.0
    %1643 = vmatprep.subr.mxu0 0.0
    %1644 = vmatpush1.xpose.msra.mxu0 0.0
    %1645 = vmatprep.subr.mxu0 0.0
    %1646 = vmatpush1.xpose.msra.mxu0 0.0
    %1647 = vmatprep.subr.mxu0 0.0
    %1648 = vmatpush1.xpose.msra.mxu0 0.0
    %1649 = vmatprep.subr.mxu0 0.0
    %1650 = vmatpush1.xpose.msra.mxu0 0.0
    %1651 = vmatprep.subr.mxu0 0.0
    %1652 = vmatpush1.xpose.msra.mxu0 0.0
    %1653 = vmatprep.mubr.f32.mxu0 0.0
    %1654 = vmatmul.mubr.f32.gmra.mrb[0].mxu0 %v1578
    %v1655 = vpop.f32.mrb[0].mxu0
    %v1656 = vadd.f32 0.0, %v1655
    %v1657 = vpop.f32.mrb[0].mxu0
    %1658 = vmatprep.mubr.f32.mxu0 0.0
    %1659 = vmatmul.mubr.f32.gmra.mrb[0].mxu0 %v1581
    %v1660 = vpop.f32.mrb[0].mxu0
    %v1661 = vadd.f32 0.0, %v1660
    %v1662 = vpop.f32.mrb[0].mxu0
    %1663 = vdwg.mxu0
    %v1664 = vmul.f32 %v1482, 0.17677669
    %v1665 = vmul.f32 %v1487, 0.17677669
    %v1666 = vmul.f32 %v1569, 0.17677669
    %v1667 = vmul.f32 %v1574, 0.17677669
    %v1668 = vmul.f32 %v1656, 0.17677669
    %v1669 = vmul.f32 %v1661, 0.17677669
    %v1670 = vsel %vm581, 1, 0
    %v1671 = vsel %vm582, 1, 0
    %vm1672 = vcmp.eq.s32.totalorder %v1670, 1
    %vm1673 = vcmp.eq.s32.totalorder %v1671, 1
    %v1674 = vsel %vm1672, %v1664, -1e+09
    %v1675 = vsel %vm1673, %v1665, -1e+09
    %v1676 = vsel %vm1672, %v1666, -1e+09
    %v1677 = vsel %vm1673, %v1667, -1e+09
    %v1678 = vsel %vm1672, %v1668, -1e+09
    %v1679 = vsel %vm1673, %v1669, -1e+09
    %vm1680 = vcmask 130048
    %v1681 = vsel %vm1680, %v1674, -inf
    %1682 = vmax.xlane.f32.xlu0 %v1681
    %v1683 = vpop.xlane.xlu0 %1682
    %v1684 = vsel %vm1680, %v1675, -inf
    %1685 = vmax.xlane.f32.xlu0 %v1684
    %v1686 = vpop.xlane.xlu0 %1685
    %v1687 = vsel %vm1680, %v1676, -inf
    %1688 = vmax.xlane.f32.xlu0 %v1687
    %v1689 = vpop.xlane.xlu0 %1688
    %v1690 = vsel %vm1680, %v1677, -inf
    %1691 = vmax.xlane.f32.xlu0 %v1690
    %v1692 = vpop.xlane.xlu0 %1691
    %v1693 = vsel %vm1680, %v1678, -inf
    %1694 = vmax.xlane.f32.xlu0 %v1693
    %v1695 = vpop.xlane.xlu0 %1694
    %v1696 = vsel %vm1680, %v1679, -inf
    %1697 = vmax.xlane.f32.xlu0 %v1696
    %v1698 = vpop.xlane.xlu0 %1697
    %v1699 = vsub.f32 %v1674, %v1683
    %v1700 = vsub.f32 %v1675, %v1686
    %v1701 = vsub.f32 %v1676, %v1689
    %v1702 = vsub.f32 %v1677, %v1692
    %v1703 = vsub.f32 %v1678, %v1695
    %v1704 = vsub.f32 %v1679, %v1698
    %v1705 = vmul.f32 %v1699, 1.442695
    %v1706 = vpow.pop %v1705
    %v1707 = vmul.f32 %v1700, 1.442695
    %v1708 = vpow.pop %v1707
    %v1709 = vmul.f32 %v1701, 1.442695
    %v1710 = vpow.pop %v1709
    %v1711 = vmul.f32 %v1702, 1.442695
    %v1712 = vpow.pop %v1711
    %v1713 = vmul.f32 %v1703, 1.442695
    %v1714 = vpow.pop %v1713
    %v1715 = vmul.f32 %v1704, 1.442695
    %v1716 = vpow.pop %v1715
    %v1717 = vsel %vm1680, %v1706, 0.0
    %1718 = vadd.xlane.f32.xlu0 %v1717
    %v1719 = vpop.xlane.xlu0 %1718
    %v1720 = vsel %vm1680, %v1708, 0.0
    %1721 = vadd.xlane.f32.xlu0 %v1720
    %v1722 = vpop.xlane.xlu0 %1721
    %v1723 = vsel %vm1680, %v1710, 0.0
    %1724 = vadd.xlane.f32.xlu0 %v1723
    %v1725 = vpop.xlane.xlu0 %1724
    %v1726 = vsel %vm1680, %v1712, 0.0
    %1727 = vadd.xlane.f32.xlu0 %v1726
    %v1728 = vpop.xlane.xlu0 %1727
    %v1729 = vsel %vm1680, %v1714, 0.0
    %1730 = vadd.xlane.f32.xlu0 %v1729
    %v1731 = vpop.xlane.xlu0 %1730
    %v1732 = vsel %vm1680, %v1716, 0.0
    %1733 = vadd.xlane.f32.xlu0 %v1732
    %v1734 = vpop.xlane.xlu0 %1733
    %v1735 = vrcp.pop %v1719
    %v1736 = vrcp.pop %v1722
    %v1737 = vrcp.pop %v1725
    %v1738 = vrcp.pop %v1728
    %v1739 = vrcp.pop %v1731
    %v1740 = vrcp.pop %v1734
    %v1741 = vmul.f32 %v1706, %v1735
    %v1742 = vmul.f32 %v1708, %v1736
    %v1743 = vmul.f32 %v1710, %v1737
    %v1744 = vmul.f32 %v1712, %v1738
    %v1745 = vmul.f32 %v1714, %v1739
    %v1746 = vmul.f32 %v1716, %v1740
    %v1748 = vsel %vm1680, %v1741, 0
    %v1751 = vsel %vm1680, %v1742, 0
    %1753 = vmatprep.subr.mxu0 0.0
    %1754 = vmatpush1.msra.mxu0 %v1244
    %1755 = vmatprep.subr.mxu0 0.0
    %1756 = vmatpush1.msra.mxu0 %v1249
    %1757 = vmatprep.subr.mxu0 0.0
    %1758 = vmatpush1.msra.mxu0 0.0
    %1759 = vmatprep.subr.mxu0 0.0
    %1760 = vmatpush1.msra.mxu0 0.0
    %1761 = vmatprep.subr.mxu0 0.0
    %1762 = vmatpush1.msra.mxu0 0.0
    %1763 = vmatprep.subr.mxu0 0.0
    %1764 = vmatpush1.msra.mxu0 0.0
    %1765 = vmatprep.subr.mxu0 0.0
    %1766 = vmatpush1.msra.mxu0 0.0
    %1767 = vmatprep.subr.mxu0 0.0
    %1768 = vmatpush1.msra.mxu0 0.0
    %1769 = vmatprep.subr.mxu0 0.0
    %1770 = vmatpush1.msra.mxu0 0.0
    %1771 = vmatprep.subr.mxu0 0.0
    %1772 = vmatpush1.msra.mxu0 0.0
    %1773 = vmatprep.subr.mxu0 0.0
    %1774 = vmatpush1.msra.mxu0 0.0
    %1775 = vmatprep.subr.mxu0 0.0
    %1776 = vmatpush1.msra.mxu0 0.0
    %1777 = vmatprep.subr.mxu0 0.0
    %1778 = vmatpush1.msra.mxu0 0.0
    %1779 = vmatprep.subr.mxu0 0.0
    %1780 = vmatpush1.msra.mxu0 0.0
    %1781 = vmatprep.subr.mxu0 0.0
    %1782 = vmatpush1.msra.mxu0 0.0
    %1783 = vmatprep.subr.mxu0 0.0
    %1784 = vmatpush1.msra.mxu0 0.0
    %1785 = vmatprep.subr.mxu0 0.0
    %1786 = vmatpush1.msra.mxu0 0.0
    %1787 = vmatprep.subr.mxu0 0.0
    %1788 = vmatpush1.msra.mxu0 0.0
    %1789 = vmatprep.subr.mxu0 0.0
    %1790 = vmatpush1.msra.mxu0 0.0
    %1791 = vmatprep.subr.mxu0 0.0
    %1792 = vmatpush1.msra.mxu0 0.0
    %1793 = vmatprep.subr.mxu0 0.0
    %1794 = vmatpush1.msra.mxu0 0.0
    %1795 = vmatprep.subr.mxu0 0.0
    %1796 = vmatpush1.msra.mxu0 0.0
    %1797 = vmatprep.subr.mxu0 0.0
    %1798 = vmatpush1.msra.mxu0 0.0
    %1799 = vmatprep.subr.mxu0 0.0
    %1800 = vmatpush1.msra.mxu0 0.0
    %1801 = vmatprep.subr.mxu0 0.0
    %1802 = vmatpush1.msra.mxu0 0.0
    %1803 = vmatprep.subr.mxu0 0.0
    %1804 = vmatpush1.msra.mxu0 0.0
    %1805 = vmatprep.subr.mxu0 0.0
    %1806 = vmatpush1.msra.mxu0 0.0
    %1807 = vmatprep.subr.mxu0 0.0
    %1808 = vmatpush1.msra.mxu0 0.0
    %1809 = vmatprep.subr.mxu0 0.0
    %1810 = vmatpush1.msra.mxu0 0.0
    %1811 = vmatprep.subr.mxu0 0.0
    %1812 = vmatpush1.msra.mxu0 0.0
    %1813 = vmatprep.subr.mxu0 0.0
    %1814 = vmatpush1.msra.mxu0 0.0
    %1815 = vmatprep.subr.mxu0 0.0
    %1816 = vmatpush1.msra.mxu0 0.0
    %1817 = vmatprep.mubr.f32.mxu0 0.0
    %1818 = vmatmul.mubr.f32.gmra.mrb[0].mxu0 %v1748
    %v1819 = vpop.f32.mrb[0].mxu0
    %v1820 = vadd.f32 0.0, %v1819
    %v1821 = vpop.f32.mrb[0].mxu0
    %1822 = vmatprep.mubr.f32.mxu0 0.0
    %1823 = vmatmul.mubr.f32.gmra.mrb[0].mxu0 %v1751
    %v1824 = vpop.f32.mrb[0].mxu0
    %v1825 = vadd.f32 0.0, %v1824
    %v1826 = vpop.f32.mrb[0].mxu0
    %1827 = vdwg.mxu0
    %v1829 = vsel %vm1680, %v1743, 0
    %v1832 = vsel %vm1680, %v1744, 0
    %1834 = vmatprep.subr.mxu0 0.0
    %1835 = vmatpush1.msra.mxu0 %v1319
    %1836 = vmatprep.subr.mxu0 0.0
    %1837 = vmatpush1.msra.mxu0 %v1324
    %1838 = vmatprep.subr.mxu0 0.0
    %1839 = vmatpush1.msra.mxu0 0.0
    %1840 = vmatprep.subr.mxu0 0.0
    %1841 = vmatpush1.msra.mxu0 0.0
    %1842 = vmatprep.subr.mxu0 0.0
    %1843 = vmatpush1.msra.mxu0 0.0
    %1844 = vmatprep.subr.mxu0 0.0
    %1845 = vmatpush1.msra.mxu0 0.0
    %1846 = vmatprep.subr.mxu0 0.0
    %1847 = vmatpush1.msra.mxu0 0.0
    %1848 = vmatprep.subr.mxu0 0.0
    %1849 = vmatpush1.msra.mxu0 0.0
    %1850 = vmatprep.subr.mxu0 0.0
    %1851 = vmatpush1.msra.mxu0 0.0
    %1852 = vmatprep.subr.mxu0 0.0
    %1853 = vmatpush1.msra.mxu0 0.0
    %1854 = vmatprep.subr.mxu0 0.0
    %1855 = vmatpush1.msra.mxu0 0.0
    %1856 = vmatprep.subr.mxu0 0.0
    %1857 = vmatpush1.msra.mxu0 0.0
    %1858 = vmatprep.subr.mxu0 0.0
    %1859 = vmatpush1.msra.mxu0 0.0
    %1860 = vmatprep.subr.mxu0 0.0
    %1861 = vmatpush1.msra.mxu0 0.0
    %1862 = vmatprep.subr.mxu0 0.0
    %1863 = vmatpush1.msra.mxu0 0.0
    %1864 = vmatprep.subr.mxu0 0.0
    %1865 = vmatpush1.msra.mxu0 0.0
    %1866 = vmatprep.subr.mxu0 0.0
    %1867 = vmatpush1.msra.mxu0 0.0
    %1868 = vmatprep.subr.mxu0 0.0
    %1869 = vmatpush1.msra.mxu0 0.0
    %1870 = vmatprep.subr.mxu0 0.0
    %1871 = vmatpush1.msra.mxu0 0.0
    %1872 = vmatprep.subr.mxu0 0.0
    %1873 = vmatpush1.msra.mxu0 0.0
    %1874 = vmatprep.subr.mxu0 0.0
    %1875 = vmatpush1.msra.mxu0 0.0
    %1876 = vmatprep.subr.mxu0 0.0
    %1877 = vmatpush1.msra.mxu0 0.0
    %1878 = vmatprep.subr.mxu0 0.0
    %1879 = vmatpush1.msra.mxu0 0.0
    %1880 = vmatprep.subr.mxu0 0.0
    %1881 = vmatpush1.msra.mxu0 0.0
    %1882 = vmatprep.subr.mxu0 0.0
    %1883 = vmatpush1.msra.mxu0 0.0
    %1884 = vmatprep.subr.mxu0 0.0
    %1885 = vmatpush1.msra.mxu0 0.0
    %1886 = vmatprep.subr.mxu0 0.0
    %1887 = vmatpush1.msra.mxu0 0.0
    %1888 = vmatprep.subr.mxu0 0.0
    %1889 = vmatpush1.msra.mxu0 0.0
    %1890 = vmatprep.subr.mxu0 0.0
    %1891 = vmatpush1.msra.mxu0 0.0
    %1892 = vmatprep.subr.mxu0 0.0
    %1893 = vmatpush1.msra.mxu0 0.0
    %1894 = vmatprep.subr.mxu0 0.0
    %1895 = vmatpush1.msra.mxu0 0.0
    %1896 = vmatprep.subr.mxu0 0.0
    %1897 = vmatpush1.msra.mxu0 0.0
    %1898 = vmatprep.mubr.f32.mxu0 0.0
    %1899 = vmatmul.mubr.f32.gmra.mrb[0].mxu0 %v1829
    %v1900 = vpop.f32.mrb[0].mxu0
    %v1901 = vadd.f32 0.0, %v1900
    %v1902 = vpop.f32.mrb[0].mxu0
    %1903 = vmatprep.mubr.f32.mxu0 0.0
    %1904 = vmatmul.mubr.f32.gmra.mrb[0].mxu0 %v1832
    %v1905 = vpop.f32.mrb[0].mxu0
    %v1906 = vadd.f32 0.0, %v1905
    %v1907 = vpop.f32.mrb[0].mxu0
    %1908 = vdwg.mxu0
    %v1910 = vsel %vm1680, %v1745, 0
    %v1913 = vsel %vm1680, %v1746, 0
    %1915 = vmatprep.subr.mxu0 0.0
    %1916 = vmatpush1.msra.mxu0 %v1394
    %1917 = vmatprep.subr.mxu0 0.0
    %1918 = vmatpush1.msra.mxu0 %v1399
    %1919 = vmatprep.subr.mxu0 0.0
    %1920 = vmatpush1.msra.mxu0 0.0
    %1921 = vmatprep.subr.mxu0 0.0
    %1922 = vmatpush1.msra.mxu0 0.0
    %1923 = vmatprep.subr.mxu0 0.0
    %1924 = vmatpush1.msra.mxu0 0.0
    %1925 = vmatprep.subr.mxu0 0.0
    %1926 = vmatpush1.msra.mxu0 0.0
    %1927 = vmatprep.subr.mxu0 0.0
    %1928 = vmatpush1.msra.mxu0 0.0
    %1929 = vmatprep.subr.mxu0 0.0
    %1930 = vmatpush1.msra.mxu0 0.0
    %1931 = vmatprep.subr.mxu0 0.0
    %1932 = vmatpush1.msra.mxu0 0.0
    %1933 = vmatprep.subr.mxu0 0.0
    %1934 = vmatpush1.msra.mxu0 0.0
    %1935 = vmatprep.subr.mxu0 0.0
    %1936 = vmatpush1.msra.mxu0 0.0
    %1937 = vmatprep.subr.mxu0 0.0
    %1938 = vmatpush1.msra.mxu0 0.0
    %1939 = vmatprep.subr.mxu0 0.0
    %1940 = vmatpush1.msra.mxu0 0.0
    %1941 = vmatprep.subr.mxu0 0.0
    %1942 = vmatpush1.msra.mxu0 0.0
    %1943 = vmatprep.subr.mxu0 0.0
    %1944 = vmatpush1.msra.mxu0 0.0
    %1945 = vmatprep.subr.mxu0 0.0
    %1946 = vmatpush1.msra.mxu0 0.0
    %1947 = vmatprep.subr.mxu0 0.0
    %1948 = vmatpush1.msra.mxu0 0.0
    %1949 = vmatprep.subr.mxu0 0.0
    %1950 = vmatpush1.msra.mxu0 0.0
    %1951 = vmatprep.subr.mxu0 0.0
    %1952 = vmatpush1.msra.mxu0 0.0
    %1953 = vmatprep.subr.mxu0 0.0
    %1954 = vmatpush1.msra.mxu0 0.0
    %1955 = vmatprep.subr.mxu0 0.0
    %1956 = vmatpush1.msra.mxu0 0.0
    %1957 = vmatprep.subr.mxu0 0.0
    %1958 = vmatpush1.msra.mxu0 0.0
    %1959 = vmatprep.subr.mxu0 0.0
    %1960 = vmatpush1.msra.mxu0 0.0
    %1961 = vmatprep.subr.mxu0 0.0
    %1962 = vmatpush1.msra.mxu0 0.0
    %1963 = vmatprep.subr.mxu0 0.0
    %1964 = vmatpush1.msra.mxu0 0.0
    %1965 = vmatprep.subr.mxu0 0.0
    %1966 = vmatpush1.msra.mxu0 0.0
    %1967 = vmatprep.subr.mxu0 0.0
    %1968 = vmatpush1.msra.mxu0 0.0
    %1969 = vmatprep.subr.mxu0 0.0
    %1970 = vmatpush1.msra.mxu0 0.0
    %1971 = vmatprep.subr.mxu0 0.0
    %1972 = vmatpush1.msra.mxu0 0.0
    %1973 = vmatprep.subr.mxu0 0.0
    %1974 = vmatpush1.msra.mxu0 0.0
    %1975 = vmatprep.subr.mxu0 0.0
    %1976 = vmatpush1.msra.mxu0 0.0
    %1977 = vmatprep.subr.mxu0 0.0
    %1978 = vmatpush1.msra.mxu0 0.0
    %1979 = vmatprep.mubr.f32.mxu0 0.0
    %1980 = vmatmul.mubr.f32.gmra.mrb[0].mxu0 %v1910
    %v1981 = vpop.f32.mrb[0].mxu0
    %v1982 = vadd.f32 0.0, %v1981
    %v1983 = vpop.f32.mrb[0].mxu0
    %1984 = vmatprep.mubr.f32.mxu0 0.0
    %1985 = vmatmul.mubr.f32.gmra.mrb[0].mxu0 %v1913
    %v1986 = vpop.f32.mrb[0].mxu0
    %v1987 = vadd.f32 0.0, %v1986
    %v1988 = vpop.f32.mrb[0].mxu0
    %1989 = vdwg.mxu0
    %v1990 = vld [vmem:[%s31] sm:$0xff]
    %v1991 = vld [vmem:[%s31 + $0x8] sm:$0xff]
    %v1992 = vld [vmem:[%s31 + $0x10] sm:$0xff]
    %v1993 = vld [vmem:[%s31 + $0x18] sm:$0xff]
    %v1994 = vld [vmem:[%s31 + $0x20] sm:$0xff]
    %v1995 = vld [vmem:[%s31 + $0x28] sm:$0xff]
    %v1996 = vld [vmem:[%s31 + $0x30] sm:$0xff]
    %v1997 = vld [vmem:[%s31 + $0x38] sm:$0xff]
    %v1998 = vld [vmem:[%s31 + $0x40] sm:$0xff]
    %v1999 = vld [vmem:[%s31 + $0x48] sm:$0xff]
    %v2000 = vld [vmem:[%s31 + $0x50] sm:$0xff]
    %v2001 = vld [vmem:[%s31 + $0x58] sm:$0xff]
    %v2003 = vsel %vm1402, %v1820, 0
    %v2006 = vsel %vm1402, %v1825, 0
    %2008 = vmatprep.subr.mxu0 0.0
    %2009 = vmatpush1.msra.mxu0 %v1990
    %2010 = vmatprep.subr.mxu0 0.0
    %2011 = vmatpush1.msra.mxu0 %v1991
    %2012 = vmatprep.subr.mxu0 0.0
    %2013 = vmatpush1.msra.mxu0 %v1992
    %2014 = vmatprep.subr.mxu0 0.0
    %2015 = vmatpush1.msra.mxu0 %v1993
    %2016 = vmatprep.subr.mxu0 0.0
    %2017 = vmatpush1.msra.mxu0 0.0
    %2018 = vmatprep.subr.mxu0 0.0
    %2019 = vmatpush1.msra.mxu0 0.0
    %2020 = vmatprep.subr.mxu0 0.0
    %2021 = vmatpush1.msra.mxu0 0.0
    %2022 = vmatprep.subr.mxu0 0.0
    %2023 = vmatpush1.msra.mxu0 0.0
    %2024 = vmatprep.subr.mxu0 0.0
    %2025 = vmatpush1.msra.mxu0 0.0
    %2026 = vmatprep.subr.mxu0 0.0
    %2027 = vmatpush1.msra.mxu0 0.0
    %2028 = vmatprep.subr.mxu0 0.0
    %2029 = vmatpush1.msra.mxu0 0.0
    %2030 = vmatprep.subr.mxu0 0.0
    %2031 = vmatpush1.msra.mxu0 0.0
    %2032 = vmatprep.subr.mxu0 0.0
    %2033 = vmatpush1.msra.mxu0 0.0
    %2034 = vmatprep.subr.mxu0 0.0
    %2035 = vmatpush1.msra.mxu0 0.0
    %2036 = vmatprep.subr.mxu0 0.0
    %2037 = vmatpush1.msra.mxu0 0.0
    %2038 = vmatprep.subr.mxu0 0.0
    %2039 = vmatpush1.msra.mxu0 0.0
    %2040 = vmatprep.subr.mxu0 0.0
    %2041 = vmatpush1.msra.mxu0 0.0
    %2042 = vmatprep.subr.mxu0 0.0
    %2043 = vmatpush1.msra.mxu0 0.0
    %2044 = vmatprep.subr.mxu0 0.0
    %2045 = vmatpush1.msra.mxu0 0.0
    %2046 = vmatprep.subr.mxu0 0.0
    %2047 = vmatpush1.msra.mxu0 0.0
    %2048 = vmatprep.subr.mxu0 0.0
    %2049 = vmatpush1.msra.mxu0 0.0
    %2050 = vmatprep.subr.mxu0 0.0
    %2051 = vmatpush1.msra.mxu0 0.0
    %2052 = vmatprep.subr.mxu0 0.0
    %2053 = vmatpush1.msra.mxu0 0.0
    %2054 = vmatprep.subr.mxu0 0.0
    %2055 = vmatpush1.msra.mxu0 0.0
    %2056 = vmatprep.subr.mxu0 0.0
    %2057 = vmatpush1.msra.mxu0 0.0
    %2058 = vmatprep.subr.mxu0 0.0
    %2059 = vmatpush1.msra.mxu0 0.0
    %2060 = vmatprep.subr.mxu0 0.0
    %2061 = vmatpush1.msra.mxu0 0.0
    %2062 = vmatprep.subr.mxu0 0.0
    %2063 = vmatpush1.msra.mxu0 0.0
    %2064 = vmatprep.subr.mxu0 0.0
    %2065 = vmatpush1.msra.mxu0 0.0
    %2066 = vmatprep.subr.mxu0 0.0
    %2067 = vmatpush1.msra.mxu0 0.0
    %2068 = vmatprep.subr.mxu0 0.0
    %2069 = vmatpush1.msra.mxu0 0.0
    %2070 = vmatprep.subr.mxu0 0.0
    %2071 = vmatpush1.msra.mxu0 0.0
    %2072 = vmatprep.mubr.f32.mxu0 0.0
    %2073 = vmatmul.mubr.f32.gmra.mrb[0].mxu0 %v2003
    %v2074 = vpop.f32.mrb[0].mxu0
    %v2075 = vadd.f32 0.0, %v2074
    %v2076 = vpop.f32.mrb[0].mxu0
    %2077 = vmatprep.mubr.f32.mxu0 0.0
    %2078 = vmatmul.mubr.f32.gmra.mrb[0].mxu0 %v2006
    %v2079 = vpop.f32.mrb[0].mxu0
    %v2080 = vadd.f32 0.0, %v2079
    %v2081 = vpop.f32.mrb[0].mxu0
    %2082 = vdwg.mxu0
    %v2084 = vsel %vm1402, %v1901, 0
    %v2087 = vsel %vm1402, %v1906, 0
    %2089 = vmatprep.subr.mxu0 0.0
    %2090 = vmatpush1.msra.mxu0 %v1994
    %2091 = vmatprep.subr.mxu0 0.0
    %2092 = vmatpush1.msra.mxu0 %v1995
    %2093 = vmatprep.subr.mxu0 0.0
    %2094 = vmatpush1.msra.mxu0 %v1996
    %2095 = vmatprep.subr.mxu0 0.0
    %2096 = vmatpush1.msra.mxu0 %v1997
    %2097 = vmatprep.subr.mxu0 0.0
    %2098 = vmatpush1.msra.mxu0 0.0
    %2099 = vmatprep.subr.mxu0 0.0
    %2100 = vmatpush1.msra.mxu0 0.0
    %2101 = vmatprep.subr.mxu0 0.0
    %2102 = vmatpush1.msra.mxu0 0.0
    %2103 = vmatprep.subr.mxu0 0.0
    %2104 = vmatpush1.msra.mxu0 0.0
    %2105 = vmatprep.subr.mxu0 0.0
    %2106 = vmatpush1.msra.mxu0 0.0
    %2107 = vmatprep.subr.mxu0 0.0
    %2108 = vmatpush1.msra.mxu0 0.0
    %2109 = vmatprep.subr.mxu0 0.0
    %2110 = vmatpush1.msra.mxu0 0.0
    %2111 = vmatprep.subr.mxu0 0.0
    %2112 = vmatpush1.msra.mxu0 0.0
    %2113 = vmatprep.subr.mxu0 0.0
    %2114 = vmatpush1.msra.mxu0 0.0
    %2115 = vmatprep.subr.mxu0 0.0
    %2116 = vmatpush1.msra.mxu0 0.0
    %2117 = vmatprep.subr.mxu0 0.0
    %2118 = vmatpush1.msra.mxu0 0.0
    %2119 = vmatprep.subr.mxu0 0.0
    %2120 = vmatpush1.msra.mxu0 0.0
    %2121 = vmatprep.subr.mxu0 0.0
    %2122 = vmatpush1.msra.mxu0 0.0
    %2123 = vmatprep.subr.mxu0 0.0
    %2124 = vmatpush1.msra.mxu0 0.0
    %2125 = vmatprep.subr.mxu0 0.0
    %2126 = vmatpush1.msra.mxu0 0.0
    %2127 = vmatprep.subr.mxu0 0.0
    %2128 = vmatpush1.msra.mxu0 0.0
    %2129 = vmatprep.subr.mxu0 0.0
    %2130 = vmatpush1.msra.mxu0 0.0
    %2131 = vmatprep.subr.mxu0 0.0
    %2132 = vmatpush1.msra.mxu0 0.0
    %2133 = vmatprep.subr.mxu0 0.0
    %2134 = vmatpush1.msra.mxu0 0.0
    %2135 = vmatprep.subr.mxu0 0.0
    %2136 = vmatpush1.msra.mxu0 0.0
    %2137 = vmatprep.subr.mxu0 0.0
    %2138 = vmatpush1.msra.mxu0 0.0
    %2139 = vmatprep.subr.mxu0 0.0
    %2140 = vmatpush1.msra.mxu0 0.0
    %2141 = vmatprep.subr.mxu0 0.0
    %2142 = vmatpush1.msra.mxu0 0.0
    %2143 = vmatprep.subr.mxu0 0.0
    %2144 = vmatpush1.msra.mxu0 0.0
    %2145 = vmatprep.subr.mxu0 0.0
    %2146 = vmatpush1.msra.mxu0 0.0
    %2147 = vmatprep.subr.mxu0 0.0
    %2148 = vmatpush1.msra.mxu0 0.0
    %2149 = vmatprep.subr.mxu0 0.0
    %2150 = vmatpush1.msra.mxu0 0.0
    %2151 = vmatprep.subr.mxu0 0.0
    %2152 = vmatpush1.msra.mxu0 0.0
    %2153 = vmatprep.mubr.f32.mxu0 0.0
    %2154 = vmatmul.mubr.f32.gmra.mrb[0].mxu0 %v2084
    %v2155 = vpop.f32.mrb[0].mxu0
    %v2156 = vadd.f32 0.0, %v2155
    %v2157 = vpop.f32.mrb[0].mxu0
    %2158 = vmatprep.mubr.f32.mxu0 0.0
    %2159 = vmatmul.mubr.f32.gmra.mrb[0].mxu0 %v2087
    %v2160 = vpop.f32.mrb[0].mxu0
    %v2161 = vadd.f32 0.0, %v2160
    %v2162 = vpop.f32.mrb[0].mxu0
    %2163 = vdwg.mxu0
    %v2165 = vsel %vm1402, %v1982, 0
    %v2168 = vsel %vm1402, %v1987, 0
    %2170 = vmatprep.subr.mxu0 0.0
    %2171 = vmatpush1.msra.mxu0 %v1998
    %2172 = vmatprep.subr.mxu0 0.0
    %2173 = vmatpush1.msra.mxu0 %v1999
    %2174 = vmatprep.subr.mxu0 0.0
    %2175 = vmatpush1.msra.mxu0 %v2000
    %2176 = vmatprep.subr.mxu0 0.0
    %2177 = vmatpush1.msra.mxu0 %v2001
    %2178 = vmatprep.subr.mxu0 0.0
    %2179 = vmatpush1.msra.mxu0 0.0
    %2180 = vmatprep.subr.mxu0 0.0
    %2181 = vmatpush1.msra.mxu0 0.0
    %2182 = vmatprep.subr.mxu0 0.0
    %2183 = vmatpush1.msra.mxu0 0.0
    %2184 = vmatprep.subr.mxu0 0.0
    %2185 = vmatpush1.msra.mxu0 0.0
    %2186 = vmatprep.subr.mxu0 0.0
    %2187 = vmatpush1.msra.mxu0 0.0
    %2188 = vmatprep.subr.mxu0 0.0
    %2189 = vmatpush1.msra.mxu0 0.0
    %2190 = vmatprep.subr.mxu0 0.0
    %2191 = vmatpush1.msra.mxu0 0.0
    %2192 = vmatprep.subr.mxu0 0.0
    %2193 = vmatpush1.msra.mxu0 0.0
    %2194 = vmatprep.subr.mxu0 0.0
    %2195 = vmatpush1.msra.mxu0 0.0
    %2196 = vmatprep.subr.mxu0 0.0
    %2197 = vmatpush1.msra.mxu0 0.0
    %2198 = vmatprep.subr.mxu0 0.0
    %2199 = vmatpush1.msra.mxu0 0.0
    %2200 = vmatprep.subr.mxu0 0.0
    %2201 = vmatpush1.msra.mxu0 0.0
    %2202 = vmatprep.subr.mxu0 0.0
    %2203 = vmatpush1.msra.mxu0 0.0
    %2204 = vmatprep.subr.mxu0 0.0
    %2205 = vmatpush1.msra.mxu0 0.0
    %2206 = vmatprep.subr.mxu0 0.0
    %2207 = vmatpush1.msra.mxu0 0.0
    %2208 = vmatprep.subr.mxu0 0.0
    %2209 = vmatpush1.msra.mxu0 0.0
    %2210 = vmatprep.subr.mxu0 0.0
    %2211 = vmatpush1.msra.mxu0 0.0
    %2212 = vmatprep.subr.mxu0 0.0
    %2213 = vmatpush1.msra.mxu0 0.0
    %2214 = vmatprep.subr.mxu0 0.0
    %2215 = vmatpush1.msra.mxu0 0.0
    %2216 = vmatprep.subr.mxu0 0.0
    %2217 = vmatpush1.msra.mxu0 0.0
    %2218 = vmatprep.subr.mxu0 0.0
    %2219 = vmatpush1.msra.mxu0 0.0
    %2220 = vmatprep.subr.mxu0 0.0
    %2221 = vmatpush1.msra.mxu0 0.0
    %2222 = vmatprep.subr.mxu0 0.0
    %2223 = vmatpush1.msra.mxu0 0.0
    %2224 = vmatprep.subr.mxu0 0.0
    %2225 = vmatpush1.msra.mxu0 0.0
    %2226 = vmatprep.subr.mxu0 0.0
    %2227 = vmatpush1.msra.mxu0 0.0
    %2228 = vmatprep.subr.mxu0 0.0
    %2229 = vmatpush1.msra.mxu0 0.0
    %2230 = vmatprep.subr.mxu0 0.0
    %2231 = vmatpush1.msra.mxu0 0.0
    %2232 = vmatprep.subr.mxu0 0.0
    %2233 = vmatpush1.msra.mxu0 0.0
    %2234 = vmatprep.mubr.f32.mxu0 0.0
    %2235 = vmatmul.mubr.f32.gmra.mrb[0].mxu0 %v2165
    %v2236 = vpop.f32.mrb[0].mxu0
    %v2237 = vadd.f32 0.0, %v2236
    %v2238 = vpop.f32.mrb[0].mxu0
    %2239 = vmatprep.mubr.f32.mxu0 0.0
    %2240 = vmatmul.mubr.f32.gmra.mrb[0].mxu0 %v2168
    %v2241 = vpop.f32.mrb[0].mxu0
    %v2242 = vadd.f32 0.0, %v2241
    %v2243 = vpop.f32.mrb[0].mxu0
    %2244 = vdwg.mxu0
    %v2245 = vadd.f32 %v2075, %v2156
    %v2246 = vadd.f32 %v2245, %v2237
    %v2247 = vadd.f32 %v2080, %v2161
    %v2248 = vadd.f32 %v2247, %v2242
    %v2249 = vadd.f32 %v435, %v2246
    %v2250 = vadd.f32 %v436, %v2248
    %s2251 = sld [smem:[#allocation2 + $0x1]]
    %v2252 = vld [vmem:[%s33] sm:$0x1]
    %v2253 = vld [vmem:[%s35] sm:$0x1]
    %v2254 = vstv %s2251
    %v2255 = vmul.f32 %v2254, %v2249
    %v2256 = vmul.f32 %v2254, %v2250
    %v2257 = vtanh.pop %v2255
    %v2258 = vtanh.pop %v2256
    %v2260 = vlaneseq
    %v2261 = vshrl.u32 %v2260, 7
    %v2262 = vsub.s32 0, %v2261
    %v2263 = vrot.slane %v2252, %v2262
    %v2265 = vmul.f32 %v2257, %v2263
    %v2266 = vmul.f32 %v2258, %v2263
    %v2268 = vlaneseq
    %v2269 = vshrl.u32 %v2268, 7
    %v2270 = vsub.s32 0, %v2269
    %v2271 = vrot.slane %v2253, %v2270
    %v2273 = vadd.f32 %v2265, %v2271
    %v2274 = vadd.f32 %v2266, %v2271
    %v2275 = vld [vmem:[%s37] sm:$0xff]
    %v2276 = vld [vmem:[%s37 + $0x8] sm:$0xff]
    %v2277 = vld [vmem:[%s37 + $0x10] sm:$0xff]
    %v2278 = vld [vmem:[%s37 + $0x18] sm:$0xff]
    %v2279 = vld [vmem:[%s37 + $0x20] sm:$0xff]
    %v2280 = vld [vmem:[%s37 + $0x28] sm:$0xff]
    %v2281 = vld [vmem:[%s37 + $0x30] sm:$0xff]
    %v2282 = vld [vmem:[%s37 + $0x38] sm:$0xff]
    %v2283 = vld [vmem:[%s37 + $0x40] sm:$0xff]
    %v2284 = vld [vmem:[%s37 + $0x48] sm:$0xff]
    %v2285 = vld [vmem:[%s37 + $0x50] sm:$0xff]
    %v2286 = vld [vmem:[%s37 + $0x58] sm:$0xff]
    %v2287 = vld [vmem:[%s37 + $0x60] sm:$0xff]
    %v2288 = vld [vmem:[%s37 + $0x68] sm:$0xff]
    %v2289 = vld [vmem:[%s37 + $0x70] sm:$0xff]
    %v2290 = vld [vmem:[%s37 + $0x78] sm:$0xff]
    %v2291 = vld [vmem:[%s39] sm:$0x1]
    %v2293 = vlaneseq
    %v2294 = vshrl.u32 %v2293, 7
    %v2295 = vsub.s32 0, %v2294
    %v2296 = vrot.slane %v2291, %v2295
    %2298 = vmatprep.subr.mxu0 0.0
    %2299 = vmatpush1.msra.mxu0 %v2275
    %2300 = vmatprep.subr.mxu0 0.0
    %2301 = vmatpush1.msra.mxu0 %v2276
    %2302 = vmatprep.subr.mxu0 0.0
    %2303 = vmatpush1.msra.mxu0 %v2277
    %2304 = vmatprep.subr.mxu0 0.0
    %2305 = vmatpush1.msra.mxu0 %v2278
    %2306 = vmatprep.subr.mxu0 0.0
    %2307 = vmatpush1.msra.mxu0 %v2279
    %2308 = vmatprep.subr.mxu0 0.0
    %2309 = vmatpush1.msra.mxu0 %v2280
    %2310 = vmatprep.subr.mxu0 0.0
    %2311 = vmatpush1.msra.mxu0 %v2281
    %2312 = vmatprep.subr.mxu0 0.0
    %2313 = vmatpush1.msra.mxu0 %v2282
    %2314 = vmatprep.subr.mxu0 0.0
    %2315 = vmatpush1.msra.mxu0 %v2283
    %2316 = vmatprep.subr.mxu0 0.0
    %2317 = vmatpush1.msra.mxu0 %v2284
    %2318 = vmatprep.subr.mxu0 0.0
    %2319 = vmatpush1.msra.mxu0 %v2285
    %2320 = vmatprep.subr.mxu0 0.0
    %2321 = vmatpush1.msra.mxu0 %v2286
    %2322 = vmatprep.subr.mxu0 0.0
    %2323 = vmatpush1.msra.mxu0 %v2287
    %2324 = vmatprep.subr.mxu0 0.0
    %2325 = vmatpush1.msra.mxu0 %v2288
    %2326 = vmatprep.subr.mxu0 0.0
    %2327 = vmatpush1.msra.mxu0 %v2289
    %2328 = vmatprep.subr.mxu0 0.0
    %2329 = vmatpush1.msra.mxu0 %v2290
    %2330 = vmatprep.subr.mxu0 0.0
    %2331 = vmatpush1.msra.mxu0 0.0
    %2332 = vmatprep.subr.mxu0 0.0
    %2333 = vmatpush1.msra.mxu0 0.0
    %2334 = vmatprep.subr.mxu0 0.0
    %2335 = vmatpush1.msra.mxu0 0.0
    %2336 = vmatprep.subr.mxu0 0.0
    %2337 = vmatpush1.msra.mxu0 0.0
    %2338 = vmatprep.subr.mxu0 0.0
    %2339 = vmatpush1.msra.mxu0 0.0
    %2340 = vmatprep.subr.mxu0 0.0
    %2341 = vmatpush1.msra.mxu0 0.0
    %2342 = vmatprep.subr.mxu0 0.0
    %2343 = vmatpush1.msra.mxu0 0.0
    %2344 = vmatprep.subr.mxu0 0.0
    %2345 = vmatpush1.msra.mxu0 0.0
    %2346 = vmatprep.subr.mxu0 0.0
    %2347 = vmatpush1.msra.mxu0 0.0
    %2348 = vmatprep.subr.mxu0 0.0
    %2349 = vmatpush1.msra.mxu0 0.0
    %2350 = vmatprep.subr.mxu0 0.0
    %2351 = vmatpush1.msra.mxu0 0.0
    %2352 = vmatprep.subr.mxu0 0.0
    %2353 = vmatpush1.msra.mxu0 0.0
    %2354 = vmatprep.subr.mxu0 0.0
    %2355 = vmatpush1.msra.mxu0 0.0
    %2356 = vmatprep.subr.mxu0 0.0
    %2357 = vmatpush1.msra.mxu0 0.0
    %2358 = vmatprep.subr.mxu0 0.0
    %2359 = vmatpush1.msra.mxu0 0.0
    %2360 = vmatprep.subr.mxu0 0.0
    %2361 = vmatpush1.msra.mxu0 0.0
    %2362 = vmatprep.mubr.f32.mxu0 0.0
    %2363 = vmatmul.mubr.f32.gmra.mrb[0].mxu0 %v2273
    %v2364 = vpop.f32.mrb[0].mxu0
    %v2365 = vadd.f32 %v2296, %v2364
    %v2366 = vpop.f32.mrb[0].mxu0
    %2367 = vmatprep.mubr.f32.mxu0 0.0
    %2368 = vmatmul.mubr.f32.gmra.mrb[0].mxu0 %v2274
    %v2369 = vpop.f32.mrb[0].mxu0
    %v2370 = vadd.f32 %v2296, %v2369
    %v2371 = vpop.f32.mrb[0].mxu0
    %2372 = vdwg.mxu0
    %v2373 = vmul.f32 %v2365, 0.5
    %v2374 = vmul.f32 %v2370, 0.5
    %v2375 = vmul.f32 %v2365, 0.044715
    %v2376 = vmul.f32 %v2370, 0.044715
    %v2377 = vmul.f32 %v2375, %v2365
    %v2378 = vmul.f32 %v2376, %v2370
    %v2379 = vmul.f32 %v2377, %v2365
    %v2380 = vmul.f32 %v2378, %v2370
    %v2381 = vadd.f32 %v2365, %v2379
    %v2382 = vadd.f32 %v2370, %v2380
    %v2383 = vmul.f32 %v2381, 0.7978846
    %v2384 = vmul.f32 %v2382, 0.7978846
    %v2385 = vtanh.pop %v2383
    %v2386 = vtanh.pop %v2384
    %v2387 = vadd.f32 %v2385, 1.0
    %v2388 = vadd.f32 %v2386, 1.0
    %v2389 = vmul.f32 %v2373, %v2387
    %v2390 = vmul.f32 %v2374, %v2388
    %v2391 = vld [vmem:[%s41] sm:$0xff]
    %v2392 = vld [vmem:[%s41 + $0x8] sm:$0xff]
    %v2393 = vld [vmem:[%s41 + $0x10] sm:$0xff]
    %v2394 = vld [vmem:[%s41 + $0x18] sm:$0xff]
    %v2395 = vld [vmem:[%s41 + $0x20] sm:$0xff]
    %v2396 = vld [vmem:[%s41 + $0x28] sm:$0xff]
    %v2397 = vld [vmem:[%s41 + $0x30] sm:$0xff]
    %v2398 = vld [vmem:[%s41 + $0x38] sm:$0xff]
    %v2399 = vld [vmem:[%s41 + $0x40] sm:$0xff]
    %v2400 = vld [vmem:[%s41 + $0x48] sm:$0xff]
    %v2401 = vld [vmem:[%s41 + $0x50] sm:$0xff]
    %v2402 = vld [vmem:[%s41 + $0x58] sm:$0xff]
    %v2403 = vld [vmem:[%s41 + $0x60] sm:$0xff]
    %v2404 = vld [vmem:[%s41 + $0x68] sm:$0xff]
    %v2405 = vld [vmem:[%s41 + $0x70] sm:$0xff]
    %v2406 = vld [vmem:[%s41 + $0x78] sm:$0xff]
    %v2407 = vld [vmem:[%s43] sm:$0x1]
    %v2409 = vlaneseq
    %v2410 = vshrl.u32 %v2409, 7
    %v2411 = vsub.s32 0, %v2410
    %v2412 = vrot.slane %v2407, %v2411
    %2414 = vmatprep.subr.mxu0 0.0
    %2415 = vmatpush1.msra.mxu0 %v2391
    %2416 = vmatprep.subr.mxu0 0.0
    %2417 = vmatpush1.msra.mxu0 %v2392
    %2418 = vmatprep.subr.mxu0 0.0
    %2419 = vmatpush1.msra.mxu0 %v2393
    %2420 = vmatprep.subr.mxu0 0.0
    %2421 = vmatpush1.msra.mxu0 %v2394
    %2422 = vmatprep.subr.mxu0 0.0
    %2423 = vmatpush1.msra.mxu0 %v2395
    %2424 = vmatprep.subr.mxu0 0.0
    %2425 = vmatpush1.msra.mxu0 %v2396
    %2426 = vmatprep.subr.mxu0 0.0
    %2427 = vmatpush1.msra.mxu0 %v2397
    %2428 = vmatprep.subr.mxu0 0.0
    %2429 = vmatpush1.msra.mxu0 %v2398
    %2430 = vmatprep.subr.mxu0 0.0
    %2431 = vmatpush1.msra.mxu0 %v2399
    %2432 = vmatprep.subr.mxu0 0.0
    %2433 = vmatpush1.msra.mxu0 %v2400
    %2434 = vmatprep.subr.mxu0 0.0
    %2435 = vmatpush1.msra.mxu0 %v2401
    %2436 = vmatprep.subr.mxu0 0.0
    %2437 = vmatpush1.msra.mxu0 %v2402
    %2438 = vmatprep.subr.mxu0 0.0
    %2439 = vmatpush1.msra.mxu0 %v2403
    %2440 = vmatprep.subr.mxu0 0.0
    %2441 = vmatpush1.msra.mxu0 %v2404
    %2442 = vmatprep.subr.mxu0 0.0
    %2443 = vmatpush1.msra.mxu0 %v2405
    %2444 = vmatprep.subr.mxu0 0.0
    %2445 = vmatpush1.msra.mxu0 %v2406
    %2446 = vmatprep.subr.mxu0 0.0
    %2447 = vmatpush1.msra.mxu0 0.0
    %2448 = vmatprep.subr.mxu0 0.0
    %2449 = vmatpush1.msra.mxu0 0.0
    %2450 = vmatprep.subr.mxu0 0.0
    %2451 = vmatpush1.msra.mxu0 0.0
    %2452 = vmatprep.subr.mxu0 0.0
    %2453 = vmatpush1.msra.mxu0 0.0
    %2454 = vmatprep.subr.mxu0 0.0
    %2455 = vmatpush1.msra.mxu0 0.0
    %2456 = vmatprep.subr.mxu0 0.0
    %2457 = vmatpush1.msra.mxu0 0.0
    %2458 = vmatprep.subr.mxu0 0.0
    %2459 = vmatpush1.msra.mxu0 0.0
    %2460 = vmatprep.subr.mxu0 0.0
    %2461 = vmatpush1.msra.mxu0 0.0
    %2462 = vmatprep.subr.mxu0 0.0
    %2463 = vmatpush1.msra.mxu0 0.0
    %2464 = vmatprep.subr.mxu0 0.0
    %2465 = vmatpush1.msra.mxu0 0.0
    %2466 = vmatprep.subr.mxu0 0.0
    %2467 = vmatpush1.msra.mxu0 0.0
    %2468 = vmatprep.subr.mxu0 0.0
    %2469 = vmatpush1.msra.mxu0 0.0
    %2470 = vmatprep.subr.mxu0 0.0
    %2471 = vmatpush1.msra.mxu0 0.0
    %2472 = vmatprep.subr.mxu0 0.0
    %2473 = vmatpush1.msra.mxu0 0.0
    %2474 = vmatprep.subr.mxu0 0.0
    %2475 = vmatpush1.msra.mxu0 0.0
    %2476 = vmatprep.subr.mxu0 0.0
    %2477 = vmatpush1.msra.mxu0 0.0
    %2478 = vmatprep.mubr.f32.mxu0 0.0
    %2479 = vmatmul.mubr.f32.gmra.mrb[0].mxu0 %v2389
    %v2480 = vpop.f32.mrb[0].mxu0
    %v2481 = vadd.f32 %v2412, %v2480
    %v2482 = vpop.f32.mrb[0].mxu0
    %2483 = vmatprep.mubr.f32.mxu0 0.0
    %2484 = vmatmul.mubr.f32.gmra.mrb[0].mxu0 %v2390
    %v2485 = vpop.f32.mrb[0].mxu0
    %v2486 = vadd.f32 %v2412, %v2485
    %v2487 = vpop.f32.mrb[0].mxu0
    %2488 = vdwg.mxu0
    %v2489 = vmul.f32 %v2481, 0.5
    %v2490 = vmul.f32 %v2486, 0.5
    %v2491 = vmul.f32 %v2481, 0.044715
    %v2492 = vmul.f32 %v2486, 0.044715
    %v2493 = vmul.f32 %v2491, %v2481
    %v2494 = vmul.f32 %v2492, %v2486
    %v2495 = vmul.f32 %v2493, %v2481
    %v2496 = vmul.f32 %v2494, %v2486
    %v2497 = vadd.f32 %v2481, %v2495
    %v2498 = vadd.f32 %v2486, %v2496
    %v2499 = vmul.f32 %v2497, 0.7978846
    %v2500 = vmul.f32 %v2498, 0.7978846
    %v2501 = vtanh.pop %v2499
    %v2502 = vtanh.pop %v2500
    %v2503 = vadd.f32 %v2501, 1.0
    %v2504 = vadd.f32 %v2502, 1.0
    %v2505 = vmul.f32 %v2489, %v2503
    %v2506 = vmul.f32 %v2490, %v2504
    %v2507 = vld [vmem:[%s45] sm:$0xff]
    %v2508 = vld [vmem:[%s45 + $0x8] sm:$0xff]
    %v2509 = vld [vmem:[%s45 + $0x10] sm:$0xff]
    %v2510 = vld [vmem:[%s45 + $0x18] sm:$0xff]
    %v2511 = vld [vmem:[%s45 + $0x20] sm:$0xff]
    %v2512 = vld [vmem:[%s45 + $0x28] sm:$0xff]
    %v2513 = vld [vmem:[%s45 + $0x30] sm:$0xff]
    %v2514 = vld [vmem:[%s45 + $0x38] sm:$0xff]
    %v2515 = vld [vmem:[%s45 + $0x40] sm:$0xff]
    %v2516 = vld [vmem:[%s45 + $0x48] sm:$0xff]
    %v2517 = vld [vmem:[%s45 + $0x50] sm:$0xff]
    %v2518 = vld [vmem:[%s45 + $0x58] sm:$0xff]
    %v2519 = vld [vmem:[%s45 + $0x60] sm:$0xff]
    %v2520 = vld [vmem:[%s45 + $0x68] sm:$0xff]
    %v2521 = vld [vmem:[%s45 + $0x70] sm:$0xff]
    %v2522 = vld [vmem:[%s45 + $0x78] sm:$0xff]
    %v2523 = vld [vmem:[%s7] sm:$0xff]
    %v2524 = vld [vmem:[%s7 + $0x8] sm:$0xff]
    %v2525 = vld [vmem:[%s47] sm:$0xff]
    %v2526 = vld [vmem:[%s47 + $0x8] sm:$0xff]
    %v2527 = vld [vmem:[%s47 + $0x10] sm:$0xff]
    %v2528 = vld [vmem:[%s47 + $0x18] sm:$0xff]
    %v2529 = vld [vmem:[%s47 + $0x20] sm:$0xff]
    %v2530 = vld [vmem:[%s47 + $0x28] sm:$0xff]
    %v2531 = vld [vmem:[%s47 + $0x30] sm:$0xff]
    %v2532 = vld [vmem:[%s47 + $0x38] sm:$0xff]
    %v2533 = vld [vmem:[%s47 + $0x40] sm:$0xff]
    %v2534 = vld [vmem:[%s47 + $0x48] sm:$0xff]
    %v2535 = vld [vmem:[%s47 + $0x50] sm:$0xff]
    %v2536 = vld [vmem:[%s47 + $0x58] sm:$0xff]
    %v2537 = vld [vmem:[%s47 + $0x60] sm:$0xff]
    %v2538 = vld [vmem:[%s47 + $0x68] sm:$0xff]
    %v2539 = vld [vmem:[%s47 + $0x70] sm:$0xff]
    %v2540 = vld [vmem:[%s47 + $0x78] sm:$0xff]
    %2541 = vmatprep.subr.mxu0 0.0
    %2542 = vmatpush1.msra.mxu0 %v2525
    %2543 = vmatprep.subr.mxu0 0.0
    %2544 = vmatpush1.msra.mxu0 %v2526
    %2545 = vmatprep.subr.mxu0 0.0
    %2546 = vmatpush1.msra.mxu0 %v2527
    %2547 = vmatprep.subr.mxu0 0.0
    %2548 = vmatpush1.msra.mxu0 %v2528
    %2549 = vmatprep.subr.mxu0 0.0
    %2550 = vmatpush1.msra.mxu0 %v2529
    %2551 = vmatprep.subr.mxu0 0.0
    %2552 = vmatpush1.msra.mxu0 %v2530
    %2553 = vmatprep.subr.mxu0 0.0
    %2554 = vmatpush1.msra.mxu0 %v2531
    %2555 = vmatprep.subr.mxu0 0.0
    %2556 = vmatpush1.msra.mxu0 %v2532
    %2557 = vmatprep.subr.mxu0 0.0
    %2558 = vmatpush1.msra.mxu0 %v2533
    %2559 = vmatprep.subr.mxu0 0.0
    %2560 = vmatpush1.msra.mxu0 %v2534
    %2561 = vmatprep.subr.mxu0 0.0
    %2562 = vmatpush1.msra.mxu0 %v2535
    %2563 = vmatprep.subr.mxu0 0.0
    %2564 = vmatpush1.msra.mxu0 %v2536
    %2565 = vmatprep.subr.mxu0 0.0
    %2566 = vmatpush1.msra.mxu0 %v2537
    %2567 = vmatprep.subr.mxu0 0.0
    %2568 = vmatpush1.msra.mxu0 %v2538
    %2569 = vmatprep.subr.mxu0 0.0
    %2570 = vmatpush1.msra.mxu0 %v2539
    %2571 = vmatprep.subr.mxu0 0.0
    %2572 = vmatpush1.msra.mxu0 %v2540
    %2573 = vmatprep.subr.mxu0 0.0
    %2574 = vmatpush1.msra.mxu0 0.0
    %2575 = vmatprep.subr.mxu0 0.0
    %2576 = vmatpush1.msra.mxu0 0.0
    %2577 = vmatprep.subr.mxu0 0.0
    %2578 = vmatpush1.msra.mxu0 0.0
    %2579 = vmatprep.subr.mxu0 0.0
    %2580 = vmatpush1.msra.mxu0 0.0
    %2581 = vmatprep.subr.mxu0 0.0
    %2582 = vmatpush1.msra.mxu0 0.0
    %2583 = vmatprep.subr.mxu0 0.0
    %2584 = vmatpush1.msra.mxu0 0.0
    %2585 = vmatprep.subr.mxu0 0.0
    %2586 = vmatpush1.msra.mxu0 0.0
    %2587 = vmatprep.subr.mxu0 0.0
    %2588 = vmatpush1.msra.mxu0 0.0
    %2589 = vmatprep.subr.mxu0 0.0
    %2590 = vmatpush1.msra.mxu0 0.0
    %2591 = vmatprep.subr.mxu0 0.0
    %2592 = vmatpush1.msra.mxu0 0.0
    %2593 = vmatprep.subr.mxu0 0.0
    %2594 = vmatpush1.msra.mxu0 0.0
    %2595 = vmatprep.subr.mxu0 0.0
    %2596 = vmatpush1.msra.mxu0 0.0
    %2597 = vmatprep.subr.mxu0 0.0
    %2598 = vmatpush1.msra.mxu0 0.0
    %2599 = vmatprep.subr.mxu0 0.0
    %2600 = vmatpush1.msra.mxu0 0.0
    %2601 = vmatprep.subr.mxu0 0.0
    %2602 = vmatpush1.msra.mxu0 0.0
    %2603 = vmatprep.subr.mxu0 0.0
    %2604 = vmatpush1.msra.mxu0 0.0
    %2605 = vmatprep.mubr.f32.mxu0 0.0
    %2606 = vmatmul.mubr.f32.gmra.mrb[0].mxu0 %v2523
    %v2607 = vpop.f32.mrb[0].mxu0
    %v2608 = vadd.f32 0.0, %v2607
    %v2609 = vpop.f32.mrb[0].mxu0
    %2610 = vmatprep.mubr.f32.mxu0 0.0
    %2611 = vmatmul.mubr.f32.gmra.mrb[0].mxu0 %v2524
    %v2612 = vpop.f32.mrb[0].mxu0
    %v2613 = vadd.f32 0.0, %v2612
    %v2614 = vpop.f32.mrb[0].mxu0
    %2615 = vdwg.mxu0
    %2616 = vmatprep.subr.mxu0 0.0
    %2617 = vmatpush1.msra.mxu0 %v2507
    %2618 = vmatprep.subr.mxu0 0.0
    %2619 = vmatpush1.msra.mxu0 %v2508
    %2620 = vmatprep.subr.mxu0 0.0
    %2621 = vmatpush1.msra.mxu0 %v2509
    %2622 = vmatprep.subr.mxu0 0.0
    %2623 = vmatpush1.msra.mxu0 %v2510
    %2624 = vmatprep.subr.mxu0 0.0
    %2625 = vmatpush1.msra.mxu0 %v2511
    %2626 = vmatprep.subr.mxu0 0.0
    %2627 = vmatpush1.msra.mxu0 %v2512
    %2628 = vmatprep.subr.mxu0 0.0
    %2629 = vmatpush1.msra.mxu0 %v2513
    %2630 = vmatprep.subr.mxu0 0.0
    %2631 = vmatpush1.msra.mxu0 %v2514
    %2632 = vmatprep.subr.mxu0 0.0
    %2633 = vmatpush1.msra.mxu0 %v2515
    %2634 = vmatprep.subr.mxu0 0.0
    %2635 = vmatpush1.msra.mxu0 %v2516
    %2636 = vmatprep.subr.mxu0 0.0
    %2637 = vmatpush1.msra.mxu0 %v2517
    %2638 = vmatprep.subr.mxu0 0.0
    %2639 = vmatpush1.msra.mxu0 %v2518
    %2640 = vmatprep.subr.mxu0 0.0
    %2641 = vmatpush1.msra.mxu0 %v2519
    %2642 = vmatprep.subr.mxu0 0.0
    %2643 = vmatpush1.msra.mxu0 %v2520
    %2644 = vmatprep.subr.mxu0 0.0
    %2645 = vmatpush1.msra.mxu0 %v2521
    %2646 = vmatprep.subr.mxu0 0.0
    %2647 = vmatpush1.msra.mxu0 %v2522
    %2648 = vmatprep.subr.mxu0 0.0
    %2649 = vmatpush1.msra.mxu0 0.0
    %2650 = vmatprep.subr.mxu0 0.0
    %2651 = vmatpush1.msra.mxu0 0.0
    %2652 = vmatprep.subr.mxu0 0.0
    %2653 = vmatpush1.msra.mxu0 0.0
    %2654 = vmatprep.subr.mxu0 0.0
    %2655 = vmatpush1.msra.mxu0 0.0
    %2656 = vmatprep.subr.mxu0 0.0
    %2657 = vmatpush1.msra.mxu0 0.0
    %2658 = vmatprep.subr.mxu0 0.0
    %2659 = vmatpush1.msra.mxu0 0.0
    %2660 = vmatprep.subr.mxu0 0.0
    %2661 = vmatpush1.msra.mxu0 0.0
    %2662 = vmatprep.subr.mxu0 0.0
    %2663 = vmatpush1.msra.mxu0 0.0
    %2664 = vmatprep.subr.mxu0 0.0
    %2665 = vmatpush1.msra.mxu0 0.0
    %2666 = vmatprep.subr.mxu0 0.0
    %2667 = vmatpush1.msra.mxu0 0.0
    %2668 = vmatprep.subr.mxu0 0.0
    %2669 = vmatpush1.msra.mxu0 0.0
    %2670 = vmatprep.subr.mxu0 0.0
    %2671 = vmatpush1.msra.mxu0 0.0
    %2672 = vmatprep.subr.mxu0 0.0
    %2673 = vmatpush1.msra.mxu0 0.0
    %2674 = vmatprep.subr.mxu0 0.0
    %2675 = vmatpush1.msra.mxu0 0.0
    %2676 = vmatprep.subr.mxu0 0.0
    %2677 = vmatpush1.msra.mxu0 0.0
    %2678 = vmatprep.subr.mxu0 0.0
    %2679 = vmatpush1.msra.mxu0 0.0
    %2680 = vmatprep.mubr.f32.mxu0 0.0
    %2681 = vmatmul.mubr.f32.gmra.mrb[0].mxu0 %v2505
    %v2682 = vpop.f32.mrb[0].mxu0
    %v2683 = vadd.f32 %v2608, %v2682
    %v2684 = vpop.f32.mrb[0].mxu0
    %2685 = vmatprep.mubr.f32.mxu0 0.0
    %2686 = vmatmul.mubr.f32.gmra.mrb[0].mxu0 %v2506
    %v2687 = vpop.f32.mrb[0].mxu0
    %v2688 = vadd.f32 %v2613, %v2687
    %v2689 = vpop.f32.mrb[0].mxu0
    %2690 = vdwg.mxu0
    %v2691 = vld [vmem:[%s49] sm:$0x1]
    %v2693 = vlaneseq
    %v2694 = vshrl.u32 %v2693, 7
    %v2695 = vsub.s32 0, %v2694
    %v2696 = vrot.slane %v2691, %v2695
    %v2698 = vadd.f32 %v2683, %v2696
    %v2699 = vadd.f32 %v2688, %v2696
    %v2700 = vmul.f32 %v2698, 0.5
    %v2701 = vmul.f32 %v2699, 0.5
    %v2702 = vmul.f32 %v2698, 0.044715
    %v2703 = vmul.f32 %v2699, 0.044715
    %v2704 = vmul.f32 %v2702, %v2698
    %v2705 = vmul.f32 %v2703, %v2699
    %v2706 = vmul.f32 %v2704, %v2698
    %v2707 = vmul.f32 %v2705, %v2699
    %v2708 = vadd.f32 %v2698, %v2706
    %v2709 = vadd.f32 %v2699, %v2707
    %v2710 = vmul.f32 %v2708, 0.7978846
    %v2711 = vmul.f32 %v2709, 0.7978846
    %v2712 = vtanh.pop %v2710
    %v2713 = vtanh.pop %v2711
    %v2714 = vadd.f32 %v2712, 1.0
    %v2715 = vadd.f32 %v2713, 1.0
    %v2716 = vmul.f32 %v2700, %v2714
    %v2717 = vmul.f32 %v2701, %v2715
    %s2718 = sld [smem:[#allocation2 + $0x2]]
    %v2719 = vld [vmem:[%s51] sm:$0x1]
    %v2720 = vld [vmem:[%s53] sm:$0x1]
    %v2721 = vstv %s2718
    %v2722 = vmul.f32 %v2721, %v2716
    %v2723 = vmul.f32 %v2721, %v2717
    %v2724 = vtanh.pop %v2722
    %v2725 = vtanh.pop %v2723
    %v2727 = vlaneseq
    %v2728 = vshrl.u32 %v2727, 7
    %v2729 = vsub.s32 0, %v2728
    %v2730 = vrot.slane %v2719, %v2729
    %v2732 = vmul.f32 %v2724, %v2730
    %v2733 = vmul.f32 %v2725, %v2730
    %v2735 = vlaneseq
    %v2736 = vshrl.u32 %v2735, 7
    %v2737 = vsub.s32 0, %v2736
    %v2738 = vrot.slane %v2720, %v2737
    %v2740 = vadd.f32 %v2732, %v2738
    %v2741 = vadd.f32 %v2733, %v2738
    %v2742 = vtanh.pop %v2740
    %v2743 = vtanh.pop %v2741
    %v2744 = vld [vmem:[%s55] sm:$0xff]
    %v2745 = vld [vmem:[%s55 + $0x8] sm:$0xff]
    %v2746 = vld [vmem:[%s55 + $0x10] sm:$0xff]
    %v2747 = vld [vmem:[%s55 + $0x18] sm:$0xff]
    %v2748 = vmul.f32 %v2742, %v2742
    %v2749 = vmul.f32 %v2743, %v2743
    %2750 = vadd.xlane.f32.xlu0 %v2748
    %v2751 = vpop.xlane.xlu0 %2750
    %2752 = vadd.xlane.f32.xlu0 %v2749
    %v2753 = vpop.xlane.xlu0 %2752
    %v2754 = vmul.f32 %v2744, %v2744
    %v2755 = vmul.f32 %v2745, %v2745
    %v2756 = vmul.f32 %v2746, %v2746
    %v2757 = vmul.f32 %v2747, %v2747
    %2758 = vadd.xlane.f32.xlu0 %v2754
    %v2759 = vpop.xlane.xlu0 %2758
    %2760 = vadd.xlane.f32.xlu0 %v2755
    %v2761 = vpop.xlane.xlu0 %2760
    %2762 = vadd.xlane.f32.xlu0 %v2756
    %v2763 = vpop.xlane.xlu0 %2762
    %2764 = vadd.xlane.f32.xlu0 %v2757
    %v2765 = vpop.xlane.xlu0 %2764
    %2766 = vxpose.xlu0.b32.start [1/16] %v2759, 128
    %2767 = vxpose.xlu0.b32.cont [2/16] %v2761, 128
    %2768 = vxpose.xlu0.b32.cont [3/16] %v2763, 128
    %2769 = vxpose.xlu0.b32.cont [4/16] %v2765, 128
    %2770 = vxpose.xlu0.b32.cont [5/16] 0.0, 128
    %2771 = vxpose.xlu0.b32.cont [6/16] 0.0, 128
    %2772 = vxpose.xlu0.b32.cont [7/16] 0.0, 128
    %2773 = vxpose.xlu0.b32.cont [8/16] 0.0, 128
    %2774 = vxpose.xlu0.b32.cont [9/16] 0.0, 128
    %2775 = vxpose.xlu0.b32.cont [10/16] 0.0, 128
    %2776 = vxpose.xlu0.b32.cont [11/16] 0.0, 128
    %2777 = vxpose.xlu0.b32.cont [12/16] 0.0, 128
    %2778 = vxpose.xlu0.b32.cont [13/16] 0.0, 128
    %2779 = vxpose.xlu0.b32.cont [14/16] 0.0, 128
    %2780 = vxpose.xlu0.b32.cont [15/16] 0.0, 128
    %2781 = vxpose.xlu0.b32.end [16/16] 0.0, 128
    %v2782 = vpop.trf.xlu0
    %v2783 = vpop.trf.xlu0
    %v2784 = vpop.trf.xlu0
    %v2785 = vpop.trf.xlu0
    %v2786 = vpop.trf.xlu0
    %v2787 = vpop.trf.xlu0
    %v2788 = vpop.trf.xlu0
    %v2789 = vpop.trf.xlu0
    %v2790 = vpop.trf.xlu0
    %v2791 = vpop.trf.xlu0
    %v2792 = vpop.trf.xlu0
    %v2793 = vpop.trf.xlu0
    %v2794 = vpop.trf.xlu0
    %v2795 = vpop.trf.xlu0
    %v2796 = vpop.trf.xlu0
    %v2797 = vpop.trf.xlu0
    %v2798 = vlaneseq
    %v2799 = vshrl.u32 %v2798, 7
    %v2800 = vsub.s32 0, %v2799
    %v2801 = vrot.slane %v2782, %v2800
    %v2802 = vadd.f32 %v2751, %v2801
    %v2803 = vadd.f32 %v2753, %v2801
    %2804 = vmatprep.subr.mxu0 0.0
    %2805 = vmatpush1.xpose.msra.mxu0 %v2744
    %2806 = vmatprep.subr.mxu0 0.0
    %2807 = vmatpush1.xpose.msra.mxu0 %v2745
    %2808 = vmatprep.subr.mxu0 0.0
    %2809 = vmatpush1.xpose.msra.mxu0 %v2746
    %2810 = vmatprep.subr.mxu0 0.0
    %2811 = vmatpush1.xpose.msra.mxu0 %v2747
    %2812 = vmatprep.subr.mxu0 0.0
    %2813 = vmatpush1.xpose.msra.mxu0 0.0
    %2814 = vmatprep.subr.mxu0 0.0
    %2815 = vmatpush1.xpose.msra.mxu0 0.0
    %2816 = vmatprep.subr.mxu0 0.0
    %2817 = vmatpush1.xpose.msra.mxu0 0.0
    %2818 = vmatprep.subr.mxu0 0.0
    %2819 = vmatpush1.xpose.msra.mxu0 0.0
    %2820 = vmatprep.subr.mxu0 0.0
    %2821 = vmatpush1.xpose.msra.mxu0 0.0
    %2822 = vmatprep.subr.mxu0 0.0
    %2823 = vmatpush1.xpose.msra.mxu0 0.0
    %2824 = vmatprep.subr.mxu0 0.0
    %2825 = vmatpush1.xpose.msra.mxu0 0.0
    %2826 = vmatprep.subr.mxu0 0.0
    %2827 = vmatpush1.xpose.msra.mxu0 0.0
    %2828 = vmatprep.subr.mxu0 0.0
    %2829 = vmatpush1.xpose.msra.mxu0 0.0
    %2830 = vmatprep.subr.mxu0 0.0
    %2831 = vmatpush1.xpose.msra.mxu0 0.0
    %2832 = vmatprep.subr.mxu0 0.0
    %2833 = vmatpush1.xpose.msra.mxu0 0.0
    %2834 = vmatprep.subr.mxu0 0.0
    %2835 = vmatpush1.xpose.msra.mxu0 0.0
    %2836 = vmatprep.subr.mxu0 0.0
    %2837 = vmatpush1.xpose.msra.mxu0 0.0
    %2838 = vmatprep.subr.mxu0 0.0
    %2839 = vmatpush1.xpose.msra.mxu0 0.0
    %2840 = vmatprep.subr.mxu0 0.0
    %2841 = vmatpush1.xpose.msra.mxu0 0.0
    %2842 = vmatprep.subr.mxu0 0.0
    %2843 = vmatpush1.xpose.msra.mxu0 0.0
    %2844 = vmatprep.subr.mxu0 0.0
    %2845 = vmatpush1.xpose.msra.mxu0 0.0
    %2846 = vmatprep.subr.mxu0 0.0
    %2847 = vmatpush1.xpose.msra.mxu0 0.0
    %2848 = vmatprep.subr.mxu0 0.0
    %2849 = vmatpush1.xpose.msra.mxu0 0.0
    %2850 = vmatprep.subr.mxu0 0.0
    %2851 = vmatpush1.xpose.msra.mxu0 0.0
    %2852 = vmatprep.subr.mxu0 0.0
    %2853 = vmatpush1.xpose.msra.mxu0 0.0
    %2854 = vmatprep.subr.mxu0 0.0
    %2855 = vmatpush1.xpose.msra.mxu0 0.0
    %2856 = vmatprep.subr.mxu0 0.0
    %2857 = vmatpush1.xpose.msra.mxu0 0.0
    %2858 = vmatprep.subr.mxu0 0.0
    %2859 = vmatpush1.xpose.msra.mxu0 0.0
    %2860 = vmatprep.subr.mxu0 0.0
    %2861 = vmatpush1.xpose.msra.mxu0 0.0
    %2862 = vmatprep.subr.mxu0 0.0
    %2863 = vmatpush1.xpose.msra.mxu0 0.0
    %2864 = vmatprep.subr.mxu0 0.0
    %2865 = vmatpush1.xpose.msra.mxu0 0.0
    %2866 = vmatprep.subr.mxu0 0.0
    %2867 = vmatpush1.xpose.msra.mxu0 0.0
    %2868 = vmatprep.mubr.f32.mxu0 0.0
    %2869 = vmatmul.mubr.f32.gmra.mrb[0].mxu0 %v2742
    %v2870 = vpop.f32.mrb[0].mxu0
    %v2871 = vadd.f32 0.0, %v2870
    %v2872 = vpop.f32.mrb[0].mxu0
    %2873 = vmatprep.mubr.f32.mxu0 0.0
    %2874 = vmatmul.mubr.f32.gmra.mrb[0].mxu0 %v2743
    %v2875 = vpop.f32.mrb[0].mxu0
    %v2876 = vadd.f32 0.0, %v2875
    %v2877 = vpop.f32.mrb[0].mxu0
    %2878 = vdwg.mxu0
    %v2879 = vmul.f32 %v2871, 2.0
    %v2880 = vmul.f32 %v2876, 2.0
    %v2881 = vsub.f32 %v2802, %v2879
    %v2882 = vsub.f32 %v2803, %v2880
    %v2883 = vsel %vm1402, %v2881, inf
    %2884 = vmin.xlane.f32.xlu0 %v2883
    %v2885 = vpop.xlane.xlu0 %2884
    %v2886 = vsel %vm1402, %v2882, inf
    %2887 = vmin.xlane.f32.xlu0 %v2886
    %v2888 = vpop.xlane.xlu0 %2887
    %vm2889 = vcmp.le.f32.partialorder %v2881, %v2885
    %vm2890 = vcmp.le.f32.partialorder %v2882, %v2888
    %v2891 = vsel %vm2889, %v566, 32
    %v2892 = vsel %vm2890, %v566, 32
    %v2893 = vsel %vm1402, %v2891, 2147483647
    %v2894 = vand.u32 %v2893, 65535
    %v2895 = vshra.s32 %v2893, 16
    %v2896 = vcvt.s32.f32 %v2894
    %v2897 = vcvt.s32.f32 %v2895
    %2898 = vmin.xlane.f32.xlu0 %v2897
    %v2899 = vpop.xlane.xlu0 %2898
    %vm2900 = vcmp.eq.f32.partialorder %v2897, %v2899
    %v2901 = vsel %vm2900, %v2896, inf
    %2902 = vmin.xlane.f32.xlu0 %v2901
    %v2903 = vpop.xlane.xlu0 %2902
    %v2904 = vcvt.f32.s32 %v2903
    %v2905 = vcvt.f32.s32 %v2899
    %v2906 = vshll.u32 %v2905, 16
    %v2907 = vadd.s32 %v2906, %v2904
    %v2908 = vsel %vm1402, %v2892, 2147483647
    %v2909 = vand.u32 %v2908, 65535
    %v2910 = vshra.s32 %v2908, 16
    %v2911 = vcvt.s32.f32 %v2909
    %v2912 = vcvt.s32.f32 %v2910
    %2913 = vmin.xlane.f32.xlu0 %v2912
    %v2914 = vpop.xlane.xlu0 %2913
    %vm2915 = vcmp.eq.f32.partialorder %v2912, %v2914
    %v2916 = vsel %vm2915, %v2911, inf
    %2917 = vmin.xlane.f32.xlu0 %v2916
    %v2918 = vpop.xlane.xlu0 %2917
    %v2919 = vcvt.f32.s32 %v2918
    %v2920 = vcvt.f32.s32 %v2914
    %v2921 = vshll.u32 %v2920, 16
    %v2922 = vadd.s32 %v2921, %v2919
    %vm2923 = vcmp.eq.s32.totalorder %v566, %v2907
    %vm2924 = vcmp.eq.s32.totalorder %v566, %v2922
    %v2925 = vsel %vm2923, 1, 0
    %v2926 = vsel %vm2924, 1, 0
    %v2927 = vcvt.s32.f32 %v2925
    %v2928 = vcvt.s32.f32 %v2926
    %v2930 = vsel %vm1402, %v2927, 0
    %v2933 = vsel %vm1402, %v2928, 0
    %2935 = vmatprep.subr.mxu0 0.0
    %2936 = vmatpush1.msra.mxu0 %v2744
    %2937 = vmatprep.subr.mxu0 0.0
    %2938 = vmatpush1.msra.mxu0 %v2745
    %2939 = vmatprep.subr.mxu0 0.0
    %2940 = vmatpush1.msra.mxu0 %v2746
    %2941 = vmatprep.subr.mxu0 0.0
    %2942 = vmatpush1.msra.mxu0 %v2747
    %2943 = vmatprep.subr.mxu0 0.0
    %2944 = vmatpush1.msra.mxu0 0.0
    %2945 = vmatprep.subr.mxu0 0.0
    %2946 = vmatpush1.msra.mxu0 0.0
    %2947 = vmatprep.subr.mxu0 0.0
    %2948 = vmatpush1.msra.mxu0 0.0
    %2949 = vmatprep.subr.mxu0 0.0
    %2950 = vmatpush1.msra.mxu0 0.0
    %2951 = vmatprep.subr.mxu0 0.0
    %2952 = vmatpush1.msra.mxu0 0.0
    %2953 = vmatprep.subr.mxu0 0.0
    %2954 = vmatpush1.msra.mxu0 0.0
    %2955 = vmatprep.subr.mxu0 0.0
    %2956 = vmatpush1.msra.mxu0 0.0
    %2957 = vmatprep.subr.mxu0 0.0
    %2958 = vmatpush1.msra.mxu0 0.0
    %2959 = vmatprep.subr.mxu0 0.0
    %2960 = vmatpush1.msra.mxu0 0.0
    %2961 = vmatprep.subr.mxu0 0.0
    %2962 = vmatpush1.msra.mxu0 0.0
    %2963 = vmatprep.subr.mxu0 0.0
    %2964 = vmatpush1.msra.mxu0 0.0
    %2965 = vmatprep.subr.mxu0 0.0
    %2966 = vmatpush1.msra.mxu0 0.0
    %2967 = vmatprep.subr.mxu0 0.0
    %2968 = vmatpush1.msra.mxu0 0.0
    %2969 = vmatprep.subr.mxu0 0.0
    %2970 = vmatpush1.msra.mxu0 0.0
    %2971 = vmatprep.subr.mxu0 0.0
    %2972 = vmatpush1.msra.mxu0 0.0
    %2973 = vmatprep.subr.mxu0 0.0
    %2974 = vmatpush1.msra.mxu0 0.0
    %2975 = vmatprep.subr.mxu0 0.0
    %2976 = vmatpush1.msra.mxu0 0.0
    %2977 = vmatprep.subr.mxu0 0.0
    %2978 = vmatpush1.msra.mxu0 0.0
    %2979 = vmatprep.subr.mxu0 0.0
    %2980 = vmatpush1.msra.mxu0 0.0
    %2981 = vmatprep.subr.mxu0 0.0
    %2982 = vmatpush1.msra.mxu0 0.0
    %2983 = vmatprep.subr.mxu0 0.0
    %2984 = vmatpush1.msra.mxu0 0.0
    %2985 = vmatprep.subr.mxu0 0.0
    %2986 = vmatpush1.msra.mxu0 0.0
    %2987 = vmatprep.subr.mxu0 0.0
    %2988 = vmatpush1.msra.mxu0 0.0
    %2989 = vmatprep.subr.mxu0 0.0
    %2990 = vmatpush1.msra.mxu0 0.0
    %2991 = vmatprep.subr.mxu0 0.0
    %2992 = vmatpush1.msra.mxu0 0.0
    %2993 = vmatprep.subr.mxu0 0.0
    %2994 = vmatpush1.msra.mxu0 0.0
    %2995 = vmatprep.subr.mxu0 0.0
    %2996 = vmatpush1.msra.mxu0 0.0
    %2997 = vmatprep.subr.mxu0 0.0
    %2998 = vmatpush1.msra.mxu0 0.0
    %2999 = vmatprep.mubr.f32.mxu0 0.0
    %3000 = vmatmul.mubr.f32.gmra.mrb[0].mxu0 %v2930
    %v3001 = vpop.f32.mrb[0].mxu0
    %v3002 = vadd.f32 0.0, %v3001
    %v3003 = vpop.f32.mrb[0].mxu0
    %3004 = vmatprep.mubr.f32.mxu0 0.0
    %3005 = vmatmul.mubr.f32.gmra.mrb[0].mxu0 %v2933
    %v3006 = vpop.f32.mrb[0].mxu0
    %v3007 = vadd.f32 0.0, %v3006
    %v3008 = vpop.f32.mrb[0].mxu0
    %3009 = vdwg.mxu0
    %v3010 = vsub.f32 %v3002, %v2742
    %v3011 = vsub.f32 %v3007, %v2743
    %v3012 = vmul.f32 %v3010, %v3010
    %v3013 = vmul.f32 %v3011, %v3011
    %3014 = vadd.xlane.f32.xlu0 %v3012
    %v3015 = vpop.xlane.xlu0 %3014
    %3016 = vadd.xlane.f32.xlu0 %v3013
    %v3017 = vpop.xlane.xlu0 %3016
    %v3018 = vadd.f32 %v3015, %v3017
    %v3019 = vrot.slane %v3018, 4
    %v3020 = vadd.f32 %v3018, %v3019
    %v3021 = vrot.slane %v3020, 2
    %v3022 = vadd.f32 %v3020, %v3021
    %v3023 = vrot.slane %v3022, 1
    %v3024 = vadd.f32 %v3022, %v3023
    %v3025 = vmul.f32 %v3024, 0.00390625
    %v3026 = vmul.f32 %v3025, 1.25
    %vm3027 = vcmask 0
    %3028 = vst.msk [vmem:[#allocation6] sm:$0x1] %vm3027, %v3026
    %3029 = vst [vmem:[#allocation5] sm:$0xff] %v3002
    %3030 = vst [vmem:[#allocation5 + $0x8] sm:$0xff] %v3007
    // Predicated region
    $region118: #{tpu_custom_call.1} parent=1 // pred_check
      _
    $region119: #{tpu_custom_call.1} parent=1 // pred_check_branch
      %3032 = sbr.rel (0) target = $region121
    $region120: #{tpu_custom_call.1} parent=1 // pred_region
      %s3034 = ssub.s32 256, 256
      %3035 = vsyncadd [#allocation3], %s3034
      %s3036 = sshll.u32 [#allocation5], 4
      %s3037 = int_to_ptr.vmem [resolvable:$true] %s3036
      %3042 = dma.vmem_to_hbm [thread:$0]  %s3037, 256, %s57, [#allocation3], 128, 128, 8
    $region121: #{tpu_custom_call.1} parent=1 // pred_fallthru
      _
    // Predicated region
    $region122: #{tpu_custom_call.1} parent=1 // pred_check
      _
    $region123: #{tpu_custom_call.1} parent=1 // pred_check_branch
      %3044 = sbr.rel (0) target = $region125
    $region124: #{tpu_custom_call.1} parent=1 // pred_region
      %s3046 = ssub.s32 16, 16
      %3047 = vsyncadd [#allocation7], %s3046
      %s3049 = sshll.u32 [#allocation6], 4
      %s3050 = int_to_ptr.vmem [resolvable:$true] %s3049
      %3052 = dma.vmem_to_hbm [thread:$0]  %s3050, 16, %s59, [#allocation7]
    $region125: #{tpu_custom_call.1} parent=1 // pred_fallthru
      _
    // Predicated region
    $region126: #{tpu_custom_call.1} parent=1 // pred_check
      _
    $region127: #{tpu_custom_call.1} parent=1 // pred_check_branch
      %3054 = sbr.rel (0) target = $region129
    $region128: #{tpu_custom_call.1} parent=1 // pred_region
      %3055 = dma.done [#allocation3], 256
    $region129: #{tpu_custom_call.1} parent=1 // pred_fallthru
      _
    // Predicated region
    $region130: #{tpu_custom_call.1} parent=1 // pred_check
      _
    $region131: #{tpu_custom_call.1} parent=1 // pred_check_branch
      %3057 = sbr.rel (0) target = $region133
    $region132: #{tpu_custom_call.1} parent=1 // pred_region
      %3058 = dma.done [#allocation7], 16
    $region133: #{tpu_custom_call.1} parent=1 // pred_fallthru
      _
    %3059 = vsyncpa [#allocation3], 1
    %3060 = vsyncpa [#allocation7], 1
    %3061 = vsyncpa [#allocation4], 1

</llo_original>
